<compile_context>
chip_gen: v5e
topology: v5e:2x2
jax: 0.10.0
libtpu: 0.0.40
codegen_flags: <defaults>
</compile_context>

<pallas_src>
import math

import jax
import jax.numpy as jnp
from jax import lax
from jax.experimental import pallas as pl
from jax.experimental.pallas import tpu as pltpu


def _make_siren_kernel(n_sub):
    """Kernel body with the row tile split into `n_sub` static sub-chunks so the
    MXU matmul of chunk i+1 co-issues while the VPU runs sin on chunk i."""

    def kernel(x_ref, w_ref, b_ref, o_ref):
        # x_ref: [TILE_N, dim_in]   streamed per grid step
        # w_ref: [dim_in, dim_out]  MXU-native (K, N), VMEM-resident, w0 pre-folded
        # b_ref: [1, dim_out]       VMEM-resident, w0 pre-folded
        tile_n = x_ref.shape[0]
        chunk = tile_n // n_sub
        b = b_ref[...]
        for i in range(n_sub):
            r = i * chunk  # static offset -> zero-cost ref view
            acc = lax.dot_general(
                x_ref[pl.ds(r, chunk), :],
                w_ref[...],
                dimension_numbers=(((1,), (0,)), ((), ())),
                preferred_element_type=jnp.float32,
            )
            o_ref[pl.ds(r, chunk), :] = jnp.sin(acc + b).astype(o_ref.dtype)

    return kernel


def _pick_tile(n, requested):
    tile = min(requested, n)
    tile = max(8, (tile // 8) * 8)
    # v7x megacore: prefer >= 4 grid steps (>= 2 per TensorCore) so both cores
    # get work AND input/output DMA double-buffering overlaps compute — but
    # never shrink below 256 rows (per-step HBM time must dominate the
    # ~0.35 us/step grid overhead).
    quarter = ((n // 4) // 8) * 8
    if quarter >= 256:
        tile = min(tile, quarter)
    return tile


def _pick_subchunks(tile_n):
    for n_sub in (4, 2):
        chunk = tile_n // n_sub
        if tile_n % n_sub == 0 and chunk % 8 == 0 and chunk >= 128:
            return n_sub
    return 1


def siren_forward(x, weight_kn_folded, bias_folded, *, tile_n=2048):
    """x: [N, dim_in] f32; weight_kn_folded: [dim_in, dim_out] (= (w0*W)^T);
    bias_folded: [dim_out] (= w0*b). Returns sin(x @ (w0*W)^T + w0*b)."""
    n, dim_in = x.shape
    dim_out = weight_kn_folded.shape[1]

    tile_n = _pick_tile(n, tile_n)
    n_sub = _pick_subchunks(tile_n)
    grid = (pl.cdiv(n, tile_n),)

    b2 = bias_folded.reshape(1, dim_out)
    itemsize = jnp.dtype(x.dtype).itemsize

    cost = pl.CostEstimate(
        flops=2 * n * dim_in * dim_out,
        transcendentals=n * dim_out,
        bytes_accessed=itemsize
        * (n * dim_in + dim_in * dim_out + dim_out + n * dim_out),
    )

    # Double-buffered x/out tiles + (also 2-buffered) resident weight/bias.
    buf_bytes = itemsize * (
        2 * tile_n * (dim_in + dim_out) + 2 * (dim_in * dim_out + dim_out)
    )
    vmem_limit = None
    if buf_bytes > 12 * 1024 * 1024:  # only needed near v5e's 16 MiB scoped default
        vmem_limit = min(int(buf_bytes * 3 // 2), 64 * 1024 * 1024)

    return pl.pallas_call(
        _make_siren_kernel(n_sub),
        out_shape=jax.ShapeDtypeStruct((n, dim_out), x.dtype),
        grid_spec=pltpu.PrefetchScalarGridSpec(
            num_scalar_prefetch=0,
            grid=grid,
            in_specs=[
                pl.BlockSpec((tile_n, dim_in), lambda i: (i, 0)),      # streamed
                pl.BlockSpec((dim_in, dim_out), lambda i: (0, 0)),     # resident
                pl.BlockSpec((1, dim_out), lambda i: (0, 0)),          # resident
            ],
            out_specs=pl.BlockSpec((tile_n, dim_out), lambda i: (i, 0)),
        ),
        compiler_params=pltpu.CompilerParams(
            # Rows are independent -> megacore-shardable on v7x.
            dimension_semantics=("parallel",),
            vmem_limit_bytes=vmem_limit,
        ),
        cost_estimate=cost,
    )(x, weight_kn_folded, b2)


def init_siren_params(key, dim_in, dim_out, w0=1.0, c=6.0, is_first=False):
    """Deterministic replication of Siren.init_ (uniform(-w_std, w_std)),
    PyTorch layout weight [dim_out, dim_in]."""
    w_std = (1.0 / dim_in) if is_first else (math.sqrt(c / dim_in) / w0)
    k_w, k_b = jax.random.split(key)
    weight = jax.random.uniform(
        k_w, (dim_out, dim_in), dtype=jnp.float32, minval=-w_std, maxval=w_std
    )
    bias = jax.random.uniform(
        k_b, (dim_out,), dtype=jnp.float32, minval=-w_std, maxval=w_std
    )
    return weight, bias


def fold_w0_into_params(weight, bias, w0):
    """One-time fold of the Sine frequency AND transpose to MXU-native (K, N):
    returns ((w0*W)^T of shape [dim_in, dim_out], w0*b)."""
    return (weight * w0).T, bias * w0


if __name__ == "__main__":
    key = jax.random.PRNGKey(0)
    k_x, k_p = jax.random.split(key)

    # Small but lane-dense / MXU-friendly shapes: dim_in = dim_out = 128.
    batch, dim_in, dim_out = 1024, 128, 128
    w0 = 30.0

    x = jax.random.normal(k_x, (batch, dim_in), dtype=jnp.float32)
    weight, bias = init_siren_params(k_p, dim_in, dim_out, w0=w0, c=6.0, is_first=False)
    w_kn, b_f = fold_w0_into_params(weight, bias, w0)   # done once at init

    out = siren_forward(x, w_kn, b_f)                   # -> 4 grid steps of 256 rows
    out = jax.block_until_ready(out)

    # Reference: sin(w0 * (x @ W^T + b)); dropout p=0 -> identity.
    ref = jnp.sin(w0 * (x @ weight.T + bias))
    assert out.shape == (batch, dim_out)
    assert jnp.allclose(out, ref, atol=1e-4, rtol=1e-4), float(
        jnp.max(jnp.abs(out - ref))
    )

    print("KERNEL_OK")
</pallas_src>

<mosaic_0001>
module attributes {stable_mosaic.version = 11 : i64} {
  func.func @kernel(%arg0: i32, %arg1: memref<256x128xf32, #tpu.memory_space<vmem>>, %arg2: memref<128x128xf32, #tpu.memory_space<vmem>>, %arg3: memref<1x128xf32, #tpu.memory_space<vmem>>, %arg4: memref<256x128xf32, #tpu.memory_space<vmem>>) attributes {dimension_semantics = [#tpu.dimension_semantics<parallel>], iteration_bounds = array<i64: 4>, scalar_prefetch = 0 : i64, scratch_operands = 0 : i64, tpu.core_type = #tpu.core_type<tc>, window_params = [{transform_indices = @transform_0, window_bounds = array<i64: 256, 128>}, {pipeline_mode = #tpu.pipeline_mode<synchronous>, transform_indices = @transform_1, window_bounds = array<i64: 128, 128>}, {pipeline_mode = #tpu.pipeline_mode<synchronous>, transform_indices = @transform_2, window_bounds = array<i64: 1, 128>}, {transform_indices = @transform_3, window_bounds = array<i64: 256, 128>}]} {
    %c0 = arith.constant 0 : index
    %c0_0 = arith.constant 0 : index
    %0 = vector.load %arg3[%c0, %c0_0] : memref<1x128xf32, #tpu.memory_space<vmem>>, vector<1x128xf32>
    %c0_1 = arith.constant 0 : index
    %c0_2 = arith.constant 0 : index
    %1 = vector.load %arg1[%c0_1, %c0_2] : memref<256x128xf32, #tpu.memory_space<vmem>>, vector<128x128xf32>
    %c0_3 = arith.constant 0 : index
    %c0_4 = arith.constant 0 : index
    %2 = vector.load %arg2[%c0_3, %c0_4] : memref<128x128xf32, #tpu.memory_space<vmem>>, vector<128x128xf32>
    %cst = arith.constant dense<0.000000e+00> : vector<128x128xf32>
    %3 = tpu.matmul %1, %2, %cst {dimension_numbers = #tpu.dot_dimension_numbers<[1], [0], [0], [1], [0, 0, 1, 1], [], []>} : vector<128x128xf32>, vector<128x128xf32>, vector<128x128xf32> -> vector<128x128xf32>
    %4 = vector.broadcast %0 : vector<1x128xf32> to vector<128x128xf32>
    %5 = arith.addf %3, %4 : vector<128x128xf32>
    %6 = math.sin %5 : vector<128x128xf32>
    %c0_5 = arith.constant 0 : index
    %c0_6 = arith.constant 0 : index
    %7 = vector.load %arg4[%c0_5, %c0_6] : memref<256x128xf32, #tpu.memory_space<vmem>>, vector<128x128xf32>
    tpu.vector_store %arg4[%c0_5, %c0_6], %6 {strides = array<i32>} : memref<256x128xf32, #tpu.memory_space<vmem>>, vector<128x128xf32>,
    %c128 = arith.constant 128 : index
    %c0_7 = arith.constant 0 : index
    %8 = vector.load %arg1[%c128, %c0_7] : memref<256x128xf32, #tpu.memory_space<vmem>>, vector<128x128xf32>
    %c0_8 = arith.constant 0 : index
    %c0_9 = arith.constant 0 : index
    %9 = vector.load %arg2[%c0_8, %c0_9] : memref<128x128xf32, #tpu.memory_space<vmem>>, vector<128x128xf32>
    %cst_10 = arith.constant dense<0.000000e+00> : vector<128x128xf32>
    %10 = tpu.matmul %8, %9, %cst_10 {dimension_numbers = #tpu.dot_dimension_numbers<[1], [0], [0], [1], [0, 0, 1, 1], [], []>} : vector<128x128xf32>, vector<128x128xf32>, vector<128x128xf32> -> vector<128x128xf32>
    %11 = vector.broadcast %0 : vector<1x128xf32> to vector<128x128xf32>
    %12 = arith.addf %10, %11 : vector<128x128xf32>
    %13 = math.sin %12 : vector<128x128xf32>
    %c128_11 = arith.constant 128 : index
    %c0_12 = arith.constant 0 : index
    %14 = vector.load %arg4[%c128_11, %c0_12] : memref<256x128xf32, #tpu.memory_space<vmem>>, vector<128x128xf32>
    tpu.vector_store %arg4[%c128_11, %c0_12], %13 {strides = array<i32>} : memref<256x128xf32, #tpu.memory_space<vmem>>, vector<128x128xf32>,
    return
  }
  func.func @transform_0(%arg0: i32) -> (i32, i32) {
    %c0_i32 = arith.constant 0 : i32
    %c0_i32_0 = arith.constant 0 : i32
    return %arg0, %c0_i32 : i32, i32
  }
  func.func @transform_1(%arg0: i32) -> (i32, i32) {
    %c0_i32 = arith.constant 0 : i32
    %c0_i32_0 = arith.constant 0 : i32
    %c0_i32_1 = arith.constant 0 : i32
    return %c0_i32, %c0_i32_0 : i32, i32
  }
  func.func @transform_2(%arg0: i32) -> (i32, i32) {
    %c0_i32 = arith.constant 0 : i32
    %c0_i32_0 = arith.constant 0 : i32
    %c0_i32_1 = arith.constant 0 : i32
    return %c0_i32, %c0_i32_0 : i32, i32
  }
  func.func @transform_3(%arg0: i32) -> (i32, i32) {
    %c0_i32 = arith.constant 0 : i32
    %c0_i32_0 = arith.constant 0 : i32
    return %arg0, %c0_i32 : i32, i32
  }
}

</mosaic_0001>

<llo_original>
// kernel: tpu_custom_call.1
$region0: #{tpu_custom_call.1}
  #allocation0 [shape = 'u32[]', space=smem, size = 0x4, offset = 0x4, fixed_abs, tag = 'smem constant byte address 0x4 - core index']
  #allocation1 [shape = 'u32[72,128]{1,0:T(1,128)}', space=vmem, size = 0x9000, scoped, tag = 'internal scratch']
  %s0 = inlined_call_operand.hbm [shape: f32[1024,128], index: 0, kind: input, shape index: {}]
  %s1 = inlined_call_operand.hbm [shape: f32[128,128], index: 1, kind: input, shape index: {}]
  %s2 = inlined_call_operand.vmem [shape: f32[1,128], index: 2, kind: input, shape index: {}]
  %s3 = inlined_call_operand.hbm [shape: f32[1024,128], index: 3, kind: output, shape index: {}]
  %s4 = sld [smem:[#allocation0]]
  $region53: #{tpu_custom_call.1} parent=0
    _
  %s6 = ssub.s32 1, %s4
  %s7 = scalar_select 0, %s6, %s4
  $region1: #{tpu_custom_call.1} parent=0
    #allocation2 [shape = 'u8[262144]{0}', space=vmem, size = 0x40000, scoped, tag = 'input window, operand 0']
    #allocation3 [shape = 's32[2]{0}', space=sflag, size = 0x8, scoped, tag = 'scoped memory for tpu_custom_call.1']
    #allocation4 [shape = 's32[2]{0}', space=sflag, size = 0x8, scoped, tag = 'scoped memory for tpu_custom_call.1']
    #allocation5 [shape = 'u8[65536]{0}', space=vmem, size = 0x10000, scoped, tag = 'input window, operand 1, single buffered']
    #allocation6 [shape = 's32[1]{0}', space=sflag, size = 0x4, scoped, tag = 'scoped memory for tpu_custom_call.1']
    #allocation7 [shape = 'u8[262144]{0}', space=vmem, size = 0x40000, scoped, tag = 'output window, operand 0']
    %8 = vsyncpa [#allocation3], 0
    %s9 = scalar_lea.sflag [#allocation3], 1
    %10 = vsyncpa %s9, 0
    %11 = vsyncpa [#allocation6], 0
    %12 = vsyncpa [#allocation4], 0
    %s13 = scalar_lea.sflag [#allocation4], 1
    %14 = vsyncpa %s13, 0
    loop: start=0, step=1, limit=6
    $region2: #{tpu_custom_call.1} parent=1 // loop_pre_header
      _
    $region3: #{tpu_custom_call.1} parent=1 // loop_header
      %s16 = sphi 0, %s20
      %p17 = scmp.ge.s32.totalorder %s16, 6
      %s26 = sphi 0, %s28
      %s29 = sphi 0, %s26
      %s30 = sphi 0, %s29
      %s46 = sphi 0, %s30
      %s50 = sphi 0, %s50
      %s52 = sphi 0, %s50
      %s53 = sphi 0, %s52
      %s67 = sphi 0, %s53
      %s71 = sphi 0, %s71
      %s73 = sphi 0, %s71
      %s74 = sphi 0, %s73
      %s88 = sphi 0, %s74
      %s94 = sphi 0, %s96
      %s97 = sphi 0, %s94
      %s98 = sphi 0, %s97
      %s114 = sphi 0, %s98
    $region4: #{tpu_custom_call.1} parent=1 // loop_header_branch
      %19 = sbr.rel (%p17) target = $region8
    $region5: #{tpu_custom_call.1} parent=1 // loop_body
      %s21 = ssub.s32 %s16, 1
      %s22 = ssub.s32 %s16, 2
      %s23 = sadd.s32 %s16, 1
      %s24 = ssub.s32 %s16, %s23
      %p25 = scmp.eq.s32.totalorder %s24, 0
      %s27 = sadd.s32 %s26, 1
      %s28 = scalar_select %p25, %s26, %s27
      %p31 = pneg %p25
      %p32 = scmp.eq.s32.totalorder %s16, 3
      %p33 = por %p31, %p32
      %p34 = scmp.ne.s32.totalorder %s26, %s29
      %p35 = scmp.eq.s32.totalorder %s16, 0
      %p36 = por %p34, %p35
      %p37 = scmp.ne.s32.totalorder %s26, %s29
      %p38 = scmp.eq.s32.totalorder %s21, 3
      %p39 = por %p37, %p38
      %p40 = scmp.ne.s32.totalorder %s29, %s30
      %p41 = scmp.eq.s32.totalorder %s21, 0
      %p42 = por %p40, %p41
      %p43 = scmp.ne.s32.totalorder %s29, %s30
      %p44 = scmp.eq.s32.totalorder %s22, 3
      %p45 = por %p43, %p44
      %p47 = scmp.ne.s32.totalorder %s30, %s46
      %p48 = scmp.eq.s32.totalorder %s22, 0
      %p49 = por %p47, %p48
      %s51 = sadd.s32 %s50, 1
      %p54 = scmp.eq.s32.totalorder %s16, 3
      %p55 = scmp.ne.s32.totalorder %s50, %s52
      %p56 = scmp.eq.s32.totalorder %s16, 0
      %p57 = por %p55, %p56
      %p58 = scmp.ne.s32.totalorder %s50, %s52
      %p59 = scmp.eq.s32.totalorder %s21, 3
      %p60 = por %p58, %p59
      %p61 = scmp.ne.s32.totalorder %s52, %s53
      %p62 = scmp.eq.s32.totalorder %s21, 0
      %p63 = por %p61, %p62
      %p64 = scmp.ne.s32.totalorder %s52, %s53
      %p65 = scmp.eq.s32.totalorder %s22, 3
      %p66 = por %p64, %p65
      %p68 = scmp.ne.s32.totalorder %s53, %s67
      %p69 = scmp.eq.s32.totalorder %s22, 0
      %p70 = por %p68, %p69
      %s72 = sadd.s32 %s71, 1
      %p75 = scmp.eq.s32.totalorder %s16, 3
      %p76 = scmp.ne.s32.totalorder %s71, %s73
      %p77 = scmp.eq.s32.totalorder %s16, 0
      %p78 = por %p76, %p77
      %p79 = scmp.ne.s32.totalorder %s71, %s73
      %p80 = scmp.eq.s32.totalorder %s21, 3
      %p81 = por %p79, %p80
      %p82 = scmp.ne.s32.totalorder %s73, %s74
      %p83 = scmp.eq.s32.totalorder %s21, 0
      %p84 = por %p82, %p83
      %p85 = scmp.ne.s32.totalorder %s73, %s74
      %p86 = scmp.eq.s32.totalorder %s22, 3
      %p87 = por %p85, %p86
      %p89 = scmp.ne.s32.totalorder %s74, %s88
      %p90 = scmp.eq.s32.totalorder %s22, 0
      %p91 = por %p89, %p90
      %s92 = ssub.s32 %s16, %s23
      %p93 = scmp.eq.s32.totalorder %s92, 0
      %s95 = sadd.s32 %s94, 1
      %s96 = scalar_select %p93, %s94, %s95
      %p99 = pneg %p93
      %p100 = scmp.eq.s32.totalorder %s16, 3
      %p101 = por %p99, %p100
      %p102 = scmp.ne.s32.totalorder %s94, %s97
      %p103 = scmp.eq.s32.totalorder %s16, 0
      %p104 = por %p102, %p103
      %p105 = scmp.ne.s32.totalorder %s94, %s97
      %p106 = scmp.eq.s32.totalorder %s21, 3
      %p107 = por %p105, %p106
      %p108 = scmp.ne.s32.totalorder %s97, %s98
      %p109 = scmp.eq.s32.totalorder %s21, 0
      %p110 = por %p108, %p109
      %p111 = scmp.ne.s32.totalorder %s97, %s98
      %p112 = scmp.eq.s32.totalorder %s22, 3
      %p113 = por %p111, %p112
      %p115 = scmp.ne.s32.totalorder %s98, %s114
      %p116 = scmp.eq.s32.totalorder %s22, 0
      %p117 = por %p115, %p116
      %p118 = scmp.le.s32.totalorder 1, %s16
      %p119 = scmp.lt.s32.totalorder %s16, 5
      %p120 = pnand %p118, %p119
      %p121 = pneg %p120
      // Predicated region
      $region9: #{tpu_custom_call.1} parent=5 // pred_check
        _
      $region10: #{tpu_custom_call.1} parent=5 // pred_check_branch
        %123 = sbr.rel (%p120) target = $region12
      $region11: #{tpu_custom_call.1} parent=5 // pred_region
        %s124 = ssub.s32 %s16, 1
        // Predicated region
        $region13: #{tpu_custom_call.1} parent=11 // pred_check
          %p125 = pneg %p63
        $region14: #{tpu_custom_call.1} parent=11 // pred_check_branch
          %127 = sbr.rel (%p125) target = $region16
        $region15: #{tpu_custom_call.1} parent=11 // pred_region
          %129 = vsyncadd [#allocation6], 0
          %s130 = sshll.u32 %s1, 4
          %s131 = int_to_ptr.hbm [resolvable:$true] %s130
          %s132 = sshll.u32 [#allocation5], 4
          %s133 = int_to_ptr.vmem [resolvable:$true] %s132
          %138 = dma.hbm_to_vmem [thread:$0]  %s131, 2048, %s133, [#allocation6], 128, 128, 8
        $region16: #{tpu_custom_call.1} parent=11 // pred_fallthru
          _
        // Predicated region
        $region17: #{tpu_custom_call.1} parent=11 // pred_check
          %p139 = pneg %p84
        $region18: #{tpu_custom_call.1} parent=11 // pred_check_branch
          %141 = sbr.rel (%p139) target = $region20
        $region19: #{tpu_custom_call.1} parent=11 // pred_region
          _
        $region20: #{tpu_custom_call.1} parent=11 // pred_fallthru
          _
      $region12: #{tpu_custom_call.1} parent=5 // pred_fallthru
        _
      %p142 = scmp.lt.s32.totalorder %s16, 4
      // Predicated region
      $region21: #{tpu_custom_call.1} parent=5 // pred_check
        %p143 = pneg %p142
      $region22: #{tpu_custom_call.1} parent=5 // pred_check_branch
        %145 = sbr.rel (%p143) target = $region24
      $region23: #{tpu_custom_call.1} parent=5 // pred_region
        // Predicated region
        $region25: #{tpu_custom_call.1} parent=23 // pred_check
          %p146 = pneg %p36
        $region26: #{tpu_custom_call.1} parent=23 // pred_check_branch
          %148 = sbr.rel (%p146) target = $region28
        $region27: #{tpu_custom_call.1} parent=23 // pred_region
          %s149 = sand.u32 %s26, 1
          %s150 = scalar_lea.sflag [#allocation3], %s149
          %s151 = sand.u32 %s26, 1
          %s152 = smul.addr %s151, 256
          %s153 = scalar_lea.vmem [#allocation2], %s152
          %s154 = smul.u32 32, %s16
          %156 = vsyncadd %s150, 0
          %s157 = smul.addr %s154, 8
          %s158 = scalar_lea.hbm %s0, %s157
          %s159 = sshll.u32 %s158, 4
          %s160 = int_to_ptr.hbm [resolvable:$true] %s159
          %s161 = sshll.u32 %s153, 4
          %s162 = int_to_ptr.vmem [resolvable:$true] %s161
          %167 = dma.hbm_to_vmem [thread:$0]  %s160, 4096, %s162, %s150, 128, 128, 8
        $region28: #{tpu_custom_call.1} parent=23 // pred_fallthru
          _
      $region24: #{tpu_custom_call.1} parent=5 // pred_fallthru
        _
      %p168 = scmp.le.s32.totalorder 1, %s16
      %p169 = scmp.lt.s32.totalorder %s16, 5
      %p170 = pnand %p168, %p169
      %p171 = pneg %p170
      // Predicated region
      $region29: #{tpu_custom_call.1} parent=5 // pred_check
        _
      $region30: #{tpu_custom_call.1} parent=5 // pred_check_branch
        %173 = sbr.rel (%p170) target = $region32
      $region31: #{tpu_custom_call.1} parent=5 // pred_region
        %s174 = ssub.s32 %s16, 1
        %s175 = sand.u32 %s29, 1
        %s176 = scalar_lea.sflag [#allocation3], %s175
        %s177 = sand.u32 %s29, 1
        %s178 = smul.addr %s177, 256
        %s179 = scalar_lea.vmem [#allocation2], %s178
        // Predicated region
        $region33: #{tpu_custom_call.1} parent=31 // pred_check
          %p180 = pneg %p42
        $region34: #{tpu_custom_call.1} parent=31 // pred_check_branch
          %182 = sbr.rel (%p180) target = $region36
        $region35: #{tpu_custom_call.1} parent=31 // pred_region
          %184 = dma.done %s176, 4096
        $region36: #{tpu_custom_call.1} parent=31 // pred_fallthru
          _
        // Predicated region
        $region37: #{tpu_custom_call.1} parent=31 // pred_check
          %p185 = pneg %p63
        $region38: #{tpu_custom_call.1} parent=31 // pred_check_branch
          %187 = sbr.rel (%p185) target = $region40
        $region39: #{tpu_custom_call.1} parent=31 // pred_region
          %189 = dma.done [#allocation6], 2048
        $region40: #{tpu_custom_call.1} parent=31 // pred_fallthru
          _
        %s190 = sand.u32 %s29, 1
        %s191 = scalar_lea.sflag [#allocation3], %s190
        %s192 = sand.u32 %s29, 1
        %s193 = smul.addr %s192, 256
        %s194 = scalar_lea.vmem [#allocation2], %s193
        %p195 = pneg %p42
        %p196 = pneg %p39
        %p197 = pneg %p63
        %p198 = pneg %p60
        %p199 = pneg %p84
        %p200 = pneg %p81
        %p201 = pneg %p110
        %p202 = pneg %p107
        %s203 = sand.u32 %s97, 1
        %s204 = scalar_lea.sflag [#allocation4], %s203
        %s205 = sand.u32 %s97, 1
        %s206 = smul.addr %s205, 256
        %s207 = scalar_lea.vmem [#allocation7], %s206
        %s208 = smul.u32 32, %s21
        %s209 = smul.u32 32, %s21
        %v210 = vld [vmem:[%s2] sm:$0x1]
        %v211 = vld [vmem:[%s179] sm:$0xff]
        %v212 = vld [vmem:[%s179 + $0x8] sm:$0xff]
        %v213 = vld [vmem:[%s179 + $0x10] sm:$0xff]
        %v214 = vld [vmem:[%s179 + $0x18] sm:$0xff]
        %v215 = vld [vmem:[%s179 + $0x20] sm:$0xff]
        %v216 = vld [vmem:[%s179 + $0x28] sm:$0xff]
        %v217 = vld [vmem:[%s179 + $0x30] sm:$0xff]
        %v218 = vld [vmem:[%s179 + $0x38] sm:$0xff]
        %v219 = vld [vmem:[%s179 + $0x40] sm:$0xff]
        %v220 = vld [vmem:[%s179 + $0x48] sm:$0xff]
        %v221 = vld [vmem:[%s179 + $0x50] sm:$0xff]
        %v222 = vld [vmem:[%s179 + $0x58] sm:$0xff]
        %v223 = vld [vmem:[%s179 + $0x60] sm:$0xff]
        %v224 = vld [vmem:[%s179 + $0x68] sm:$0xff]
        %v225 = vld [vmem:[%s179 + $0x70] sm:$0xff]
        %v226 = vld [vmem:[%s179 + $0x78] sm:$0xff]
        %v227 = vld [vmem:[#allocation5] sm:$0xff]
        %v228 = vld [vmem:[#allocation5 + $0x8] sm:$0xff]
        %v229 = vld [vmem:[#allocation5 + $0x10] sm:$0xff]
        %v230 = vld [vmem:[#allocation5 + $0x18] sm:$0xff]
        %v231 = vld [vmem:[#allocation5 + $0x20] sm:$0xff]
        %v232 = vld [vmem:[#allocation5 + $0x28] sm:$0xff]
        %v233 = vld [vmem:[#allocation5 + $0x30] sm:$0xff]
        %v234 = vld [vmem:[#allocation5 + $0x38] sm:$0xff]
        %v235 = vld [vmem:[#allocation5 + $0x40] sm:$0xff]
        %v236 = vld [vmem:[#allocation5 + $0x48] sm:$0xff]
        %v237 = vld [vmem:[#allocation5 + $0x50] sm:$0xff]
        %v238 = vld [vmem:[#allocation5 + $0x58] sm:$0xff]
        %v239 = vld [vmem:[#allocation5 + $0x60] sm:$0xff]
        %v240 = vld [vmem:[#allocation5 + $0x68] sm:$0xff]
        %v241 = vld [vmem:[#allocation5 + $0x70] sm:$0xff]
        %v242 = vld [vmem:[#allocation5 + $0x78] sm:$0xff]
        %v244 = vperm.slane %v210, 0
        %246 = vmatpush.msra.mxu0 %v242
        %247 = vmatpush.msra.mxu0 %v241
        %248 = vmatpush.msra.mxu0 %v240
        %249 = vmatpush.msra.mxu0 %v239
        %250 = vmatpush.msra.mxu0 %v238
        %251 = vmatpush.msra.mxu0 %v237
        %252 = vmatpush.msra.mxu0 %v236
        %253 = vmatpush.msra.mxu0 %v235
        %254 = vmatpush.msra.mxu0 %v234
        %255 = vmatpush.msra.mxu0 %v233
        %256 = vmatpush.msra.mxu0 %v232
        %257 = vmatpush.msra.mxu0 %v231
        %258 = vmatpush.msra.mxu0 %v230
        %259 = vmatpush.msra.mxu0 %v229
        %260 = vmatpush.msra.mxu0 %v228
        %261 = vmatpush.msra.mxu0 %v227
        %262 = vmatmul.f32.gmra.mxu0 %v211
        %v263 = vpop.f32.mrf.mxu0
        %v264 = vadd.f32 %v244, %v263
        %265 = vmatmul.f32.gmra.mxu0 %v212
        %v266 = vpop.f32.mrf.mxu0
        %v267 = vadd.f32 %v244, %v266
        %268 = vmatmul.f32.gmra.mxu0 %v213
        %v269 = vpop.f32.mrf.mxu0
        %v270 = vadd.f32 %v244, %v269
        %271 = vmatmul.f32.gmra.mxu0 %v214
        %v272 = vpop.f32.mrf.mxu0
        %v273 = vadd.f32 %v244, %v272
        %274 = vmatmul.f32.gmra.mxu0 %v215
        %v275 = vpop.f32.mrf.mxu0
        %v276 = vadd.f32 %v244, %v275
        %277 = vmatmul.f32.gmra.mxu0 %v216
        %v278 = vpop.f32.mrf.mxu0
        %v279 = vadd.f32 %v244, %v278
        %280 = vmatmul.f32.gmra.mxu0 %v217
        %v281 = vpop.f32.mrf.mxu0
        %v282 = vadd.f32 %v244, %v281
        %283 = vmatmul.f32.gmra.mxu0 %v218
        %v284 = vpop.f32.mrf.mxu0
        %v285 = vadd.f32 %v244, %v284
        %286 = vmatmul.f32.gmra.mxu0 %v219
        %v287 = vpop.f32.mrf.mxu0
        %v288 = vadd.f32 %v244, %v287
        %289 = vmatmul.f32.gmra.mxu0 %v220
        %v290 = vpop.f32.mrf.mxu0
        %v291 = vadd.f32 %v244, %v290
        %292 = vmatmul.f32.gmra.mxu0 %v221
        %v293 = vpop.f32.mrf.mxu0
        %v294 = vadd.f32 %v244, %v293
        %295 = vmatmul.f32.gmra.mxu0 %v222
        %v296 = vpop.f32.mrf.mxu0
        %v297 = vadd.f32 %v244, %v296
        %298 = vmatmul.f32.gmra.mxu0 %v223
        %v299 = vpop.f32.mrf.mxu0
        %v300 = vadd.f32 %v244, %v299
        %301 = vmatmul.f32.gmra.mxu0 %v224
        %v302 = vpop.f32.mrf.mxu0
        %v303 = vadd.f32 %v244, %v302
        %304 = vmatmul.f32.gmra.mxu0 %v225
        %v305 = vpop.f32.mrf.mxu0
        %v306 = vadd.f32 %v244, %v305
        %307 = vmatmul.f32.gmra.mxu0 %v226
        %v308 = vpop.f32.mrf.mxu0
        %v309 = vadd.f32 %v244, %v308
        %310 = vdwg.mxu0
        %v311 = vand.u32 2147483647, %v264
        %vm312 = vcmp.le.f32.partialorder %v311, 0.7853982
        %vm313 = vcmp.lt.s32.totalorder %v264, 0
        %v314 = vand.u32 %v264, 2139095040
        %v315 = vshrl.u32 %v314, 23
        %v316 = vsub.s32 %v315, 127
        %v317 = vand.u32 2147483647, %v264
        %v318 = vand.u32 %v317, 8388607
        %v319 = vor.u32 %v318, 8388608
        %v320 = vsub.s32 0, %v319
        %v321 = vadd.s32 %v316, 1
        %vm322 = vcmp.gt.s32.totalorder %v321, 0
        %v323 = vsel %vm322, %v321, 0
        %v324 = vshrl.u32 %v323, 5
        %v325 = vand.u32 %v323, 31
        %v326 = vsub.s32 32, %v325
        %v327 = vshrl.u32 683565275, %v326
        %v328 = vshll.u32 683565275, %v325
        %v329 = vshrl.u32 2475754826, %v326
        %v330 = vor.u32 %v328, %v329
        %v331 = vshll.u32 2475754826, %v325
        %v332 = vshrl.u32 2131351028, %v326
        %v333 = vor.u32 %v331, %v332
        %v334 = vshll.u32 2131351028, %v325
        %v335 = vshrl.u32 2102212464, %v326
        %v336 = vor.u32 %v334, %v335
        %v337 = vshll.u32 2102212464, %v325
        %v338 = vshrl.u32 920167782, %v326
        %v339 = vor.u32 %v337, %v338
        %v340 = vshll.u32 920167782, %v325
        %v341 = vshrl.u32 1326507024, %v326
        %v342 = vor.u32 %v340, %v341
        %vm343 = vcmp.lt.s32.totalorder %v324, 1
        %vm344 = vcmp.lt.s32.totalorder %v324, 2
        %vm345 = vcmp.lt.s32.totalorder %v324, 3
        %vm346 = vcmp.lt.s32.totalorder %v324, 4
        %v347 = vsel %vm343, %v327, %v330
        %v348 = vsel %vm346, %v336, 2102212464
        %v349 = vsel %vm345, %v333, %v348
        %v350 = vsel %vm344, %v347, %v349
        %v351 = vsel %vm343, %v330, %v333
        %v352 = vsel %vm346, %v339, 920167782
        %v353 = vsel %vm345, %v336, %v352
        %v354 = vsel %vm344, %v351, %v353
        %v355 = vsel %vm343, %v333, %v336
        %v356 = vsel %vm346, %v342, 1326507024
        %v357 = vsel %vm345, %v339, %v356
        %v358 = vsel %vm344, %v355, %v357
        %v359 = vshll.u32 %v319, 8
        %v360 = vand.u32 %v359, 65535
        %v361 = vshrl.u32 %v359, 16
        %v362 = vand.u32 %v358, 65535
        %v363 = vshrl.u32 %v358, 16
        %v364 = vmul.u32 %v360, %v362
        %v365 = vmul.u32 %v360, %v363
        %v366 = vmul.u32 %v361, %v362
        %v367 = vmul.u32 %v361, %v363
        %v368 = vshll.u32 %v365, 16
        %v369 = vshrl.u32 %v365, 16
        %v370 = vshll.u32 %v366, 16
        %v371 = vshrl.u32 %v366, 16
        %vm372 = vc.u32 %v364, %v368
        %v373 = vsel %vm372, 1, 0
        %v374 = vadd.s32 %v364, %v368
        %v375 = vadd.s32 %v367, %v373
        %vm376 = vc.u32 %v374, %v370
        %v377 = vsel %vm376, 1, 0
        %v378 = vadd.s32 %v374, %v370
        %v379 = vadd.s32 %v375, %v377
        %v380 = vadd.s32 %v379, %v369
        %v381 = vadd.s32 %v380, %v371
        %v382 = vand.u32 %v359, 65535
        %v383 = vshrl.u32 %v359, 16
        %v384 = vand.u32 %v354, 65535
        %v385 = vshrl.u32 %v354, 16
        %v386 = vmul.u32 %v382, %v384
        %v387 = vmul.u32 %v382, %v385
        %v388 = vmul.u32 %v383, %v384
        %v389 = vmul.u32 %v383, %v385
        %v390 = vshll.u32 %v387, 16
        %v391 = vshrl.u32 %v387, 16
        %v392 = vshll.u32 %v388, 16
        %v393 = vshrl.u32 %v388, 16
        %vm394 = vc.u32 %v386, %v390
        %v395 = vsel %vm394, 1, 0
        %v396 = vadd.s32 %v386, %v390
        %v397 = vadd.s32 %v389, %v395
        %vm398 = vc.u32 %v396, %v392
        %v399 = vsel %vm398, 1, 0
        %v400 = vadd.s32 %v396, %v392
        %v401 = vadd.s32 %v397, %v399
        %v402 = vadd.s32 %v401, %v391
        %v403 = vadd.s32 %v402, %v393
        %v404 = vmul.u32 %v359, %v350
        %v405 = vadd.s32 %v381, %v400
        %vm406 = vc.u32 %v381, %v400
        %v407 = vadd.s32 %v403, 1
        %v408 = vsel %vm406, %v407, %v403
        %v409 = vadd.s32 %v404, %v408
        %v410 = vadd.s32 %v409, 536870912
        %v411 = vshrl.u32 %v410, 30
        %v412 = vshll.u32 %v411, 30
        %v413 = vsub.s32 %v409, %v412
        %vm414 = vcmp.lt.s32.totalorder %v413, 0
        %v415 = vsub.s32 0, %v413
        %v416 = vsel %vm414, %v415, %v413
        %v417 = vclz %v416
        %v418 = vsub.s32 %v417, 2
        %vm419 = vcmp.gt.s32.totalorder 0, %v418
        %v420 = vsel %vm419, 0, %v418
        %v421 = vsub.s32 32, %v420
        %v422 = vshll.u32 %v413, %v420
        %v423 = vshrl.u32 %v405, %v421
        %v424 = vor.u32 %v422, %v423
        %v425 = vsub.s32 4294967266, %v420
        %v426 = vadd.s32 %v425, 127
        %v427 = vshll.u32 %v426, 23
        %v428 = vor.u32 4788187, %v427
        %v429 = vand.u32 2147483647, %v428
        %v431 = vcvt.s32.f32 %v424
        %v432 = vmul.f32 %v431, %v429
        %v433 = vxor.u32 %v432, 2147483648
        %v434 = vsel %vm313, %v433, %v432
        %v435 = vsub.s32 4, %v411
        %v436 = vsel %vm313, %v435, %v411
        %v437 = vsel %vm312, %v264, %v434
        %v438 = vsel %vm312, 0, %v436
        %v439 = vmul.f32 %v437, %v437
        %v440 = vmul.f32 %v439, -0.001358992
        %v441 = vadd.f32 %v440, 0.041655596
        %v442 = vmul.f32 %v439, %v441
        %v443 = vadd.f32 %v442, -0.4999988
        %v444 = vmul.f32 %v439, %v443
        %v445 = vadd.f32 1.0, %v444
        %v446 = vmul.f32 %v437, %v437
        %v447 = vmul.f32 %v446, -0.00019511016
        %v448 = vadd.f32 %v447, 0.008332121
        %v449 = vmul.f32 %v446, %v448
        %v450 = vadd.f32 %v449, -0.16666654
        %v451 = vmul.f32 %v446, %v450
        %v452 = vadd.f32 %v451, 1.0
        %v453 = vmul.f32 %v452, %v437
        %vm454 = vweird.f32 %v264
        %v455 = vadd.s32 %v438, 3
        %v456 = vand.u32 %v455, 3
        %vm457 = vcmp.lt.s32.totalorder %v456, 2
        %vm458 = vcmp.eq.s32.totalorder %v456, 0
        %v459 = vxor.u32 %v453, 2147483648
        %v460 = vsel %vm458, %v445, %v459
        %vm461 = vcmp.eq.s32.totalorder %v456, 2
        %v462 = vxor.u32 %v445, 2147483648
        %v463 = vsel %vm461, %v462, %v453
        %v464 = vsel %vm457, %v460, %v463
        %v465 = vsel %vm454, nan, %v464
        %v466 = vand.u32 2147483647, %v267
        %vm467 = vcmp.le.f32.partialorder %v466, 0.7853982
        %vm468 = vcmp.lt.s32.totalorder %v267, 0
        %v469 = vand.u32 %v267, 2139095040
        %v470 = vshrl.u32 %v469, 23
        %v471 = vsub.s32 %v470, 127
        %v472 = vand.u32 2147483647, %v267
        %v473 = vand.u32 %v472, 8388607
        %v474 = vor.u32 %v473, 8388608
        %v475 = vsub.s32 0, %v474
        %v476 = vadd.s32 %v471, 1
        %vm477 = vcmp.gt.s32.totalorder %v476, 0
        %v478 = vsel %vm477, %v476, 0
        %v479 = vshrl.u32 %v478, 5
        %v480 = vand.u32 %v478, 31
        %v481 = vsub.s32 32, %v480
        %v482 = vshrl.u32 683565275, %v481
        %v483 = vshll.u32 683565275, %v480
        %v484 = vshrl.u32 2475754826, %v481
        %v485 = vor.u32 %v483, %v484
        %v486 = vshll.u32 2475754826, %v480
        %v487 = vshrl.u32 2131351028, %v481
        %v488 = vor.u32 %v486, %v487
        %v489 = vshll.u32 2131351028, %v480
        %v490 = vshrl.u32 2102212464, %v481
        %v491 = vor.u32 %v489, %v490
        %v492 = vshll.u32 2102212464, %v480
        %v493 = vshrl.u32 920167782, %v481
        %v494 = vor.u32 %v492, %v493
        %v495 = vshll.u32 920167782, %v480
        %v496 = vshrl.u32 1326507024, %v481
        %v497 = vor.u32 %v495, %v496
        %vm498 = vcmp.lt.s32.totalorder %v479, 1
        %vm499 = vcmp.lt.s32.totalorder %v479, 2
        %vm500 = vcmp.lt.s32.totalorder %v479, 3
        %vm501 = vcmp.lt.s32.totalorder %v479, 4
        %v502 = vsel %vm498, %v482, %v485
        %v503 = vsel %vm501, %v491, 2102212464
        %v504 = vsel %vm500, %v488, %v503
        %v505 = vsel %vm499, %v502, %v504
        %v506 = vsel %vm498, %v485, %v488
        %v507 = vsel %vm501, %v494, 920167782
        %v508 = vsel %vm500, %v491, %v507
        %v509 = vsel %vm499, %v506, %v508
        %v510 = vsel %vm498, %v488, %v491
        %v511 = vsel %vm501, %v497, 1326507024
        %v512 = vsel %vm500, %v494, %v511
        %v513 = vsel %vm499, %v510, %v512
        %v514 = vshll.u32 %v474, 8
        %v515 = vand.u32 %v514, 65535
        %v516 = vshrl.u32 %v514, 16
        %v517 = vand.u32 %v513, 65535
        %v518 = vshrl.u32 %v513, 16
        %v519 = vmul.u32 %v515, %v517
        %v520 = vmul.u32 %v515, %v518
        %v521 = vmul.u32 %v516, %v517
        %v522 = vmul.u32 %v516, %v518
        %v523 = vshll.u32 %v520, 16
        %v524 = vshrl.u32 %v520, 16
        %v525 = vshll.u32 %v521, 16
        %v526 = vshrl.u32 %v521, 16
        %vm527 = vc.u32 %v519, %v523
        %v528 = vsel %vm527, 1, 0
        %v529 = vadd.s32 %v519, %v523
        %v530 = vadd.s32 %v522, %v528
        %vm531 = vc.u32 %v529, %v525
        %v532 = vsel %vm531, 1, 0
        %v533 = vadd.s32 %v529, %v525
        %v534 = vadd.s32 %v530, %v532
        %v535 = vadd.s32 %v534, %v524
        %v536 = vadd.s32 %v535, %v526
        %v537 = vand.u32 %v514, 65535
        %v538 = vshrl.u32 %v514, 16
        %v539 = vand.u32 %v509, 65535
        %v540 = vshrl.u32 %v509, 16
        %v541 = vmul.u32 %v537, %v539
        %v542 = vmul.u32 %v537, %v540
        %v543 = vmul.u32 %v538, %v539
        %v544 = vmul.u32 %v538, %v540
        %v545 = vshll.u32 %v542, 16
        %v546 = vshrl.u32 %v542, 16
        %v547 = vshll.u32 %v543, 16
        %v548 = vshrl.u32 %v543, 16
        %vm549 = vc.u32 %v541, %v545
        %v550 = vsel %vm549, 1, 0
        %v551 = vadd.s32 %v541, %v545
        %v552 = vadd.s32 %v544, %v550
        %vm553 = vc.u32 %v551, %v547
        %v554 = vsel %vm553, 1, 0
        %v555 = vadd.s32 %v551, %v547
        %v556 = vadd.s32 %v552, %v554
        %v557 = vadd.s32 %v556, %v546
        %v558 = vadd.s32 %v557, %v548
        %v559 = vmul.u32 %v514, %v505
        %v560 = vadd.s32 %v536, %v555
        %vm561 = vc.u32 %v536, %v555
        %v562 = vadd.s32 %v558, 1
        %v563 = vsel %vm561, %v562, %v558
        %v564 = vadd.s32 %v559, %v563
        %v565 = vadd.s32 %v564, 536870912
        %v566 = vshrl.u32 %v565, 30
        %v567 = vshll.u32 %v566, 30
        %v568 = vsub.s32 %v564, %v567
        %vm569 = vcmp.lt.s32.totalorder %v568, 0
        %v570 = vsub.s32 0, %v568
        %v571 = vsel %vm569, %v570, %v568
        %v572 = vclz %v571
        %v573 = vsub.s32 %v572, 2
        %vm574 = vcmp.gt.s32.totalorder 0, %v573
        %v575 = vsel %vm574, 0, %v573
        %v576 = vsub.s32 32, %v575
        %v577 = vshll.u32 %v568, %v575
        %v578 = vshrl.u32 %v560, %v576
        %v579 = vor.u32 %v577, %v578
        %v580 = vsub.s32 4294967266, %v575
        %v581 = vadd.s32 %v580, 127
        %v582 = vshll.u32 %v581, 23
        %v583 = vor.u32 4788187, %v582
        %v584 = vand.u32 2147483647, %v583
        %v586 = vcvt.s32.f32 %v579
        %v587 = vmul.f32 %v586, %v584
        %v588 = vxor.u32 %v587, 2147483648
        %v589 = vsel %vm468, %v588, %v587
        %v590 = vsub.s32 4, %v566
        %v591 = vsel %vm468, %v590, %v566
        %v592 = vsel %vm467, %v267, %v589
        %v593 = vsel %vm467, 0, %v591
        %v594 = vmul.f32 %v592, %v592
        %v595 = vmul.f32 %v594, -0.001358992
        %v596 = vadd.f32 %v595, 0.041655596
        %v597 = vmul.f32 %v594, %v596
        %v598 = vadd.f32 %v597, -0.4999988
        %v599 = vmul.f32 %v594, %v598
        %v600 = vadd.f32 1.0, %v599
        %v601 = vmul.f32 %v592, %v592
        %v602 = vmul.f32 %v601, -0.00019511016
        %v603 = vadd.f32 %v602, 0.008332121
        %v604 = vmul.f32 %v601, %v603
        %v605 = vadd.f32 %v604, -0.16666654
        %v606 = vmul.f32 %v601, %v605
        %v607 = vadd.f32 %v606, 1.0
        %v608 = vmul.f32 %v607, %v592
        %vm609 = vweird.f32 %v267
        %v610 = vadd.s32 %v593, 3
        %v611 = vand.u32 %v610, 3
        %vm612 = vcmp.lt.s32.totalorder %v611, 2
        %vm613 = vcmp.eq.s32.totalorder %v611, 0
        %v614 = vxor.u32 %v608, 2147483648
        %v615 = vsel %vm613, %v600, %v614
        %vm616 = vcmp.eq.s32.totalorder %v611, 2
        %v617 = vxor.u32 %v600, 2147483648
        %v618 = vsel %vm616, %v617, %v608
        %v619 = vsel %vm612, %v615, %v618
        %v620 = vsel %vm609, nan, %v619
        %v621 = vand.u32 2147483647, %v270
        %vm622 = vcmp.le.f32.partialorder %v621, 0.7853982
        %vm623 = vcmp.lt.s32.totalorder %v270, 0
        %v624 = vand.u32 %v270, 2139095040
        %v625 = vshrl.u32 %v624, 23
        %v626 = vsub.s32 %v625, 127
        %v627 = vand.u32 2147483647, %v270
        %v628 = vand.u32 %v627, 8388607
        %v629 = vor.u32 %v628, 8388608
        %v630 = vsub.s32 0, %v629
        %v631 = vadd.s32 %v626, 1
        %vm632 = vcmp.gt.s32.totalorder %v631, 0
        %v633 = vsel %vm632, %v631, 0
        %v634 = vshrl.u32 %v633, 5
        %v635 = vand.u32 %v633, 31
        %v636 = vsub.s32 32, %v635
        %v637 = vshrl.u32 683565275, %v636
        %v638 = vshll.u32 683565275, %v635
        %v639 = vshrl.u32 2475754826, %v636
        %v640 = vor.u32 %v638, %v639
        %v641 = vshll.u32 2475754826, %v635
        %v642 = vshrl.u32 2131351028, %v636
        %v643 = vor.u32 %v641, %v642
        %v644 = vshll.u32 2131351028, %v635
        %v645 = vshrl.u32 2102212464, %v636
        %v646 = vor.u32 %v644, %v645
        %v647 = vshll.u32 2102212464, %v635
        %v648 = vshrl.u32 920167782, %v636
        %v649 = vor.u32 %v647, %v648
        %v650 = vshll.u32 920167782, %v635
        %v651 = vshrl.u32 1326507024, %v636
        %v652 = vor.u32 %v650, %v651
        %vm653 = vcmp.lt.s32.totalorder %v634, 1
        %vm654 = vcmp.lt.s32.totalorder %v634, 2
        %vm655 = vcmp.lt.s32.totalorder %v634, 3
        %vm656 = vcmp.lt.s32.totalorder %v634, 4
        %v657 = vsel %vm653, %v637, %v640
        %v658 = vsel %vm656, %v646, 2102212464
        %v659 = vsel %vm655, %v643, %v658
        %v660 = vsel %vm654, %v657, %v659
        %v661 = vsel %vm653, %v640, %v643
        %v662 = vsel %vm656, %v649, 920167782
        %v663 = vsel %vm655, %v646, %v662
        %v664 = vsel %vm654, %v661, %v663
        %v665 = vsel %vm653, %v643, %v646
        %v666 = vsel %vm656, %v652, 1326507024
        %v667 = vsel %vm655, %v649, %v666
        %v668 = vsel %vm654, %v665, %v667
        %v669 = vshll.u32 %v629, 8
        %v670 = vand.u32 %v669, 65535
        %v671 = vshrl.u32 %v669, 16
        %v672 = vand.u32 %v668, 65535
        %v673 = vshrl.u32 %v668, 16
        %v674 = vmul.u32 %v670, %v672
        %v675 = vmul.u32 %v670, %v673
        %v676 = vmul.u32 %v671, %v672
        %v677 = vmul.u32 %v671, %v673
        %v678 = vshll.u32 %v675, 16
        %v679 = vshrl.u32 %v675, 16
        %v680 = vshll.u32 %v676, 16
        %v681 = vshrl.u32 %v676, 16
        %vm682 = vc.u32 %v674, %v678
        %v683 = vsel %vm682, 1, 0
        %v684 = vadd.s32 %v674, %v678
        %v685 = vadd.s32 %v677, %v683
        %vm686 = vc.u32 %v684, %v680
        %v687 = vsel %vm686, 1, 0
        %v688 = vadd.s32 %v684, %v680
        %v689 = vadd.s32 %v685, %v687
        %v690 = vadd.s32 %v689, %v679
        %v691 = vadd.s32 %v690, %v681
        %v692 = vand.u32 %v669, 65535
        %v693 = vshrl.u32 %v669, 16
        %v694 = vand.u32 %v664, 65535
        %v695 = vshrl.u32 %v664, 16
        %v696 = vmul.u32 %v692, %v694
        %v697 = vmul.u32 %v692, %v695
        %v698 = vmul.u32 %v693, %v694
        %v699 = vmul.u32 %v693, %v695
        %v700 = vshll.u32 %v697, 16
        %v701 = vshrl.u32 %v697, 16
        %v702 = vshll.u32 %v698, 16
        %v703 = vshrl.u32 %v698, 16
        %vm704 = vc.u32 %v696, %v700
        %v705 = vsel %vm704, 1, 0
        %v706 = vadd.s32 %v696, %v700
        %v707 = vadd.s32 %v699, %v705
        %vm708 = vc.u32 %v706, %v702
        %v709 = vsel %vm708, 1, 0
        %v710 = vadd.s32 %v706, %v702
        %v711 = vadd.s32 %v707, %v709
        %v712 = vadd.s32 %v711, %v701
        %v713 = vadd.s32 %v712, %v703
        %v714 = vmul.u32 %v669, %v660
        %v715 = vadd.s32 %v691, %v710
        %vm716 = vc.u32 %v691, %v710
        %v717 = vadd.s32 %v713, 1
        %v718 = vsel %vm716, %v717, %v713
        %v719 = vadd.s32 %v714, %v718
        %v720 = vadd.s32 %v719, 536870912
        %v721 = vshrl.u32 %v720, 30
        %v722 = vshll.u32 %v721, 30
        %v723 = vsub.s32 %v719, %v722
        %vm724 = vcmp.lt.s32.totalorder %v723, 0
        %v725 = vsub.s32 0, %v723
        %v726 = vsel %vm724, %v725, %v723
        %v727 = vclz %v726
        %v728 = vsub.s32 %v727, 2
        %vm729 = vcmp.gt.s32.totalorder 0, %v728
        %v730 = vsel %vm729, 0, %v728
        %v731 = vsub.s32 32, %v730
        %v732 = vshll.u32 %v723, %v730
        %v733 = vshrl.u32 %v715, %v731
        %v734 = vor.u32 %v732, %v733
        %v735 = vsub.s32 4294967266, %v730
        %v736 = vadd.s32 %v735, 127
        %v737 = vshll.u32 %v736, 23
        %v738 = vor.u32 4788187, %v737
        %v739 = vand.u32 2147483647, %v738
        %v741 = vcvt.s32.f32 %v734
        %v742 = vmul.f32 %v741, %v739
        %v743 = vxor.u32 %v742, 2147483648
        %v744 = vsel %vm623, %v743, %v742
        %v745 = vsub.s32 4, %v721
        %v746 = vsel %vm623, %v745, %v721
        %v747 = vsel %vm622, %v270, %v744
        %v748 = vsel %vm622, 0, %v746
        %v749 = vmul.f32 %v747, %v747
        %v750 = vmul.f32 %v749, -0.001358992
        %v751 = vadd.f32 %v750, 0.041655596
        %v752 = vmul.f32 %v749, %v751
        %v753 = vadd.f32 %v752, -0.4999988
        %v754 = vmul.f32 %v749, %v753
        %v755 = vadd.f32 1.0, %v754
        %v756 = vmul.f32 %v747, %v747
        %v757 = vmul.f32 %v756, -0.00019511016
        %v758 = vadd.f32 %v757, 0.008332121
        %v759 = vmul.f32 %v756, %v758
        %v760 = vadd.f32 %v759, -0.16666654
        %v761 = vmul.f32 %v756, %v760
        %v762 = vadd.f32 %v761, 1.0
        %v763 = vmul.f32 %v762, %v747
        %vm764 = vweird.f32 %v270
        %v765 = vadd.s32 %v748, 3
        %v766 = vand.u32 %v765, 3
        %vm767 = vcmp.lt.s32.totalorder %v766, 2
        %vm768 = vcmp.eq.s32.totalorder %v766, 0
        %v769 = vxor.u32 %v763, 2147483648
        %v770 = vsel %vm768, %v755, %v769
        %vm771 = vcmp.eq.s32.totalorder %v766, 2
        %v772 = vxor.u32 %v755, 2147483648
        %v773 = vsel %vm771, %v772, %v763
        %v774 = vsel %vm767, %v770, %v773
        %v775 = vsel %vm764, nan, %v774
        %v776 = vand.u32 2147483647, %v273
        %vm777 = vcmp.le.f32.partialorder %v776, 0.7853982
        %vm778 = vcmp.lt.s32.totalorder %v273, 0
        %v779 = vand.u32 %v273, 2139095040
        %v780 = vshrl.u32 %v779, 23
        %v781 = vsub.s32 %v780, 127
        %v782 = vand.u32 2147483647, %v273
        %v783 = vand.u32 %v782, 8388607
        %v784 = vor.u32 %v783, 8388608
        %v785 = vsub.s32 0, %v784
        %v786 = vadd.s32 %v781, 1
        %vm787 = vcmp.gt.s32.totalorder %v786, 0
        %v788 = vsel %vm787, %v786, 0
        %v789 = vshrl.u32 %v788, 5
        %v790 = vand.u32 %v788, 31
        %v791 = vsub.s32 32, %v790
        %v792 = vshrl.u32 683565275, %v791
        %v793 = vshll.u32 683565275, %v790
        %v794 = vshrl.u32 2475754826, %v791
        %v795 = vor.u32 %v793, %v794
        %v796 = vshll.u32 2475754826, %v790
        %v797 = vshrl.u32 2131351028, %v791
        %v798 = vor.u32 %v796, %v797
        %v799 = vshll.u32 2131351028, %v790
        %v800 = vshrl.u32 2102212464, %v791
        %v801 = vor.u32 %v799, %v800
        %v802 = vshll.u32 2102212464, %v790
        %v803 = vshrl.u32 920167782, %v791
        %v804 = vor.u32 %v802, %v803
        %v805 = vshll.u32 920167782, %v790
        %v806 = vshrl.u32 1326507024, %v791
        %v807 = vor.u32 %v805, %v806
        %vm808 = vcmp.lt.s32.totalorder %v789, 1
        %vm809 = vcmp.lt.s32.totalorder %v789, 2
        %vm810 = vcmp.lt.s32.totalorder %v789, 3
        %vm811 = vcmp.lt.s32.totalorder %v789, 4
        %v812 = vsel %vm808, %v792, %v795
        %v813 = vsel %vm811, %v801, 2102212464
        %v814 = vsel %vm810, %v798, %v813
        %v815 = vsel %vm809, %v812, %v814
        %v816 = vsel %vm808, %v795, %v798
        %v817 = vsel %vm811, %v804, 920167782
        %v818 = vsel %vm810, %v801, %v817
        %v819 = vsel %vm809, %v816, %v818
        %v820 = vsel %vm808, %v798, %v801
        %v821 = vsel %vm811, %v807, 1326507024
        %v822 = vsel %vm810, %v804, %v821
        %v823 = vsel %vm809, %v820, %v822
        %v824 = vshll.u32 %v784, 8
        %v825 = vand.u32 %v824, 65535
        %v826 = vshrl.u32 %v824, 16
        %v827 = vand.u32 %v823, 65535
        %v828 = vshrl.u32 %v823, 16
        %v829 = vmul.u32 %v825, %v827
        %v830 = vmul.u32 %v825, %v828
        %v831 = vmul.u32 %v826, %v827
        %v832 = vmul.u32 %v826, %v828
        %v833 = vshll.u32 %v830, 16
        %v834 = vshrl.u32 %v830, 16
        %v835 = vshll.u32 %v831, 16
        %v836 = vshrl.u32 %v831, 16
        %vm837 = vc.u32 %v829, %v833
        %v838 = vsel %vm837, 1, 0
        %v839 = vadd.s32 %v829, %v833
        %v840 = vadd.s32 %v832, %v838
        %vm841 = vc.u32 %v839, %v835
        %v842 = vsel %vm841, 1, 0
        %v843 = vadd.s32 %v839, %v835
        %v844 = vadd.s32 %v840, %v842
        %v845 = vadd.s32 %v844, %v834
        %v846 = vadd.s32 %v845, %v836
        %v847 = vand.u32 %v824, 65535
        %v848 = vshrl.u32 %v824, 16
        %v849 = vand.u32 %v819, 65535
        %v850 = vshrl.u32 %v819, 16
        %v851 = vmul.u32 %v847, %v849
        %v852 = vmul.u32 %v847, %v850
        %v853 = vmul.u32 %v848, %v849
        %v854 = vmul.u32 %v848, %v850
        %v855 = vshll.u32 %v852, 16
        %v856 = vshrl.u32 %v852, 16
        %v857 = vshll.u32 %v853, 16
        %v858 = vshrl.u32 %v853, 16
        %vm859 = vc.u32 %v851, %v855
        %v860 = vsel %vm859, 1, 0
        %v861 = vadd.s32 %v851, %v855
        %v862 = vadd.s32 %v854, %v860
        %vm863 = vc.u32 %v861, %v857
        %v864 = vsel %vm863, 1, 0
        %v865 = vadd.s32 %v861, %v857
        %v866 = vadd.s32 %v862, %v864
        %v867 = vadd.s32 %v866, %v856
        %v868 = vadd.s32 %v867, %v858
        %v869 = vmul.u32 %v824, %v815
        %v870 = vadd.s32 %v846, %v865
        %vm871 = vc.u32 %v846, %v865
        %v872 = vadd.s32 %v868, 1
        %v873 = vsel %vm871, %v872, %v868
        %v874 = vadd.s32 %v869, %v873
        %v875 = vadd.s32 %v874, 536870912
        %v876 = vshrl.u32 %v875, 30
        %v877 = vshll.u32 %v876, 30
        %v878 = vsub.s32 %v874, %v877
        %vm879 = vcmp.lt.s32.totalorder %v878, 0
        %v880 = vsub.s32 0, %v878
        %v881 = vsel %vm879, %v880, %v878
        %v882 = vclz %v881
        %v883 = vsub.s32 %v882, 2
        %vm884 = vcmp.gt.s32.totalorder 0, %v883
        %v885 = vsel %vm884, 0, %v883
        %v886 = vsub.s32 32, %v885
        %v887 = vshll.u32 %v878, %v885
        %v888 = vshrl.u32 %v870, %v886
        %v889 = vor.u32 %v887, %v888
        %v890 = vsub.s32 4294967266, %v885
        %v891 = vadd.s32 %v890, 127
        %v892 = vshll.u32 %v891, 23
        %v893 = vor.u32 4788187, %v892
        %v894 = vand.u32 2147483647, %v893
        %v896 = vcvt.s32.f32 %v889
        %v897 = vmul.f32 %v896, %v894
        %v898 = vxor.u32 %v897, 2147483648
        %v899 = vsel %vm778, %v898, %v897
        %v900 = vsub.s32 4, %v876
        %v901 = vsel %vm778, %v900, %v876
        %v902 = vsel %vm777, %v273, %v899
        %v903 = vsel %vm777, 0, %v901
        %v904 = vmul.f32 %v902, %v902
        %v905 = vmul.f32 %v904, -0.001358992
        %v906 = vadd.f32 %v905, 0.041655596
        %v907 = vmul.f32 %v904, %v906
        %v908 = vadd.f32 %v907, -0.4999988
        %v909 = vmul.f32 %v904, %v908
        %v910 = vadd.f32 1.0, %v909
        %v911 = vmul.f32 %v902, %v902
        %v912 = vmul.f32 %v911, -0.00019511016
        %v913 = vadd.f32 %v912, 0.008332121
        %v914 = vmul.f32 %v911, %v913
        %v915 = vadd.f32 %v914, -0.16666654
        %v916 = vmul.f32 %v911, %v915
        %v917 = vadd.f32 %v916, 1.0
        %v918 = vmul.f32 %v917, %v902
        %vm919 = vweird.f32 %v273
        %v920 = vadd.s32 %v903, 3
        %v921 = vand.u32 %v920, 3
        %vm922 = vcmp.lt.s32.totalorder %v921, 2
        %vm923 = vcmp.eq.s32.totalorder %v921, 0
        %v924 = vxor.u32 %v918, 2147483648
        %v925 = vsel %vm923, %v910, %v924
        %vm926 = vcmp.eq.s32.totalorder %v921, 2
        %v927 = vxor.u32 %v910, 2147483648
        %v928 = vsel %vm926, %v927, %v918
        %v929 = vsel %vm922, %v925, %v928
        %v930 = vsel %vm919, nan, %v929
        %v931 = vand.u32 2147483647, %v276
        %vm932 = vcmp.le.f32.partialorder %v931, 0.7853982
        %vm933 = vcmp.lt.s32.totalorder %v276, 0
        %v934 = vand.u32 %v276, 2139095040
        %v935 = vshrl.u32 %v934, 23
        %v936 = vsub.s32 %v935, 127
        %v937 = vand.u32 2147483647, %v276
        %v938 = vand.u32 %v937, 8388607
        %v939 = vor.u32 %v938, 8388608
        %v940 = vsub.s32 0, %v939
        %v941 = vadd.s32 %v936, 1
        %vm942 = vcmp.gt.s32.totalorder %v941, 0
        %v943 = vsel %vm942, %v941, 0
        %v944 = vshrl.u32 %v943, 5
        %v945 = vand.u32 %v943, 31
        %v946 = vsub.s32 32, %v945
        %v947 = vshrl.u32 683565275, %v946
        %v948 = vshll.u32 683565275, %v945
        %v949 = vshrl.u32 2475754826, %v946
        %v950 = vor.u32 %v948, %v949
        %v951 = vshll.u32 2475754826, %v945
        %v952 = vshrl.u32 2131351028, %v946
        %v953 = vor.u32 %v951, %v952
        %v954 = vshll.u32 2131351028, %v945
        %v955 = vshrl.u32 2102212464, %v946
        %v956 = vor.u32 %v954, %v955
        %v957 = vshll.u32 2102212464, %v945
        %v958 = vshrl.u32 920167782, %v946
        %v959 = vor.u32 %v957, %v958
        %v960 = vshll.u32 920167782, %v945
        %v961 = vshrl.u32 1326507024, %v946
        %v962 = vor.u32 %v960, %v961
        %vm963 = vcmp.lt.s32.totalorder %v944, 1
        %vm964 = vcmp.lt.s32.totalorder %v944, 2
        %vm965 = vcmp.lt.s32.totalorder %v944, 3
        %vm966 = vcmp.lt.s32.totalorder %v944, 4
        %v967 = vsel %vm963, %v947, %v950
        %v968 = vsel %vm966, %v956, 2102212464
        %v969 = vsel %vm965, %v953, %v968
        %v970 = vsel %vm964, %v967, %v969
        %v971 = vsel %vm963, %v950, %v953
        %v972 = vsel %vm966, %v959, 920167782
        %v973 = vsel %vm965, %v956, %v972
        %v974 = vsel %vm964, %v971, %v973
        %v975 = vsel %vm963, %v953, %v956
        %v976 = vsel %vm966, %v962, 1326507024
        %v977 = vsel %vm965, %v959, %v976
        %v978 = vsel %vm964, %v975, %v977
        %v979 = vshll.u32 %v939, 8
        %v980 = vand.u32 %v979, 65535
        %v981 = vshrl.u32 %v979, 16
        %v982 = vand.u32 %v978, 65535
        %v983 = vshrl.u32 %v978, 16
        %v984 = vmul.u32 %v980, %v982
        %v985 = vmul.u32 %v980, %v983
        %v986 = vmul.u32 %v981, %v982
        %v987 = vmul.u32 %v981, %v983
        %v988 = vshll.u32 %v985, 16
        %v989 = vshrl.u32 %v985, 16
        %v990 = vshll.u32 %v986, 16
        %v991 = vshrl.u32 %v986, 16
        %vm992 = vc.u32 %v984, %v988
        %v993 = vsel %vm992, 1, 0
        %v994 = vadd.s32 %v984, %v988
        %v995 = vadd.s32 %v987, %v993
        %vm996 = vc.u32 %v994, %v990
        %v997 = vsel %vm996, 1, 0
        %v998 = vadd.s32 %v994, %v990
        %v999 = vadd.s32 %v995, %v997
        %v1000 = vadd.s32 %v999, %v989
        %v1001 = vadd.s32 %v1000, %v991
        %v1002 = vand.u32 %v979, 65535
        %v1003 = vshrl.u32 %v979, 16
        %v1004 = vand.u32 %v974, 65535
        %v1005 = vshrl.u32 %v974, 16
        %v1006 = vmul.u32 %v1002, %v1004
        %v1007 = vmul.u32 %v1002, %v1005
        %v1008 = vmul.u32 %v1003, %v1004
        %v1009 = vmul.u32 %v1003, %v1005
        %v1010 = vshll.u32 %v1007, 16
        %v1011 = vshrl.u32 %v1007, 16
        %v1012 = vshll.u32 %v1008, 16
        %v1013 = vshrl.u32 %v1008, 16
        %vm1014 = vc.u32 %v1006, %v1010
        %v1015 = vsel %vm1014, 1, 0
        %v1016 = vadd.s32 %v1006, %v1010
        %v1017 = vadd.s32 %v1009, %v1015
        %vm1018 = vc.u32 %v1016, %v1012
        %v1019 = vsel %vm1018, 1, 0
        %v1020 = vadd.s32 %v1016, %v1012
        %v1021 = vadd.s32 %v1017, %v1019
        %v1022 = vadd.s32 %v1021, %v1011
        %v1023 = vadd.s32 %v1022, %v1013
        %v1024 = vmul.u32 %v979, %v970
        %v1025 = vadd.s32 %v1001, %v1020
        %vm1026 = vc.u32 %v1001, %v1020
        %v1027 = vadd.s32 %v1023, 1
        %v1028 = vsel %vm1026, %v1027, %v1023
        %v1029 = vadd.s32 %v1024, %v1028
        %v1030 = vadd.s32 %v1029, 536870912
        %v1031 = vshrl.u32 %v1030, 30
        %v1032 = vshll.u32 %v1031, 30
        %v1033 = vsub.s32 %v1029, %v1032
        %vm1034 = vcmp.lt.s32.totalorder %v1033, 0
        %v1035 = vsub.s32 0, %v1033
        %v1036 = vsel %vm1034, %v1035, %v1033
        %v1037 = vclz %v1036
        %v1038 = vsub.s32 %v1037, 2
        %vm1039 = vcmp.gt.s32.totalorder 0, %v1038
        %v1040 = vsel %vm1039, 0, %v1038
        %v1041 = vsub.s32 32, %v1040
        %v1042 = vshll.u32 %v1033, %v1040
        %v1043 = vshrl.u32 %v1025, %v1041
        %v1044 = vor.u32 %v1042, %v1043
        %v1045 = vsub.s32 4294967266, %v1040
        %v1046 = vadd.s32 %v1045, 127
        %v1047 = vshll.u32 %v1046, 23
        %v1048 = vor.u32 4788187, %v1047
        %v1049 = vand.u32 2147483647, %v1048
        %v1051 = vcvt.s32.f32 %v1044
        %v1052 = vmul.f32 %v1051, %v1049
        %v1053 = vxor.u32 %v1052, 2147483648
        %v1054 = vsel %vm933, %v1053, %v1052
        %v1055 = vsub.s32 4, %v1031
        %v1056 = vsel %vm933, %v1055, %v1031
        %v1057 = vsel %vm932, %v276, %v1054
        %v1058 = vsel %vm932, 0, %v1056
        %v1059 = vmul.f32 %v1057, %v1057
        %v1060 = vmul.f32 %v1059, -0.001358992
        %v1061 = vadd.f32 %v1060, 0.041655596
        %v1062 = vmul.f32 %v1059, %v1061
        %v1063 = vadd.f32 %v1062, -0.4999988
        %v1064 = vmul.f32 %v1059, %v1063
        %v1065 = vadd.f32 1.0, %v1064
        %v1066 = vmul.f32 %v1057, %v1057
        %v1067 = vmul.f32 %v1066, -0.00019511016
        %v1068 = vadd.f32 %v1067, 0.008332121
        %v1069 = vmul.f32 %v1066, %v1068
        %v1070 = vadd.f32 %v1069, -0.16666654
        %v1071 = vmul.f32 %v1066, %v1070
        %v1072 = vadd.f32 %v1071, 1.0
        %v1073 = vmul.f32 %v1072, %v1057
        %vm1074 = vweird.f32 %v276
        %v1075 = vadd.s32 %v1058, 3
        %v1076 = vand.u32 %v1075, 3
        %vm1077 = vcmp.lt.s32.totalorder %v1076, 2
        %vm1078 = vcmp.eq.s32.totalorder %v1076, 0
        %v1079 = vxor.u32 %v1073, 2147483648
        %v1080 = vsel %vm1078, %v1065, %v1079
        %vm1081 = vcmp.eq.s32.totalorder %v1076, 2
        %v1082 = vxor.u32 %v1065, 2147483648
        %v1083 = vsel %vm1081, %v1082, %v1073
        %v1084 = vsel %vm1077, %v1080, %v1083
        %v1085 = vsel %vm1074, nan, %v1084
        %v1086 = vand.u32 2147483647, %v279
        %vm1087 = vcmp.le.f32.partialorder %v1086, 0.7853982
        %vm1088 = vcmp.lt.s32.totalorder %v279, 0
        %v1089 = vand.u32 %v279, 2139095040
        %v1090 = vshrl.u32 %v1089, 23
        %v1091 = vsub.s32 %v1090, 127
        %v1092 = vand.u32 2147483647, %v279
        %v1093 = vand.u32 %v1092, 8388607
        %v1094 = vor.u32 %v1093, 8388608
        %v1095 = vsub.s32 0, %v1094
        %v1096 = vadd.s32 %v1091, 1
        %vm1097 = vcmp.gt.s32.totalorder %v1096, 0
        %v1098 = vsel %vm1097, %v1096, 0
        %v1099 = vshrl.u32 %v1098, 5
        %v1100 = vand.u32 %v1098, 31
        %v1101 = vsub.s32 32, %v1100
        %v1102 = vshrl.u32 683565275, %v1101
        %v1103 = vshll.u32 683565275, %v1100
        %v1104 = vshrl.u32 2475754826, %v1101
        %v1105 = vor.u32 %v1103, %v1104
        %v1106 = vshll.u32 2475754826, %v1100
        %v1107 = vshrl.u32 2131351028, %v1101
        %v1108 = vor.u32 %v1106, %v1107
        %v1109 = vshll.u32 2131351028, %v1100
        %v1110 = vshrl.u32 2102212464, %v1101
        %v1111 = vor.u32 %v1109, %v1110
        %v1112 = vshll.u32 2102212464, %v1100
        %v1113 = vshrl.u32 920167782, %v1101
        %v1114 = vor.u32 %v1112, %v1113
        %v1115 = vshll.u32 920167782, %v1100
        %v1116 = vshrl.u32 1326507024, %v1101
        %v1117 = vor.u32 %v1115, %v1116
        %vm1118 = vcmp.lt.s32.totalorder %v1099, 1
        %vm1119 = vcmp.lt.s32.totalorder %v1099, 2
        %vm1120 = vcmp.lt.s32.totalorder %v1099, 3
        %vm1121 = vcmp.lt.s32.totalorder %v1099, 4
        %v1122 = vsel %vm1118, %v1102, %v1105
        %v1123 = vsel %vm1121, %v1111, 2102212464
        %v1124 = vsel %vm1120, %v1108, %v1123
        %v1125 = vsel %vm1119, %v1122, %v1124
        %v1126 = vsel %vm1118, %v1105, %v1108
        %v1127 = vsel %vm1121, %v1114, 920167782
        %v1128 = vsel %vm1120, %v1111, %v1127
        %v1129 = vsel %vm1119, %v1126, %v1128
        %v1130 = vsel %vm1118, %v1108, %v1111
        %v1131 = vsel %vm1121, %v1117, 1326507024
        %v1132 = vsel %vm1120, %v1114, %v1131
        %v1133 = vsel %vm1119, %v1130, %v1132
        %v1134 = vshll.u32 %v1094, 8
        %v1135 = vand.u32 %v1134, 65535
        %v1136 = vshrl.u32 %v1134, 16
        %v1137 = vand.u32 %v1133, 65535
        %v1138 = vshrl.u32 %v1133, 16
        %v1139 = vmul.u32 %v1135, %v1137
        %v1140 = vmul.u32 %v1135, %v1138
        %v1141 = vmul.u32 %v1136, %v1137
        %v1142 = vmul.u32 %v1136, %v1138
        %v1143 = vshll.u32 %v1140, 16
        %v1144 = vshrl.u32 %v1140, 16
        %v1145 = vshll.u32 %v1141, 16
        %v1146 = vshrl.u32 %v1141, 16
        %vm1147 = vc.u32 %v1139, %v1143
        %v1148 = vsel %vm1147, 1, 0
        %v1149 = vadd.s32 %v1139, %v1143
        %v1150 = vadd.s32 %v1142, %v1148
        %vm1151 = vc.u32 %v1149, %v1145
        %v1152 = vsel %vm1151, 1, 0
        %v1153 = vadd.s32 %v1149, %v1145
        %v1154 = vadd.s32 %v1150, %v1152
        %v1155 = vadd.s32 %v1154, %v1144
        %v1156 = vadd.s32 %v1155, %v1146
        %v1157 = vand.u32 %v1134, 65535
        %v1158 = vshrl.u32 %v1134, 16
        %v1159 = vand.u32 %v1129, 65535
        %v1160 = vshrl.u32 %v1129, 16
        %v1161 = vmul.u32 %v1157, %v1159
        %v1162 = vmul.u32 %v1157, %v1160
        %v1163 = vmul.u32 %v1158, %v1159
        %v1164 = vmul.u32 %v1158, %v1160
        %v1165 = vshll.u32 %v1162, 16
        %v1166 = vshrl.u32 %v1162, 16
        %v1167 = vshll.u32 %v1163, 16
        %v1168 = vshrl.u32 %v1163, 16
        %vm1169 = vc.u32 %v1161, %v1165
        %v1170 = vsel %vm1169, 1, 0
        %v1171 = vadd.s32 %v1161, %v1165
        %v1172 = vadd.s32 %v1164, %v1170
        %vm1173 = vc.u32 %v1171, %v1167
        %v1174 = vsel %vm1173, 1, 0
        %v1175 = vadd.s32 %v1171, %v1167
        %v1176 = vadd.s32 %v1172, %v1174
        %v1177 = vadd.s32 %v1176, %v1166
        %v1178 = vadd.s32 %v1177, %v1168
        %v1179 = vmul.u32 %v1134, %v1125
        %v1180 = vadd.s32 %v1156, %v1175
        %vm1181 = vc.u32 %v1156, %v1175
        %v1182 = vadd.s32 %v1178, 1
        %v1183 = vsel %vm1181, %v1182, %v1178
        %v1184 = vadd.s32 %v1179, %v1183
        %v1185 = vadd.s32 %v1184, 536870912
        %v1186 = vshrl.u32 %v1185, 30
        %v1187 = vshll.u32 %v1186, 30
        %v1188 = vsub.s32 %v1184, %v1187
        %vm1189 = vcmp.lt.s32.totalorder %v1188, 0
        %v1190 = vsub.s32 0, %v1188
        %v1191 = vsel %vm1189, %v1190, %v1188
        %v1192 = vclz %v1191
        %v1193 = vsub.s32 %v1192, 2
        %vm1194 = vcmp.gt.s32.totalorder 0, %v1193
        %v1195 = vsel %vm1194, 0, %v1193
        %v1196 = vsub.s32 32, %v1195
        %v1197 = vshll.u32 %v1188, %v1195
        %v1198 = vshrl.u32 %v1180, %v1196
        %v1199 = vor.u32 %v1197, %v1198
        %v1200 = vsub.s32 4294967266, %v1195
        %v1201 = vadd.s32 %v1200, 127
        %v1202 = vshll.u32 %v1201, 23
        %v1203 = vor.u32 4788187, %v1202
        %v1204 = vand.u32 2147483647, %v1203
        %v1206 = vcvt.s32.f32 %v1199
        %v1207 = vmul.f32 %v1206, %v1204
        %v1208 = vxor.u32 %v1207, 2147483648
        %v1209 = vsel %vm1088, %v1208, %v1207
        %v1210 = vsub.s32 4, %v1186
        %v1211 = vsel %vm1088, %v1210, %v1186
        %v1212 = vsel %vm1087, %v279, %v1209
        %v1213 = vsel %vm1087, 0, %v1211
        %v1214 = vmul.f32 %v1212, %v1212
        %v1215 = vmul.f32 %v1214, -0.001358992
        %v1216 = vadd.f32 %v1215, 0.041655596
        %v1217 = vmul.f32 %v1214, %v1216
        %v1218 = vadd.f32 %v1217, -0.4999988
        %v1219 = vmul.f32 %v1214, %v1218
        %v1220 = vadd.f32 1.0, %v1219
        %v1221 = vmul.f32 %v1212, %v1212
        %v1222 = vmul.f32 %v1221, -0.00019511016
        %v1223 = vadd.f32 %v1222, 0.008332121
        %v1224 = vmul.f32 %v1221, %v1223
        %v1225 = vadd.f32 %v1224, -0.16666654
        %v1226 = vmul.f32 %v1221, %v1225
        %v1227 = vadd.f32 %v1226, 1.0
        %v1228 = vmul.f32 %v1227, %v1212
        %vm1229 = vweird.f32 %v279
        %v1230 = vadd.s32 %v1213, 3
        %v1231 = vand.u32 %v1230, 3
        %vm1232 = vcmp.lt.s32.totalorder %v1231, 2
        %vm1233 = vcmp.eq.s32.totalorder %v1231, 0
        %v1234 = vxor.u32 %v1228, 2147483648
        %v1235 = vsel %vm1233, %v1220, %v1234
        %vm1236 = vcmp.eq.s32.totalorder %v1231, 2
        %v1237 = vxor.u32 %v1220, 2147483648
        %v1238 = vsel %vm1236, %v1237, %v1228
        %v1239 = vsel %vm1232, %v1235, %v1238
        %v1240 = vsel %vm1229, nan, %v1239
        %v1241 = vand.u32 2147483647, %v282
        %vm1242 = vcmp.le.f32.partialorder %v1241, 0.7853982
        %vm1243 = vcmp.lt.s32.totalorder %v282, 0
        %v1244 = vand.u32 %v282, 2139095040
        %v1245 = vshrl.u32 %v1244, 23
        %v1246 = vsub.s32 %v1245, 127
        %v1247 = vand.u32 2147483647, %v282
        %v1248 = vand.u32 %v1247, 8388607
        %v1249 = vor.u32 %v1248, 8388608
        %v1250 = vsub.s32 0, %v1249
        %v1251 = vadd.s32 %v1246, 1
        %vm1252 = vcmp.gt.s32.totalorder %v1251, 0
        %v1253 = vsel %vm1252, %v1251, 0
        %v1254 = vshrl.u32 %v1253, 5
        %v1255 = vand.u32 %v1253, 31
        %v1256 = vsub.s32 32, %v1255
        %v1257 = vshrl.u32 683565275, %v1256
        %v1258 = vshll.u32 683565275, %v1255
        %v1259 = vshrl.u32 2475754826, %v1256
        %v1260 = vor.u32 %v1258, %v1259
        %v1261 = vshll.u32 2475754826, %v1255
        %v1262 = vshrl.u32 2131351028, %v1256
        %v1263 = vor.u32 %v1261, %v1262
        %v1264 = vshll.u32 2131351028, %v1255
        %v1265 = vshrl.u32 2102212464, %v1256
        %v1266 = vor.u32 %v1264, %v1265
        %v1267 = vshll.u32 2102212464, %v1255
        %v1268 = vshrl.u32 920167782, %v1256
        %v1269 = vor.u32 %v1267, %v1268
        %v1270 = vshll.u32 920167782, %v1255
        %v1271 = vshrl.u32 1326507024, %v1256
        %v1272 = vor.u32 %v1270, %v1271
        %vm1273 = vcmp.lt.s32.totalorder %v1254, 1
        %vm1274 = vcmp.lt.s32.totalorder %v1254, 2
        %vm1275 = vcmp.lt.s32.totalorder %v1254, 3
        %vm1276 = vcmp.lt.s32.totalorder %v1254, 4
        %v1277 = vsel %vm1273, %v1257, %v1260
        %v1278 = vsel %vm1276, %v1266, 2102212464
        %v1279 = vsel %vm1275, %v1263, %v1278
        %v1280 = vsel %vm1274, %v1277, %v1279
        %v1281 = vsel %vm1273, %v1260, %v1263
        %v1282 = vsel %vm1276, %v1269, 920167782
        %v1283 = vsel %vm1275, %v1266, %v1282
        %v1284 = vsel %vm1274, %v1281, %v1283
        %v1285 = vsel %vm1273, %v1263, %v1266
        %v1286 = vsel %vm1276, %v1272, 1326507024
        %v1287 = vsel %vm1275, %v1269, %v1286
        %v1288 = vsel %vm1274, %v1285, %v1287
        %v1289 = vshll.u32 %v1249, 8
        %v1290 = vand.u32 %v1289, 65535
        %v1291 = vshrl.u32 %v1289, 16
        %v1292 = vand.u32 %v1288, 65535
        %v1293 = vshrl.u32 %v1288, 16
        %v1294 = vmul.u32 %v1290, %v1292
        %v1295 = vmul.u32 %v1290, %v1293
        %v1296 = vmul.u32 %v1291, %v1292
        %v1297 = vmul.u32 %v1291, %v1293
        %v1298 = vshll.u32 %v1295, 16
        %v1299 = vshrl.u32 %v1295, 16
        %v1300 = vshll.u32 %v1296, 16
        %v1301 = vshrl.u32 %v1296, 16
        %vm1302 = vc.u32 %v1294, %v1298
        %v1303 = vsel %vm1302, 1, 0
        %v1304 = vadd.s32 %v1294, %v1298
        %v1305 = vadd.s32 %v1297, %v1303
        %vm1306 = vc.u32 %v1304, %v1300
        %v1307 = vsel %vm1306, 1, 0
        %v1308 = vadd.s32 %v1304, %v1300
        %v1309 = vadd.s32 %v1305, %v1307
        %v1310 = vadd.s32 %v1309, %v1299
        %v1311 = vadd.s32 %v1310, %v1301
        %v1312 = vand.u32 %v1289, 65535
        %v1313 = vshrl.u32 %v1289, 16
        %v1314 = vand.u32 %v1284, 65535
        %v1315 = vshrl.u32 %v1284, 16
        %v1316 = vmul.u32 %v1312, %v1314
        %v1317 = vmul.u32 %v1312, %v1315
        %v1318 = vmul.u32 %v1313, %v1314
        %v1319 = vmul.u32 %v1313, %v1315
        %v1320 = vshll.u32 %v1317, 16
        %v1321 = vshrl.u32 %v1317, 16
        %v1322 = vshll.u32 %v1318, 16
        %v1323 = vshrl.u32 %v1318, 16
        %vm1324 = vc.u32 %v1316, %v1320
        %v1325 = vsel %vm1324, 1, 0
        %v1326 = vadd.s32 %v1316, %v1320
        %v1327 = vadd.s32 %v1319, %v1325
        %vm1328 = vc.u32 %v1326, %v1322
        %v1329 = vsel %vm1328, 1, 0
        %v1330 = vadd.s32 %v1326, %v1322
        %v1331 = vadd.s32 %v1327, %v1329
        %v1332 = vadd.s32 %v1331, %v1321
        %v1333 = vadd.s32 %v1332, %v1323
        %v1334 = vmul.u32 %v1289, %v1280
        %v1335 = vadd.s32 %v1311, %v1330
        %vm1336 = vc.u32 %v1311, %v1330
        %v1337 = vadd.s32 %v1333, 1
        %v1338 = vsel %vm1336, %v1337, %v1333
        %v1339 = vadd.s32 %v1334, %v1338
        %v1340 = vadd.s32 %v1339, 536870912
        %v1341 = vshrl.u32 %v1340, 30
        %v1342 = vshll.u32 %v1341, 30
        %v1343 = vsub.s32 %v1339, %v1342
        %vm1344 = vcmp.lt.s32.totalorder %v1343, 0
        %v1345 = vsub.s32 0, %v1343
        %v1346 = vsel %vm1344, %v1345, %v1343
        %v1347 = vclz %v1346
        %v1348 = vsub.s32 %v1347, 2
        %vm1349 = vcmp.gt.s32.totalorder 0, %v1348
        %v1350 = vsel %vm1349, 0, %v1348
        %v1351 = vsub.s32 32, %v1350
        %v1352 = vshll.u32 %v1343, %v1350
        %v1353 = vshrl.u32 %v1335, %v1351
        %v1354 = vor.u32 %v1352, %v1353
        %v1355 = vsub.s32 4294967266, %v1350
        %v1356 = vadd.s32 %v1355, 127
        %v1357 = vshll.u32 %v1356, 23
        %v1358 = vor.u32 4788187, %v1357
        %v1359 = vand.u32 2147483647, %v1358
        %v1361 = vcvt.s32.f32 %v1354
        %v1362 = vmul.f32 %v1361, %v1359
        %v1363 = vxor.u32 %v1362, 2147483648
        %v1364 = vsel %vm1243, %v1363, %v1362
        %v1365 = vsub.s32 4, %v1341
        %v1366 = vsel %vm1243, %v1365, %v1341
        %v1367 = vsel %vm1242, %v282, %v1364
        %v1368 = vsel %vm1242, 0, %v1366
        %v1369 = vmul.f32 %v1367, %v1367
        %v1370 = vmul.f32 %v1369, -0.001358992
        %v1371 = vadd.f32 %v1370, 0.041655596
        %v1372 = vmul.f32 %v1369, %v1371
        %v1373 = vadd.f32 %v1372, -0.4999988
        %v1374 = vmul.f32 %v1369, %v1373
        %v1375 = vadd.f32 1.0, %v1374
        %v1376 = vmul.f32 %v1367, %v1367
        %v1377 = vmul.f32 %v1376, -0.00019511016
        %v1378 = vadd.f32 %v1377, 0.008332121
        %v1379 = vmul.f32 %v1376, %v1378
        %v1380 = vadd.f32 %v1379, -0.16666654
        %v1381 = vmul.f32 %v1376, %v1380
        %v1382 = vadd.f32 %v1381, 1.0
        %v1383 = vmul.f32 %v1382, %v1367
        %vm1384 = vweird.f32 %v282
        %v1385 = vadd.s32 %v1368, 3
        %v1386 = vand.u32 %v1385, 3
        %vm1387 = vcmp.lt.s32.totalorder %v1386, 2
        %vm1388 = vcmp.eq.s32.totalorder %v1386, 0
        %v1389 = vxor.u32 %v1383, 2147483648
        %v1390 = vsel %vm1388, %v1375, %v1389
        %vm1391 = vcmp.eq.s32.totalorder %v1386, 2
        %v1392 = vxor.u32 %v1375, 2147483648
        %v1393 = vsel %vm1391, %v1392, %v1383
        %v1394 = vsel %vm1387, %v1390, %v1393
        %v1395 = vsel %vm1384, nan, %v1394
        %v1396 = vand.u32 2147483647, %v285
        %vm1397 = vcmp.le.f32.partialorder %v1396, 0.7853982
        %vm1398 = vcmp.lt.s32.totalorder %v285, 0
        %v1399 = vand.u32 %v285, 2139095040
        %v1400 = vshrl.u32 %v1399, 23
        %v1401 = vsub.s32 %v1400, 127
        %v1402 = vand.u32 2147483647, %v285
        %v1403 = vand.u32 %v1402, 8388607
        %v1404 = vor.u32 %v1403, 8388608
        %v1405 = vsub.s32 0, %v1404
        %v1406 = vadd.s32 %v1401, 1
        %vm1407 = vcmp.gt.s32.totalorder %v1406, 0
        %v1408 = vsel %vm1407, %v1406, 0
        %v1409 = vshrl.u32 %v1408, 5
        %v1410 = vand.u32 %v1408, 31
        %v1411 = vsub.s32 32, %v1410
        %v1412 = vshrl.u32 683565275, %v1411
        %v1413 = vshll.u32 683565275, %v1410
        %v1414 = vshrl.u32 2475754826, %v1411
        %v1415 = vor.u32 %v1413, %v1414
        %v1416 = vshll.u32 2475754826, %v1410
        %v1417 = vshrl.u32 2131351028, %v1411
        %v1418 = vor.u32 %v1416, %v1417
        %v1419 = vshll.u32 2131351028, %v1410
        %v1420 = vshrl.u32 2102212464, %v1411
        %v1421 = vor.u32 %v1419, %v1420
        %v1422 = vshll.u32 2102212464, %v1410
        %v1423 = vshrl.u32 920167782, %v1411
        %v1424 = vor.u32 %v1422, %v1423
        %v1425 = vshll.u32 920167782, %v1410
        %v1426 = vshrl.u32 1326507024, %v1411
        %v1427 = vor.u32 %v1425, %v1426
        %vm1428 = vcmp.lt.s32.totalorder %v1409, 1
        %vm1429 = vcmp.lt.s32.totalorder %v1409, 2
        %vm1430 = vcmp.lt.s32.totalorder %v1409, 3
        %vm1431 = vcmp.lt.s32.totalorder %v1409, 4
        %v1432 = vsel %vm1428, %v1412, %v1415
        %v1433 = vsel %vm1431, %v1421, 2102212464
        %v1434 = vsel %vm1430, %v1418, %v1433
        %v1435 = vsel %vm1429, %v1432, %v1434
        %v1436 = vsel %vm1428, %v1415, %v1418
        %v1437 = vsel %vm1431, %v1424, 920167782
        %v1438 = vsel %vm1430, %v1421, %v1437
        %v1439 = vsel %vm1429, %v1436, %v1438
        %v1440 = vsel %vm1428, %v1418, %v1421
        %v1441 = vsel %vm1431, %v1427, 1326507024
        %v1442 = vsel %vm1430, %v1424, %v1441
        %v1443 = vsel %vm1429, %v1440, %v1442
        %v1444 = vshll.u32 %v1404, 8
        %v1445 = vand.u32 %v1444, 65535
        %v1446 = vshrl.u32 %v1444, 16
        %v1447 = vand.u32 %v1443, 65535
        %v1448 = vshrl.u32 %v1443, 16
        %v1449 = vmul.u32 %v1445, %v1447
        %v1450 = vmul.u32 %v1445, %v1448
        %v1451 = vmul.u32 %v1446, %v1447
        %v1452 = vmul.u32 %v1446, %v1448
        %v1453 = vshll.u32 %v1450, 16
        %v1454 = vshrl.u32 %v1450, 16
        %v1455 = vshll.u32 %v1451, 16
        %v1456 = vshrl.u32 %v1451, 16
        %vm1457 = vc.u32 %v1449, %v1453
        %v1458 = vsel %vm1457, 1, 0
        %v1459 = vadd.s32 %v1449, %v1453
        %v1460 = vadd.s32 %v1452, %v1458
        %vm1461 = vc.u32 %v1459, %v1455
        %v1462 = vsel %vm1461, 1, 0
        %v1463 = vadd.s32 %v1459, %v1455
        %v1464 = vadd.s32 %v1460, %v1462
        %v1465 = vadd.s32 %v1464, %v1454
        %v1466 = vadd.s32 %v1465, %v1456
        %v1467 = vand.u32 %v1444, 65535
        %v1468 = vshrl.u32 %v1444, 16
        %v1469 = vand.u32 %v1439, 65535
        %v1470 = vshrl.u32 %v1439, 16
        %v1471 = vmul.u32 %v1467, %v1469
        %v1472 = vmul.u32 %v1467, %v1470
        %v1473 = vmul.u32 %v1468, %v1469
        %v1474 = vmul.u32 %v1468, %v1470
        %v1475 = vshll.u32 %v1472, 16
        %v1476 = vshrl.u32 %v1472, 16
        %v1477 = vshll.u32 %v1473, 16
        %v1478 = vshrl.u32 %v1473, 16
        %vm1479 = vc.u32 %v1471, %v1475
        %v1480 = vsel %vm1479, 1, 0
        %v1481 = vadd.s32 %v1471, %v1475
        %v1482 = vadd.s32 %v1474, %v1480
        %vm1483 = vc.u32 %v1481, %v1477
        %v1484 = vsel %vm1483, 1, 0
        %v1485 = vadd.s32 %v1481, %v1477
        %v1486 = vadd.s32 %v1482, %v1484
        %v1487 = vadd.s32 %v1486, %v1476
        %v1488 = vadd.s32 %v1487, %v1478
        %v1489 = vmul.u32 %v1444, %v1435
        %v1490 = vadd.s32 %v1466, %v1485
        %vm1491 = vc.u32 %v1466, %v1485
        %v1492 = vadd.s32 %v1488, 1
        %v1493 = vsel %vm1491, %v1492, %v1488
        %v1494 = vadd.s32 %v1489, %v1493
        %v1495 = vadd.s32 %v1494, 536870912
        %v1496 = vshrl.u32 %v1495, 30
        %v1497 = vshll.u32 %v1496, 30
        %v1498 = vsub.s32 %v1494, %v1497
        %vm1499 = vcmp.lt.s32.totalorder %v1498, 0
        %v1500 = vsub.s32 0, %v1498
        %v1501 = vsel %vm1499, %v1500, %v1498
        %v1502 = vclz %v1501
        %v1503 = vsub.s32 %v1502, 2
        %vm1504 = vcmp.gt.s32.totalorder 0, %v1503
        %v1505 = vsel %vm1504, 0, %v1503
        %v1506 = vsub.s32 32, %v1505
        %v1507 = vshll.u32 %v1498, %v1505
        %v1508 = vshrl.u32 %v1490, %v1506
        %v1509 = vor.u32 %v1507, %v1508
        %v1510 = vsub.s32 4294967266, %v1505
        %v1511 = vadd.s32 %v1510, 127
        %v1512 = vshll.u32 %v1511, 23
        %v1513 = vor.u32 4788187, %v1512
        %v1514 = vand.u32 2147483647, %v1513
        %v1516 = vcvt.s32.f32 %v1509
        %v1517 = vmul.f32 %v1516, %v1514
        %v1518 = vxor.u32 %v1517, 2147483648
        %v1519 = vsel %vm1398, %v1518, %v1517
        %v1520 = vsub.s32 4, %v1496
        %v1521 = vsel %vm1398, %v1520, %v1496
        %v1522 = vsel %vm1397, %v285, %v1519
        %v1523 = vsel %vm1397, 0, %v1521
        %v1524 = vmul.f32 %v1522, %v1522
        %v1525 = vmul.f32 %v1524, -0.001358992
        %v1526 = vadd.f32 %v1525, 0.041655596
        %v1527 = vmul.f32 %v1524, %v1526
        %v1528 = vadd.f32 %v1527, -0.4999988
        %v1529 = vmul.f32 %v1524, %v1528
        %v1530 = vadd.f32 1.0, %v1529
        %v1531 = vmul.f32 %v1522, %v1522
        %v1532 = vmul.f32 %v1531, -0.00019511016
        %v1533 = vadd.f32 %v1532, 0.008332121
        %v1534 = vmul.f32 %v1531, %v1533
        %v1535 = vadd.f32 %v1534, -0.16666654
        %v1536 = vmul.f32 %v1531, %v1535
        %v1537 = vadd.f32 %v1536, 1.0
        %v1538 = vmul.f32 %v1537, %v1522
        %vm1539 = vweird.f32 %v285
        %v1540 = vadd.s32 %v1523, 3
        %v1541 = vand.u32 %v1540, 3
        %vm1542 = vcmp.lt.s32.totalorder %v1541, 2
        %vm1543 = vcmp.eq.s32.totalorder %v1541, 0
        %v1544 = vxor.u32 %v1538, 2147483648
        %v1545 = vsel %vm1543, %v1530, %v1544
        %vm1546 = vcmp.eq.s32.totalorder %v1541, 2
        %v1547 = vxor.u32 %v1530, 2147483648
        %v1548 = vsel %vm1546, %v1547, %v1538
        %v1549 = vsel %vm1542, %v1545, %v1548
        %v1550 = vsel %vm1539, nan, %v1549
        %v1551 = vand.u32 2147483647, %v288
        %vm1552 = vcmp.le.f32.partialorder %v1551, 0.7853982
        %vm1553 = vcmp.lt.s32.totalorder %v288, 0
        %v1554 = vand.u32 %v288, 2139095040
        %v1555 = vshrl.u32 %v1554, 23
        %v1556 = vsub.s32 %v1555, 127
        %v1557 = vand.u32 2147483647, %v288
        %v1558 = vand.u32 %v1557, 8388607
        %v1559 = vor.u32 %v1558, 8388608
        %v1560 = vsub.s32 0, %v1559
        %v1561 = vadd.s32 %v1556, 1
        %vm1562 = vcmp.gt.s32.totalorder %v1561, 0
        %v1563 = vsel %vm1562, %v1561, 0
        %v1564 = vshrl.u32 %v1563, 5
        %v1565 = vand.u32 %v1563, 31
        %v1566 = vsub.s32 32, %v1565
        %v1567 = vshrl.u32 683565275, %v1566
        %v1568 = vshll.u32 683565275, %v1565
        %v1569 = vshrl.u32 2475754826, %v1566
        %v1570 = vor.u32 %v1568, %v1569
        %v1571 = vshll.u32 2475754826, %v1565
        %v1572 = vshrl.u32 2131351028, %v1566
        %v1573 = vor.u32 %v1571, %v1572
        %v1574 = vshll.u32 2131351028, %v1565
        %v1575 = vshrl.u32 2102212464, %v1566
        %v1576 = vor.u32 %v1574, %v1575
        %v1577 = vshll.u32 2102212464, %v1565
        %v1578 = vshrl.u32 920167782, %v1566
        %v1579 = vor.u32 %v1577, %v1578
        %v1580 = vshll.u32 920167782, %v1565
        %v1581 = vshrl.u32 1326507024, %v1566
        %v1582 = vor.u32 %v1580, %v1581
        %vm1583 = vcmp.lt.s32.totalorder %v1564, 1
        %vm1584 = vcmp.lt.s32.totalorder %v1564, 2
        %vm1585 = vcmp.lt.s32.totalorder %v1564, 3
        %vm1586 = vcmp.lt.s32.totalorder %v1564, 4
        %v1587 = vsel %vm1583, %v1567, %v1570
        %v1588 = vsel %vm1586, %v1576, 2102212464
        %v1589 = vsel %vm1585, %v1573, %v1588
        %v1590 = vsel %vm1584, %v1587, %v1589
        %v1591 = vsel %vm1583, %v1570, %v1573
        %v1592 = vsel %vm1586, %v1579, 920167782
        %v1593 = vsel %vm1585, %v1576, %v1592
        %v1594 = vsel %vm1584, %v1591, %v1593
        %v1595 = vsel %vm1583, %v1573, %v1576
        %v1596 = vsel %vm1586, %v1582, 1326507024
        %v1597 = vsel %vm1585, %v1579, %v1596
        %v1598 = vsel %vm1584, %v1595, %v1597
        %v1599 = vshll.u32 %v1559, 8
        %v1600 = vand.u32 %v1599, 65535
        %v1601 = vshrl.u32 %v1599, 16
        %v1602 = vand.u32 %v1598, 65535
        %v1603 = vshrl.u32 %v1598, 16
        %v1604 = vmul.u32 %v1600, %v1602
        %v1605 = vmul.u32 %v1600, %v1603
        %v1606 = vmul.u32 %v1601, %v1602
        %v1607 = vmul.u32 %v1601, %v1603
        %v1608 = vshll.u32 %v1605, 16
        %v1609 = vshrl.u32 %v1605, 16
        %v1610 = vshll.u32 %v1606, 16
        %v1611 = vshrl.u32 %v1606, 16
        %vm1612 = vc.u32 %v1604, %v1608
        %v1613 = vsel %vm1612, 1, 0
        %v1614 = vadd.s32 %v1604, %v1608
        %v1615 = vadd.s32 %v1607, %v1613
        %vm1616 = vc.u32 %v1614, %v1610
        %v1617 = vsel %vm1616, 1, 0
        %v1618 = vadd.s32 %v1614, %v1610
        %v1619 = vadd.s32 %v1615, %v1617
        %v1620 = vadd.s32 %v1619, %v1609
        %v1621 = vadd.s32 %v1620, %v1611
        %v1622 = vand.u32 %v1599, 65535
        %v1623 = vshrl.u32 %v1599, 16
        %v1624 = vand.u32 %v1594, 65535
        %v1625 = vshrl.u32 %v1594, 16
        %v1626 = vmul.u32 %v1622, %v1624
        %v1627 = vmul.u32 %v1622, %v1625
        %v1628 = vmul.u32 %v1623, %v1624
        %v1629 = vmul.u32 %v1623, %v1625
        %v1630 = vshll.u32 %v1627, 16
        %v1631 = vshrl.u32 %v1627, 16
        %v1632 = vshll.u32 %v1628, 16
        %v1633 = vshrl.u32 %v1628, 16
        %vm1634 = vc.u32 %v1626, %v1630
        %v1635 = vsel %vm1634, 1, 0
        %v1636 = vadd.s32 %v1626, %v1630
        %v1637 = vadd.s32 %v1629, %v1635
        %vm1638 = vc.u32 %v1636, %v1632
        %v1639 = vsel %vm1638, 1, 0
        %v1640 = vadd.s32 %v1636, %v1632
        %v1641 = vadd.s32 %v1637, %v1639
        %v1642 = vadd.s32 %v1641, %v1631
        %v1643 = vadd.s32 %v1642, %v1633
        %v1644 = vmul.u32 %v1599, %v1590
        %v1645 = vadd.s32 %v1621, %v1640
        %vm1646 = vc.u32 %v1621, %v1640
        %v1647 = vadd.s32 %v1643, 1
        %v1648 = vsel %vm1646, %v1647, %v1643
        %v1649 = vadd.s32 %v1644, %v1648
        %v1650 = vadd.s32 %v1649, 536870912
        %v1651 = vshrl.u32 %v1650, 30
        %v1652 = vshll.u32 %v1651, 30
        %v1653 = vsub.s32 %v1649, %v1652
        %vm1654 = vcmp.lt.s32.totalorder %v1653, 0
        %v1655 = vsub.s32 0, %v1653
        %v1656 = vsel %vm1654, %v1655, %v1653
        %v1657 = vclz %v1656
        %v1658 = vsub.s32 %v1657, 2
        %vm1659 = vcmp.gt.s32.totalorder 0, %v1658
        %v1660 = vsel %vm1659, 0, %v1658
        %v1661 = vsub.s32 32, %v1660
        %v1662 = vshll.u32 %v1653, %v1660
        %v1663 = vshrl.u32 %v1645, %v1661
        %v1664 = vor.u32 %v1662, %v1663
        %v1665 = vsub.s32 4294967266, %v1660
        %v1666 = vadd.s32 %v1665, 127
        %v1667 = vshll.u32 %v1666, 23
        %v1668 = vor.u32 4788187, %v1667
        %v1669 = vand.u32 2147483647, %v1668
        %v1671 = vcvt.s32.f32 %v1664
        %v1672 = vmul.f32 %v1671, %v1669
        %v1673 = vxor.u32 %v1672, 2147483648
        %v1674 = vsel %vm1553, %v1673, %v1672
        %v1675 = vsub.s32 4, %v1651
        %v1676 = vsel %vm1553, %v1675, %v1651
        %v1677 = vsel %vm1552, %v288, %v1674
        %v1678 = vsel %vm1552, 0, %v1676
        %v1679 = vmul.f32 %v1677, %v1677
        %v1680 = vmul.f32 %v1679, -0.001358992
        %v1681 = vadd.f32 %v1680, 0.041655596
        %v1682 = vmul.f32 %v1679, %v1681
        %v1683 = vadd.f32 %v1682, -0.4999988
        %v1684 = vmul.f32 %v1679, %v1683
        %v1685 = vadd.f32 1.0, %v1684
        %v1686 = vmul.f32 %v1677, %v1677
        %v1687 = vmul.f32 %v1686, -0.00019511016
        %v1688 = vadd.f32 %v1687, 0.008332121
        %v1689 = vmul.f32 %v1686, %v1688
        %v1690 = vadd.f32 %v1689, -0.16666654
        %v1691 = vmul.f32 %v1686, %v1690
        %v1692 = vadd.f32 %v1691, 1.0
        %v1693 = vmul.f32 %v1692, %v1677
        %vm1694 = vweird.f32 %v288
        %v1695 = vadd.s32 %v1678, 3
        %v1696 = vand.u32 %v1695, 3
        %vm1697 = vcmp.lt.s32.totalorder %v1696, 2
        %vm1698 = vcmp.eq.s32.totalorder %v1696, 0
        %v1699 = vxor.u32 %v1693, 2147483648
        %v1700 = vsel %vm1698, %v1685, %v1699
        %vm1701 = vcmp.eq.s32.totalorder %v1696, 2
        %v1702 = vxor.u32 %v1685, 2147483648
        %v1703 = vsel %vm1701, %v1702, %v1693
        %v1704 = vsel %vm1697, %v1700, %v1703
        %v1705 = vsel %vm1694, nan, %v1704
        %v1706 = vand.u32 2147483647, %v291
        %vm1707 = vcmp.le.f32.partialorder %v1706, 0.7853982
        %vm1708 = vcmp.lt.s32.totalorder %v291, 0
        %v1709 = vand.u32 %v291, 2139095040
        %v1710 = vshrl.u32 %v1709, 23
        %v1711 = vsub.s32 %v1710, 127
        %v1712 = vand.u32 2147483647, %v291
        %v1713 = vand.u32 %v1712, 8388607
        %v1714 = vor.u32 %v1713, 8388608
        %v1715 = vsub.s32 0, %v1714
        %v1716 = vadd.s32 %v1711, 1
        %vm1717 = vcmp.gt.s32.totalorder %v1716, 0
        %v1718 = vsel %vm1717, %v1716, 0
        %v1719 = vshrl.u32 %v1718, 5
        %v1720 = vand.u32 %v1718, 31
        %v1721 = vsub.s32 32, %v1720
        %v1722 = vshrl.u32 683565275, %v1721
        %v1723 = vshll.u32 683565275, %v1720
        %v1724 = vshrl.u32 2475754826, %v1721
        %v1725 = vor.u32 %v1723, %v1724
        %v1726 = vshll.u32 2475754826, %v1720
        %v1727 = vshrl.u32 2131351028, %v1721
        %v1728 = vor.u32 %v1726, %v1727
        %v1729 = vshll.u32 2131351028, %v1720
        %v1730 = vshrl.u32 2102212464, %v1721
        %v1731 = vor.u32 %v1729, %v1730
        %v1732 = vshll.u32 2102212464, %v1720
        %v1733 = vshrl.u32 920167782, %v1721
        %v1734 = vor.u32 %v1732, %v1733
        %v1735 = vshll.u32 920167782, %v1720
        %v1736 = vshrl.u32 1326507024, %v1721
        %v1737 = vor.u32 %v1735, %v1736
        %vm1738 = vcmp.lt.s32.totalorder %v1719, 1
        %vm1739 = vcmp.lt.s32.totalorder %v1719, 2
        %vm1740 = vcmp.lt.s32.totalorder %v1719, 3
        %vm1741 = vcmp.lt.s32.totalorder %v1719, 4
        %v1742 = vsel %vm1738, %v1722, %v1725
        %v1743 = vsel %vm1741, %v1731, 2102212464
        %v1744 = vsel %vm1740, %v1728, %v1743
        %v1745 = vsel %vm1739, %v1742, %v1744
        %v1746 = vsel %vm1738, %v1725, %v1728
        %v1747 = vsel %vm1741, %v1734, 920167782
        %v1748 = vsel %vm1740, %v1731, %v1747
        %v1749 = vsel %vm1739, %v1746, %v1748
        %v1750 = vsel %vm1738, %v1728, %v1731
        %v1751 = vsel %vm1741, %v1737, 1326507024
        %v1752 = vsel %vm1740, %v1734, %v1751
        %v1753 = vsel %vm1739, %v1750, %v1752
        %v1754 = vshll.u32 %v1714, 8
        %v1755 = vand.u32 %v1754, 65535
        %v1756 = vshrl.u32 %v1754, 16
        %v1757 = vand.u32 %v1753, 65535
        %v1758 = vshrl.u32 %v1753, 16
        %v1759 = vmul.u32 %v1755, %v1757
        %v1760 = vmul.u32 %v1755, %v1758
        %v1761 = vmul.u32 %v1756, %v1757
        %v1762 = vmul.u32 %v1756, %v1758
        %v1763 = vshll.u32 %v1760, 16
        %v1764 = vshrl.u32 %v1760, 16
        %v1765 = vshll.u32 %v1761, 16
        %v1766 = vshrl.u32 %v1761, 16
        %vm1767 = vc.u32 %v1759, %v1763
        %v1768 = vsel %vm1767, 1, 0
        %v1769 = vadd.s32 %v1759, %v1763
        %v1770 = vadd.s32 %v1762, %v1768
        %vm1771 = vc.u32 %v1769, %v1765
        %v1772 = vsel %vm1771, 1, 0
        %v1773 = vadd.s32 %v1769, %v1765
        %v1774 = vadd.s32 %v1770, %v1772
        %v1775 = vadd.s32 %v1774, %v1764
        %v1776 = vadd.s32 %v1775, %v1766
        %v1777 = vand.u32 %v1754, 65535
        %v1778 = vshrl.u32 %v1754, 16
        %v1779 = vand.u32 %v1749, 65535
        %v1780 = vshrl.u32 %v1749, 16
        %v1781 = vmul.u32 %v1777, %v1779
        %v1782 = vmul.u32 %v1777, %v1780
        %v1783 = vmul.u32 %v1778, %v1779
        %v1784 = vmul.u32 %v1778, %v1780
        %v1785 = vshll.u32 %v1782, 16
        %v1786 = vshrl.u32 %v1782, 16
        %v1787 = vshll.u32 %v1783, 16
        %v1788 = vshrl.u32 %v1783, 16
        %vm1789 = vc.u32 %v1781, %v1785
        %v1790 = vsel %vm1789, 1, 0
        %v1791 = vadd.s32 %v1781, %v1785
        %v1792 = vadd.s32 %v1784, %v1790
        %vm1793 = vc.u32 %v1791, %v1787
        %v1794 = vsel %vm1793, 1, 0
        %v1795 = vadd.s32 %v1791, %v1787
        %v1796 = vadd.s32 %v1792, %v1794
        %v1797 = vadd.s32 %v1796, %v1786
        %v1798 = vadd.s32 %v1797, %v1788
        %v1799 = vmul.u32 %v1754, %v1745
        %v1800 = vadd.s32 %v1776, %v1795
        %vm1801 = vc.u32 %v1776, %v1795
        %v1802 = vadd.s32 %v1798, 1
        %v1803 = vsel %vm1801, %v1802, %v1798
        %v1804 = vadd.s32 %v1799, %v1803
        %v1805 = vadd.s32 %v1804, 536870912
        %v1806 = vshrl.u32 %v1805, 30
        %v1807 = vshll.u32 %v1806, 30
        %v1808 = vsub.s32 %v1804, %v1807
        %vm1809 = vcmp.lt.s32.totalorder %v1808, 0
        %v1810 = vsub.s32 0, %v1808
        %v1811 = vsel %vm1809, %v1810, %v1808
        %v1812 = vclz %v1811
        %v1813 = vsub.s32 %v1812, 2
        %vm1814 = vcmp.gt.s32.totalorder 0, %v1813
        %v1815 = vsel %vm1814, 0, %v1813
        %v1816 = vsub.s32 32, %v1815
        %v1817 = vshll.u32 %v1808, %v1815
        %v1818 = vshrl.u32 %v1800, %v1816
        %v1819 = vor.u32 %v1817, %v1818
        %v1820 = vsub.s32 4294967266, %v1815
        %v1821 = vadd.s32 %v1820, 127
        %v1822 = vshll.u32 %v1821, 23
        %v1823 = vor.u32 4788187, %v1822
        %v1824 = vand.u32 2147483647, %v1823
        %v1826 = vcvt.s32.f32 %v1819
        %v1827 = vmul.f32 %v1826, %v1824
        %v1828 = vxor.u32 %v1827, 2147483648
        %v1829 = vsel %vm1708, %v1828, %v1827
        %v1830 = vsub.s32 4, %v1806
        %v1831 = vsel %vm1708, %v1830, %v1806
        %v1832 = vsel %vm1707, %v291, %v1829
        %v1833 = vsel %vm1707, 0, %v1831
        %v1834 = vmul.f32 %v1832, %v1832
        %v1835 = vmul.f32 %v1834, -0.001358992
        %v1836 = vadd.f32 %v1835, 0.041655596
        %v1837 = vmul.f32 %v1834, %v1836
        %v1838 = vadd.f32 %v1837, -0.4999988
        %v1839 = vmul.f32 %v1834, %v1838
        %v1840 = vadd.f32 1.0, %v1839
        %v1841 = vmul.f32 %v1832, %v1832
        %v1842 = vmul.f32 %v1841, -0.00019511016
        %v1843 = vadd.f32 %v1842, 0.008332121
        %v1844 = vmul.f32 %v1841, %v1843
        %v1845 = vadd.f32 %v1844, -0.16666654
        %v1846 = vmul.f32 %v1841, %v1845
        %v1847 = vadd.f32 %v1846, 1.0
        %v1848 = vmul.f32 %v1847, %v1832
        %vm1849 = vweird.f32 %v291
        %v1850 = vadd.s32 %v1833, 3
        %v1851 = vand.u32 %v1850, 3
        %vm1852 = vcmp.lt.s32.totalorder %v1851, 2
        %vm1853 = vcmp.eq.s32.totalorder %v1851, 0
        %v1854 = vxor.u32 %v1848, 2147483648
        %v1855 = vsel %vm1853, %v1840, %v1854
        %vm1856 = vcmp.eq.s32.totalorder %v1851, 2
        %v1857 = vxor.u32 %v1840, 2147483648
        %v1858 = vsel %vm1856, %v1857, %v1848
        %v1859 = vsel %vm1852, %v1855, %v1858
        %v1860 = vsel %vm1849, nan, %v1859
        %v1861 = vand.u32 2147483647, %v294
        %vm1862 = vcmp.le.f32.partialorder %v1861, 0.7853982
        %vm1863 = vcmp.lt.s32.totalorder %v294, 0
        %v1864 = vand.u32 %v294, 2139095040
        %v1865 = vshrl.u32 %v1864, 23
        %v1866 = vsub.s32 %v1865, 127
        %v1867 = vand.u32 2147483647, %v294
        %v1868 = vand.u32 %v1867, 8388607
        %v1869 = vor.u32 %v1868, 8388608
        %v1870 = vsub.s32 0, %v1869
        %v1871 = vadd.s32 %v1866, 1
        %vm1872 = vcmp.gt.s32.totalorder %v1871, 0
        %v1873 = vsel %vm1872, %v1871, 0
        %v1874 = vshrl.u32 %v1873, 5
        %v1875 = vand.u32 %v1873, 31
        %v1876 = vsub.s32 32, %v1875
        %v1877 = vshrl.u32 683565275, %v1876
        %v1878 = vshll.u32 683565275, %v1875
        %v1879 = vshrl.u32 2475754826, %v1876
        %v1880 = vor.u32 %v1878, %v1879
        %v1881 = vshll.u32 2475754826, %v1875
        %v1882 = vshrl.u32 2131351028, %v1876
        %v1883 = vor.u32 %v1881, %v1882
        %v1884 = vshll.u32 2131351028, %v1875
        %v1885 = vshrl.u32 2102212464, %v1876
        %v1886 = vor.u32 %v1884, %v1885
        %v1887 = vshll.u32 2102212464, %v1875
        %v1888 = vshrl.u32 920167782, %v1876
        %v1889 = vor.u32 %v1887, %v1888
        %v1890 = vshll.u32 920167782, %v1875
        %v1891 = vshrl.u32 1326507024, %v1876
        %v1892 = vor.u32 %v1890, %v1891
        %vm1893 = vcmp.lt.s32.totalorder %v1874, 1
        %vm1894 = vcmp.lt.s32.totalorder %v1874, 2
        %vm1895 = vcmp.lt.s32.totalorder %v1874, 3
        %vm1896 = vcmp.lt.s32.totalorder %v1874, 4
        %v1897 = vsel %vm1893, %v1877, %v1880
        %v1898 = vsel %vm1896, %v1886, 2102212464
        %v1899 = vsel %vm1895, %v1883, %v1898
        %v1900 = vsel %vm1894, %v1897, %v1899
        %v1901 = vsel %vm1893, %v1880, %v1883
        %v1902 = vsel %vm1896, %v1889, 920167782
        %v1903 = vsel %vm1895, %v1886, %v1902
        %v1904 = vsel %vm1894, %v1901, %v1903
        %v1905 = vsel %vm1893, %v1883, %v1886
        %v1906 = vsel %vm1896, %v1892, 1326507024
        %v1907 = vsel %vm1895, %v1889, %v1906
        %v1908 = vsel %vm1894, %v1905, %v1907
        %v1909 = vshll.u32 %v1869, 8
        %v1910 = vand.u32 %v1909, 65535
        %v1911 = vshrl.u32 %v1909, 16
        %v1912 = vand.u32 %v1908, 65535
        %v1913 = vshrl.u32 %v1908, 16
        %v1914 = vmul.u32 %v1910, %v1912
        %v1915 = vmul.u32 %v1910, %v1913
        %v1916 = vmul.u32 %v1911, %v1912
        %v1917 = vmul.u32 %v1911, %v1913
        %v1918 = vshll.u32 %v1915, 16
        %v1919 = vshrl.u32 %v1915, 16
        %v1920 = vshll.u32 %v1916, 16
        %v1921 = vshrl.u32 %v1916, 16
        %vm1922 = vc.u32 %v1914, %v1918
        %v1923 = vsel %vm1922, 1, 0
        %v1924 = vadd.s32 %v1914, %v1918
        %v1925 = vadd.s32 %v1917, %v1923
        %vm1926 = vc.u32 %v1924, %v1920
        %v1927 = vsel %vm1926, 1, 0
        %v1928 = vadd.s32 %v1924, %v1920
        %v1929 = vadd.s32 %v1925, %v1927
        %v1930 = vadd.s32 %v1929, %v1919
        %v1931 = vadd.s32 %v1930, %v1921
        %v1932 = vand.u32 %v1909, 65535
        %v1933 = vshrl.u32 %v1909, 16
        %v1934 = vand.u32 %v1904, 65535
        %v1935 = vshrl.u32 %v1904, 16
        %v1936 = vmul.u32 %v1932, %v1934
        %v1937 = vmul.u32 %v1932, %v1935
        %v1938 = vmul.u32 %v1933, %v1934
        %v1939 = vmul.u32 %v1933, %v1935
        %v1940 = vshll.u32 %v1937, 16
        %v1941 = vshrl.u32 %v1937, 16
        %v1942 = vshll.u32 %v1938, 16
        %v1943 = vshrl.u32 %v1938, 16
        %vm1944 = vc.u32 %v1936, %v1940
        %v1945 = vsel %vm1944, 1, 0
        %v1946 = vadd.s32 %v1936, %v1940
        %v1947 = vadd.s32 %v1939, %v1945
        %vm1948 = vc.u32 %v1946, %v1942
        %v1949 = vsel %vm1948, 1, 0
        %v1950 = vadd.s32 %v1946, %v1942
        %v1951 = vadd.s32 %v1947, %v1949
        %v1952 = vadd.s32 %v1951, %v1941
        %v1953 = vadd.s32 %v1952, %v1943
        %v1954 = vmul.u32 %v1909, %v1900
        %v1955 = vadd.s32 %v1931, %v1950
        %vm1956 = vc.u32 %v1931, %v1950
        %v1957 = vadd.s32 %v1953, 1
        %v1958 = vsel %vm1956, %v1957, %v1953
        %v1959 = vadd.s32 %v1954, %v1958
        %v1960 = vadd.s32 %v1959, 536870912
        %v1961 = vshrl.u32 %v1960, 30
        %v1962 = vshll.u32 %v1961, 30
        %v1963 = vsub.s32 %v1959, %v1962
        %vm1964 = vcmp.lt.s32.totalorder %v1963, 0
        %v1965 = vsub.s32 0, %v1963
        %v1966 = vsel %vm1964, %v1965, %v1963
        %v1967 = vclz %v1966
        %v1968 = vsub.s32 %v1967, 2
        %vm1969 = vcmp.gt.s32.totalorder 0, %v1968
        %v1970 = vsel %vm1969, 0, %v1968
        %v1971 = vsub.s32 32, %v1970
        %v1972 = vshll.u32 %v1963, %v1970
        %v1973 = vshrl.u32 %v1955, %v1971
        %v1974 = vor.u32 %v1972, %v1973
        %v1975 = vsub.s32 4294967266, %v1970
        %v1976 = vadd.s32 %v1975, 127
        %v1977 = vshll.u32 %v1976, 23
        %v1978 = vor.u32 4788187, %v1977
        %v1979 = vand.u32 2147483647, %v1978
        %v1981 = vcvt.s32.f32 %v1974
        %v1982 = vmul.f32 %v1981, %v1979
        %v1983 = vxor.u32 %v1982, 2147483648
        %v1984 = vsel %vm1863, %v1983, %v1982
        %v1985 = vsub.s32 4, %v1961
        %v1986 = vsel %vm1863, %v1985, %v1961
        %v1987 = vsel %vm1862, %v294, %v1984
        %v1988 = vsel %vm1862, 0, %v1986
        %v1989 = vmul.f32 %v1987, %v1987
        %v1990 = vmul.f32 %v1989, -0.001358992
        %v1991 = vadd.f32 %v1990, 0.041655596
        %v1992 = vmul.f32 %v1989, %v1991
        %v1993 = vadd.f32 %v1992, -0.4999988
        %v1994 = vmul.f32 %v1989, %v1993
        %v1995 = vadd.f32 1.0, %v1994
        %v1996 = vmul.f32 %v1987, %v1987
        %v1997 = vmul.f32 %v1996, -0.00019511016
        %v1998 = vadd.f32 %v1997, 0.008332121
        %v1999 = vmul.f32 %v1996, %v1998
        %v2000 = vadd.f32 %v1999, -0.16666654
        %v2001 = vmul.f32 %v1996, %v2000
        %v2002 = vadd.f32 %v2001, 1.0
        %v2003 = vmul.f32 %v2002, %v1987
        %vm2004 = vweird.f32 %v294
        %v2005 = vadd.s32 %v1988, 3
        %v2006 = vand.u32 %v2005, 3
        %vm2007 = vcmp.lt.s32.totalorder %v2006, 2
        %vm2008 = vcmp.eq.s32.totalorder %v2006, 0
        %v2009 = vxor.u32 %v2003, 2147483648
        %v2010 = vsel %vm2008, %v1995, %v2009
        %vm2011 = vcmp.eq.s32.totalorder %v2006, 2
        %v2012 = vxor.u32 %v1995, 2147483648
        %v2013 = vsel %vm2011, %v2012, %v2003
        %v2014 = vsel %vm2007, %v2010, %v2013
        %v2015 = vsel %vm2004, nan, %v2014
        %v2016 = vand.u32 2147483647, %v297
        %vm2017 = vcmp.le.f32.partialorder %v2016, 0.7853982
        %vm2018 = vcmp.lt.s32.totalorder %v297, 0
        %v2019 = vand.u32 %v297, 2139095040
        %v2020 = vshrl.u32 %v2019, 23
        %v2021 = vsub.s32 %v2020, 127
        %v2022 = vand.u32 2147483647, %v297
        %v2023 = vand.u32 %v2022, 8388607
        %v2024 = vor.u32 %v2023, 8388608
        %v2025 = vsub.s32 0, %v2024
        %v2026 = vadd.s32 %v2021, 1
        %vm2027 = vcmp.gt.s32.totalorder %v2026, 0
        %v2028 = vsel %vm2027, %v2026, 0
        %v2029 = vshrl.u32 %v2028, 5
        %v2030 = vand.u32 %v2028, 31
        %v2031 = vsub.s32 32, %v2030
        %v2032 = vshrl.u32 683565275, %v2031
        %v2033 = vshll.u32 683565275, %v2030
        %v2034 = vshrl.u32 2475754826, %v2031
        %v2035 = vor.u32 %v2033, %v2034
        %v2036 = vshll.u32 2475754826, %v2030
        %v2037 = vshrl.u32 2131351028, %v2031
        %v2038 = vor.u32 %v2036, %v2037
        %v2039 = vshll.u32 2131351028, %v2030
        %v2040 = vshrl.u32 2102212464, %v2031
        %v2041 = vor.u32 %v2039, %v2040
        %v2042 = vshll.u32 2102212464, %v2030
        %v2043 = vshrl.u32 920167782, %v2031
        %v2044 = vor.u32 %v2042, %v2043
        %v2045 = vshll.u32 920167782, %v2030
        %v2046 = vshrl.u32 1326507024, %v2031
        %v2047 = vor.u32 %v2045, %v2046
        %vm2048 = vcmp.lt.s32.totalorder %v2029, 1
        %vm2049 = vcmp.lt.s32.totalorder %v2029, 2
        %vm2050 = vcmp.lt.s32.totalorder %v2029, 3
        %vm2051 = vcmp.lt.s32.totalorder %v2029, 4
        %v2052 = vsel %vm2048, %v2032, %v2035
        %v2053 = vsel %vm2051, %v2041, 2102212464
        %v2054 = vsel %vm2050, %v2038, %v2053
        %v2055 = vsel %vm2049, %v2052, %v2054
        %v2056 = vsel %vm2048, %v2035, %v2038
        %v2057 = vsel %vm2051, %v2044, 920167782
        %v2058 = vsel %vm2050, %v2041, %v2057
        %v2059 = vsel %vm2049, %v2056, %v2058
        %v2060 = vsel %vm2048, %v2038, %v2041
        %v2061 = vsel %vm2051, %v2047, 1326507024
        %v2062 = vsel %vm2050, %v2044, %v2061
        %v2063 = vsel %vm2049, %v2060, %v2062
        %v2064 = vshll.u32 %v2024, 8
        %v2065 = vand.u32 %v2064, 65535
        %v2066 = vshrl.u32 %v2064, 16
        %v2067 = vand.u32 %v2063, 65535
        %v2068 = vshrl.u32 %v2063, 16
        %v2069 = vmul.u32 %v2065, %v2067
        %v2070 = vmul.u32 %v2065, %v2068
        %v2071 = vmul.u32 %v2066, %v2067
        %v2072 = vmul.u32 %v2066, %v2068
        %v2073 = vshll.u32 %v2070, 16
        %v2074 = vshrl.u32 %v2070, 16
        %v2075 = vshll.u32 %v2071, 16
        %v2076 = vshrl.u32 %v2071, 16
        %vm2077 = vc.u32 %v2069, %v2073
        %v2078 = vsel %vm2077, 1, 0
        %v2079 = vadd.s32 %v2069, %v2073
        %v2080 = vadd.s32 %v2072, %v2078
        %vm2081 = vc.u32 %v2079, %v2075
        %v2082 = vsel %vm2081, 1, 0
        %v2083 = vadd.s32 %v2079, %v2075
        %v2084 = vadd.s32 %v2080, %v2082
        %v2085 = vadd.s32 %v2084, %v2074
        %v2086 = vadd.s32 %v2085, %v2076
        %v2087 = vand.u32 %v2064, 65535
        %v2088 = vshrl.u32 %v2064, 16
        %v2089 = vand.u32 %v2059, 65535
        %v2090 = vshrl.u32 %v2059, 16
        %v2091 = vmul.u32 %v2087, %v2089
        %v2092 = vmul.u32 %v2087, %v2090
        %v2093 = vmul.u32 %v2088, %v2089
        %v2094 = vmul.u32 %v2088, %v2090
        %v2095 = vshll.u32 %v2092, 16
        %v2096 = vshrl.u32 %v2092, 16
        %v2097 = vshll.u32 %v2093, 16
        %v2098 = vshrl.u32 %v2093, 16
        %vm2099 = vc.u32 %v2091, %v2095
        %v2100 = vsel %vm2099, 1, 0
        %v2101 = vadd.s32 %v2091, %v2095
        %v2102 = vadd.s32 %v2094, %v2100
        %vm2103 = vc.u32 %v2101, %v2097
        %v2104 = vsel %vm2103, 1, 0
        %v2105 = vadd.s32 %v2101, %v2097
        %v2106 = vadd.s32 %v2102, %v2104
        %v2107 = vadd.s32 %v2106, %v2096
        %v2108 = vadd.s32 %v2107, %v2098
        %v2109 = vmul.u32 %v2064, %v2055
        %v2110 = vadd.s32 %v2086, %v2105
        %vm2111 = vc.u32 %v2086, %v2105
        %v2112 = vadd.s32 %v2108, 1
        %v2113 = vsel %vm2111, %v2112, %v2108
        %v2114 = vadd.s32 %v2109, %v2113
        %v2115 = vadd.s32 %v2114, 536870912
        %v2116 = vshrl.u32 %v2115, 30
        %v2117 = vshll.u32 %v2116, 30
        %v2118 = vsub.s32 %v2114, %v2117
        %vm2119 = vcmp.lt.s32.totalorder %v2118, 0
        %v2120 = vsub.s32 0, %v2118
        %v2121 = vsel %vm2119, %v2120, %v2118
        %v2122 = vclz %v2121
        %v2123 = vsub.s32 %v2122, 2
        %vm2124 = vcmp.gt.s32.totalorder 0, %v2123
        %v2125 = vsel %vm2124, 0, %v2123
        %v2126 = vsub.s32 32, %v2125
        %v2127 = vshll.u32 %v2118, %v2125
        %v2128 = vshrl.u32 %v2110, %v2126
        %v2129 = vor.u32 %v2127, %v2128
        %v2130 = vsub.s32 4294967266, %v2125
        %v2131 = vadd.s32 %v2130, 127
        %v2132 = vshll.u32 %v2131, 23
        %v2133 = vor.u32 4788187, %v2132
        %v2134 = vand.u32 2147483647, %v2133
        %v2136 = vcvt.s32.f32 %v2129
        %v2137 = vmul.f32 %v2136, %v2134
        %v2138 = vxor.u32 %v2137, 2147483648
        %v2139 = vsel %vm2018, %v2138, %v2137
        %v2140 = vsub.s32 4, %v2116
        %v2141 = vsel %vm2018, %v2140, %v2116
        %v2142 = vsel %vm2017, %v297, %v2139
        %v2143 = vsel %vm2017, 0, %v2141
        %v2144 = vmul.f32 %v2142, %v2142
        %v2145 = vmul.f32 %v2144, -0.001358992
        %v2146 = vadd.f32 %v2145, 0.041655596
        %v2147 = vmul.f32 %v2144, %v2146
        %v2148 = vadd.f32 %v2147, -0.4999988
        %v2149 = vmul.f32 %v2144, %v2148
        %v2150 = vadd.f32 1.0, %v2149
        %v2151 = vmul.f32 %v2142, %v2142
        %v2152 = vmul.f32 %v2151, -0.00019511016
        %v2153 = vadd.f32 %v2152, 0.008332121
        %v2154 = vmul.f32 %v2151, %v2153
        %v2155 = vadd.f32 %v2154, -0.16666654
        %v2156 = vmul.f32 %v2151, %v2155
        %v2157 = vadd.f32 %v2156, 1.0
        %v2158 = vmul.f32 %v2157, %v2142
        %vm2159 = vweird.f32 %v297
        %v2160 = vadd.s32 %v2143, 3
        %v2161 = vand.u32 %v2160, 3
        %vm2162 = vcmp.lt.s32.totalorder %v2161, 2
        %vm2163 = vcmp.eq.s32.totalorder %v2161, 0
        %v2164 = vxor.u32 %v2158, 2147483648
        %v2165 = vsel %vm2163, %v2150, %v2164
        %vm2166 = vcmp.eq.s32.totalorder %v2161, 2
        %v2167 = vxor.u32 %v2150, 2147483648
        %v2168 = vsel %vm2166, %v2167, %v2158
        %v2169 = vsel %vm2162, %v2165, %v2168
        %v2170 = vsel %vm2159, nan, %v2169
        %v2171 = vand.u32 2147483647, %v300
        %vm2172 = vcmp.le.f32.partialorder %v2171, 0.7853982
        %vm2173 = vcmp.lt.s32.totalorder %v300, 0
        %v2174 = vand.u32 %v300, 2139095040
        %v2175 = vshrl.u32 %v2174, 23
        %v2176 = vsub.s32 %v2175, 127
        %v2177 = vand.u32 2147483647, %v300
        %v2178 = vand.u32 %v2177, 8388607
        %v2179 = vor.u32 %v2178, 8388608
        %v2180 = vsub.s32 0, %v2179
        %v2181 = vadd.s32 %v2176, 1
        %vm2182 = vcmp.gt.s32.totalorder %v2181, 0
        %v2183 = vsel %vm2182, %v2181, 0
        %v2184 = vshrl.u32 %v2183, 5
        %v2185 = vand.u32 %v2183, 31
        %v2186 = vsub.s32 32, %v2185
        %v2187 = vshrl.u32 683565275, %v2186
        %v2188 = vshll.u32 683565275, %v2185
        %v2189 = vshrl.u32 2475754826, %v2186
        %v2190 = vor.u32 %v2188, %v2189
        %v2191 = vshll.u32 2475754826, %v2185
        %v2192 = vshrl.u32 2131351028, %v2186
        %v2193 = vor.u32 %v2191, %v2192
        %v2194 = vshll.u32 2131351028, %v2185
        %v2195 = vshrl.u32 2102212464, %v2186
        %v2196 = vor.u32 %v2194, %v2195
        %v2197 = vshll.u32 2102212464, %v2185
        %v2198 = vshrl.u32 920167782, %v2186
        %v2199 = vor.u32 %v2197, %v2198
        %v2200 = vshll.u32 920167782, %v2185
        %v2201 = vshrl.u32 1326507024, %v2186
        %v2202 = vor.u32 %v2200, %v2201
        %vm2203 = vcmp.lt.s32.totalorder %v2184, 1
        %vm2204 = vcmp.lt.s32.totalorder %v2184, 2
        %vm2205 = vcmp.lt.s32.totalorder %v2184, 3
        %vm2206 = vcmp.lt.s32.totalorder %v2184, 4
        %v2207 = vsel %vm2203, %v2187, %v2190
        %v2208 = vsel %vm2206, %v2196, 2102212464
        %v2209 = vsel %vm2205, %v2193, %v2208
        %v2210 = vsel %vm2204, %v2207, %v2209
        %v2211 = vsel %vm2203, %v2190, %v2193
        %v2212 = vsel %vm2206, %v2199, 920167782
        %v2213 = vsel %vm2205, %v2196, %v2212
        %v2214 = vsel %vm2204, %v2211, %v2213
        %v2215 = vsel %vm2203, %v2193, %v2196
        %v2216 = vsel %vm2206, %v2202, 1326507024
        %v2217 = vsel %vm2205, %v2199, %v2216
        %v2218 = vsel %vm2204, %v2215, %v2217
        %v2219 = vshll.u32 %v2179, 8
        %v2220 = vand.u32 %v2219, 65535
        %v2221 = vshrl.u32 %v2219, 16
        %v2222 = vand.u32 %v2218, 65535
        %v2223 = vshrl.u32 %v2218, 16
        %v2224 = vmul.u32 %v2220, %v2222
        %v2225 = vmul.u32 %v2220, %v2223
        %v2226 = vmul.u32 %v2221, %v2222
        %v2227 = vmul.u32 %v2221, %v2223
        %v2228 = vshll.u32 %v2225, 16
        %v2229 = vshrl.u32 %v2225, 16
        %v2230 = vshll.u32 %v2226, 16
        %v2231 = vshrl.u32 %v2226, 16
        %vm2232 = vc.u32 %v2224, %v2228
        %v2233 = vsel %vm2232, 1, 0
        %v2234 = vadd.s32 %v2224, %v2228
        %v2235 = vadd.s32 %v2227, %v2233
        %vm2236 = vc.u32 %v2234, %v2230
        %v2237 = vsel %vm2236, 1, 0
        %v2238 = vadd.s32 %v2234, %v2230
        %v2239 = vadd.s32 %v2235, %v2237
        %v2240 = vadd.s32 %v2239, %v2229
        %v2241 = vadd.s32 %v2240, %v2231
        %v2242 = vand.u32 %v2219, 65535
        %v2243 = vshrl.u32 %v2219, 16
        %v2244 = vand.u32 %v2214, 65535
        %v2245 = vshrl.u32 %v2214, 16
        %v2246 = vmul.u32 %v2242, %v2244
        %v2247 = vmul.u32 %v2242, %v2245
        %v2248 = vmul.u32 %v2243, %v2244
        %v2249 = vmul.u32 %v2243, %v2245
        %v2250 = vshll.u32 %v2247, 16
        %v2251 = vshrl.u32 %v2247, 16
        %v2252 = vshll.u32 %v2248, 16
        %v2253 = vshrl.u32 %v2248, 16
        %vm2254 = vc.u32 %v2246, %v2250
        %v2255 = vsel %vm2254, 1, 0
        %v2256 = vadd.s32 %v2246, %v2250
        %v2257 = vadd.s32 %v2249, %v2255
        %vm2258 = vc.u32 %v2256, %v2252
        %v2259 = vsel %vm2258, 1, 0
        %v2260 = vadd.s32 %v2256, %v2252
        %v2261 = vadd.s32 %v2257, %v2259
        %v2262 = vadd.s32 %v2261, %v2251
        %v2263 = vadd.s32 %v2262, %v2253
        %v2264 = vmul.u32 %v2219, %v2210
        %v2265 = vadd.s32 %v2241, %v2260
        %vm2266 = vc.u32 %v2241, %v2260
        %v2267 = vadd.s32 %v2263, 1
        %v2268 = vsel %vm2266, %v2267, %v2263
        %v2269 = vadd.s32 %v2264, %v2268
        %v2270 = vadd.s32 %v2269, 536870912
        %v2271 = vshrl.u32 %v2270, 30
        %v2272 = vshll.u32 %v2271, 30
        %v2273 = vsub.s32 %v2269, %v2272
        %vm2274 = vcmp.lt.s32.totalorder %v2273, 0
        %v2275 = vsub.s32 0, %v2273
        %v2276 = vsel %vm2274, %v2275, %v2273
        %v2277 = vclz %v2276
        %v2278 = vsub.s32 %v2277, 2
        %vm2279 = vcmp.gt.s32.totalorder 0, %v2278
        %v2280 = vsel %vm2279, 0, %v2278
        %v2281 = vsub.s32 32, %v2280
        %v2282 = vshll.u32 %v2273, %v2280
        %v2283 = vshrl.u32 %v2265, %v2281
        %v2284 = vor.u32 %v2282, %v2283
        %v2285 = vsub.s32 4294967266, %v2280
        %v2286 = vadd.s32 %v2285, 127
        %v2287 = vshll.u32 %v2286, 23
        %v2288 = vor.u32 4788187, %v2287
        %v2289 = vand.u32 2147483647, %v2288
        %v2291 = vcvt.s32.f32 %v2284
        %v2292 = vmul.f32 %v2291, %v2289
        %v2293 = vxor.u32 %v2292, 2147483648
        %v2294 = vsel %vm2173, %v2293, %v2292
        %v2295 = vsub.s32 4, %v2271
        %v2296 = vsel %vm2173, %v2295, %v2271
        %v2297 = vsel %vm2172, %v300, %v2294
        %v2298 = vsel %vm2172, 0, %v2296
        %v2299 = vmul.f32 %v2297, %v2297
        %v2300 = vmul.f32 %v2299, -0.001358992
        %v2301 = vadd.f32 %v2300, 0.041655596
        %v2302 = vmul.f32 %v2299, %v2301
        %v2303 = vadd.f32 %v2302, -0.4999988
        %v2304 = vmul.f32 %v2299, %v2303
        %v2305 = vadd.f32 1.0, %v2304
        %v2306 = vmul.f32 %v2297, %v2297
        %v2307 = vmul.f32 %v2306, -0.00019511016
        %v2308 = vadd.f32 %v2307, 0.008332121
        %v2309 = vmul.f32 %v2306, %v2308
        %v2310 = vadd.f32 %v2309, -0.16666654
        %v2311 = vmul.f32 %v2306, %v2310
        %v2312 = vadd.f32 %v2311, 1.0
        %v2313 = vmul.f32 %v2312, %v2297
        %vm2314 = vweird.f32 %v300
        %v2315 = vadd.s32 %v2298, 3
        %v2316 = vand.u32 %v2315, 3
        %vm2317 = vcmp.lt.s32.totalorder %v2316, 2
        %vm2318 = vcmp.eq.s32.totalorder %v2316, 0
        %v2319 = vxor.u32 %v2313, 2147483648
        %v2320 = vsel %vm2318, %v2305, %v2319
        %vm2321 = vcmp.eq.s32.totalorder %v2316, 2
        %v2322 = vxor.u32 %v2305, 2147483648
        %v2323 = vsel %vm2321, %v2322, %v2313
        %v2324 = vsel %vm2317, %v2320, %v2323
        %v2325 = vsel %vm2314, nan, %v2324
        %v2326 = vand.u32 2147483647, %v303
        %vm2327 = vcmp.le.f32.partialorder %v2326, 0.7853982
        %vm2328 = vcmp.lt.s32.totalorder %v303, 0
        %v2329 = vand.u32 %v303, 2139095040
        %v2330 = vshrl.u32 %v2329, 23
        %v2331 = vsub.s32 %v2330, 127
        %v2332 = vand.u32 2147483647, %v303
        %v2333 = vand.u32 %v2332, 8388607
        %v2334 = vor.u32 %v2333, 8388608
        %v2335 = vsub.s32 0, %v2334
        %v2336 = vadd.s32 %v2331, 1
        %vm2337 = vcmp.gt.s32.totalorder %v2336, 0
        %v2338 = vsel %vm2337, %v2336, 0
        %v2339 = vshrl.u32 %v2338, 5
        %v2340 = vand.u32 %v2338, 31
        %v2341 = vsub.s32 32, %v2340
        %v2342 = vshrl.u32 683565275, %v2341
        %v2343 = vshll.u32 683565275, %v2340
        %v2344 = vshrl.u32 2475754826, %v2341
        %v2345 = vor.u32 %v2343, %v2344
        %v2346 = vshll.u32 2475754826, %v2340
        %v2347 = vshrl.u32 2131351028, %v2341
        %v2348 = vor.u32 %v2346, %v2347
        %v2349 = vshll.u32 2131351028, %v2340
        %v2350 = vshrl.u32 2102212464, %v2341
        %v2351 = vor.u32 %v2349, %v2350
        %v2352 = vshll.u32 2102212464, %v2340
        %v2353 = vshrl.u32 920167782, %v2341
        %v2354 = vor.u32 %v2352, %v2353
        %v2355 = vshll.u32 920167782, %v2340
        %v2356 = vshrl.u32 1326507024, %v2341
        %v2357 = vor.u32 %v2355, %v2356
        %vm2358 = vcmp.lt.s32.totalorder %v2339, 1
        %vm2359 = vcmp.lt.s32.totalorder %v2339, 2
        %vm2360 = vcmp.lt.s32.totalorder %v2339, 3
        %vm2361 = vcmp.lt.s32.totalorder %v2339, 4
        %v2362 = vsel %vm2358, %v2342, %v2345
        %v2363 = vsel %vm2361, %v2351, 2102212464
        %v2364 = vsel %vm2360, %v2348, %v2363
        %v2365 = vsel %vm2359, %v2362, %v2364
        %v2366 = vsel %vm2358, %v2345, %v2348
        %v2367 = vsel %vm2361, %v2354, 920167782
        %v2368 = vsel %vm2360, %v2351, %v2367
        %v2369 = vsel %vm2359, %v2366, %v2368
        %v2370 = vsel %vm2358, %v2348, %v2351
        %v2371 = vsel %vm2361, %v2357, 1326507024
        %v2372 = vsel %vm2360, %v2354, %v2371
        %v2373 = vsel %vm2359, %v2370, %v2372
        %v2374 = vshll.u32 %v2334, 8
        %v2375 = vand.u32 %v2374, 65535
        %v2376 = vshrl.u32 %v2374, 16
        %v2377 = vand.u32 %v2373, 65535
        %v2378 = vshrl.u32 %v2373, 16
        %v2379 = vmul.u32 %v2375, %v2377
        %v2380 = vmul.u32 %v2375, %v2378
        %v2381 = vmul.u32 %v2376, %v2377
        %v2382 = vmul.u32 %v2376, %v2378
        %v2383 = vshll.u32 %v2380, 16
        %v2384 = vshrl.u32 %v2380, 16
        %v2385 = vshll.u32 %v2381, 16
        %v2386 = vshrl.u32 %v2381, 16
        %vm2387 = vc.u32 %v2379, %v2383
        %v2388 = vsel %vm2387, 1, 0
        %v2389 = vadd.s32 %v2379, %v2383
        %v2390 = vadd.s32 %v2382, %v2388
        %vm2391 = vc.u32 %v2389, %v2385
        %v2392 = vsel %vm2391, 1, 0
        %v2393 = vadd.s32 %v2389, %v2385
        %v2394 = vadd.s32 %v2390, %v2392
        %v2395 = vadd.s32 %v2394, %v2384
        %v2396 = vadd.s32 %v2395, %v2386
        %v2397 = vand.u32 %v2374, 65535
        %v2398 = vshrl.u32 %v2374, 16
        %v2399 = vand.u32 %v2369, 65535
        %v2400 = vshrl.u32 %v2369, 16
        %v2401 = vmul.u32 %v2397, %v2399
        %v2402 = vmul.u32 %v2397, %v2400
        %v2403 = vmul.u32 %v2398, %v2399
        %v2404 = vmul.u32 %v2398, %v2400
        %v2405 = vshll.u32 %v2402, 16
        %v2406 = vshrl.u32 %v2402, 16
        %v2407 = vshll.u32 %v2403, 16
        %v2408 = vshrl.u32 %v2403, 16
        %vm2409 = vc.u32 %v2401, %v2405
        %v2410 = vsel %vm2409, 1, 0
        %v2411 = vadd.s32 %v2401, %v2405
        %v2412 = vadd.s32 %v2404, %v2410
        %vm2413 = vc.u32 %v2411, %v2407
        %v2414 = vsel %vm2413, 1, 0
        %v2415 = vadd.s32 %v2411, %v2407
        %v2416 = vadd.s32 %v2412, %v2414
        %v2417 = vadd.s32 %v2416, %v2406
        %v2418 = vadd.s32 %v2417, %v2408
        %v2419 = vmul.u32 %v2374, %v2365
        %v2420 = vadd.s32 %v2396, %v2415
        %vm2421 = vc.u32 %v2396, %v2415
        %v2422 = vadd.s32 %v2418, 1
        %v2423 = vsel %vm2421, %v2422, %v2418
        %v2424 = vadd.s32 %v2419, %v2423
        %v2425 = vadd.s32 %v2424, 536870912
        %v2426 = vshrl.u32 %v2425, 30
        %v2427 = vshll.u32 %v2426, 30
        %v2428 = vsub.s32 %v2424, %v2427
        %vm2429 = vcmp.lt.s32.totalorder %v2428, 0
        %v2430 = vsub.s32 0, %v2428
        %v2431 = vsel %vm2429, %v2430, %v2428
        %v2432 = vclz %v2431
        %v2433 = vsub.s32 %v2432, 2
        %vm2434 = vcmp.gt.s32.totalorder 0, %v2433
        %v2435 = vsel %vm2434, 0, %v2433
        %v2436 = vsub.s32 32, %v2435
        %v2437 = vshll.u32 %v2428, %v2435
        %v2438 = vshrl.u32 %v2420, %v2436
        %v2439 = vor.u32 %v2437, %v2438
        %v2440 = vsub.s32 4294967266, %v2435
        %v2441 = vadd.s32 %v2440, 127
        %v2442 = vshll.u32 %v2441, 23
        %v2443 = vor.u32 4788187, %v2442
        %v2444 = vand.u32 2147483647, %v2443
        %v2446 = vcvt.s32.f32 %v2439
        %v2447 = vmul.f32 %v2446, %v2444
        %v2448 = vxor.u32 %v2447, 2147483648
        %v2449 = vsel %vm2328, %v2448, %v2447
        %v2450 = vsub.s32 4, %v2426
        %v2451 = vsel %vm2328, %v2450, %v2426
        %v2452 = vsel %vm2327, %v303, %v2449
        %v2453 = vsel %vm2327, 0, %v2451
        %v2454 = vmul.f32 %v2452, %v2452
        %v2455 = vmul.f32 %v2454, -0.001358992
        %v2456 = vadd.f32 %v2455, 0.041655596
        %v2457 = vmul.f32 %v2454, %v2456
        %v2458 = vadd.f32 %v2457, -0.4999988
        %v2459 = vmul.f32 %v2454, %v2458
        %v2460 = vadd.f32 1.0, %v2459
        %v2461 = vmul.f32 %v2452, %v2452
        %v2462 = vmul.f32 %v2461, -0.00019511016
        %v2463 = vadd.f32 %v2462, 0.008332121
        %v2464 = vmul.f32 %v2461, %v2463
        %v2465 = vadd.f32 %v2464, -0.16666654
        %v2466 = vmul.f32 %v2461, %v2465
        %v2467 = vadd.f32 %v2466, 1.0
        %v2468 = vmul.f32 %v2467, %v2452
        %vm2469 = vweird.f32 %v303
        %v2470 = vadd.s32 %v2453, 3
        %v2471 = vand.u32 %v2470, 3
        %vm2472 = vcmp.lt.s32.totalorder %v2471, 2
        %vm2473 = vcmp.eq.s32.totalorder %v2471, 0
        %v2474 = vxor.u32 %v2468, 2147483648
        %v2475 = vsel %vm2473, %v2460, %v2474
        %vm2476 = vcmp.eq.s32.totalorder %v2471, 2
        %v2477 = vxor.u32 %v2460, 2147483648
        %v2478 = vsel %vm2476, %v2477, %v2468
        %v2479 = vsel %vm2472, %v2475, %v2478
        %v2480 = vsel %vm2469, nan, %v2479
        %v2481 = vand.u32 2147483647, %v306
        %vm2482 = vcmp.le.f32.partialorder %v2481, 0.7853982
        %vm2483 = vcmp.lt.s32.totalorder %v306, 0
        %v2484 = vand.u32 %v306, 2139095040
        %v2485 = vshrl.u32 %v2484, 23
        %v2486 = vsub.s32 %v2485, 127
        %v2487 = vand.u32 2147483647, %v306
        %v2488 = vand.u32 %v2487, 8388607
        %v2489 = vor.u32 %v2488, 8388608
        %v2490 = vsub.s32 0, %v2489
        %v2491 = vadd.s32 %v2486, 1
        %vm2492 = vcmp.gt.s32.totalorder %v2491, 0
        %v2493 = vsel %vm2492, %v2491, 0
        %v2494 = vshrl.u32 %v2493, 5
        %v2495 = vand.u32 %v2493, 31
        %v2496 = vsub.s32 32, %v2495
        %v2497 = vshrl.u32 683565275, %v2496
        %v2498 = vshll.u32 683565275, %v2495
        %v2499 = vshrl.u32 2475754826, %v2496
        %v2500 = vor.u32 %v2498, %v2499
        %v2501 = vshll.u32 2475754826, %v2495
        %v2502 = vshrl.u32 2131351028, %v2496
        %v2503 = vor.u32 %v2501, %v2502
        %v2504 = vshll.u32 2131351028, %v2495
        %v2505 = vshrl.u32 2102212464, %v2496
        %v2506 = vor.u32 %v2504, %v2505
        %v2507 = vshll.u32 2102212464, %v2495
        %v2508 = vshrl.u32 920167782, %v2496
        %v2509 = vor.u32 %v2507, %v2508
        %v2510 = vshll.u32 920167782, %v2495
        %v2511 = vshrl.u32 1326507024, %v2496
        %v2512 = vor.u32 %v2510, %v2511
        %vm2513 = vcmp.lt.s32.totalorder %v2494, 1
        %vm2514 = vcmp.lt.s32.totalorder %v2494, 2
        %vm2515 = vcmp.lt.s32.totalorder %v2494, 3
        %vm2516 = vcmp.lt.s32.totalorder %v2494, 4
        %v2517 = vsel %vm2513, %v2497, %v2500
        %v2518 = vsel %vm2516, %v2506, 2102212464
        %v2519 = vsel %vm2515, %v2503, %v2518
        %v2520 = vsel %vm2514, %v2517, %v2519
        %v2521 = vsel %vm2513, %v2500, %v2503
        %v2522 = vsel %vm2516, %v2509, 920167782
        %v2523 = vsel %vm2515, %v2506, %v2522
        %v2524 = vsel %vm2514, %v2521, %v2523
        %v2525 = vsel %vm2513, %v2503, %v2506
        %v2526 = vsel %vm2516, %v2512, 1326507024
        %v2527 = vsel %vm2515, %v2509, %v2526
        %v2528 = vsel %vm2514, %v2525, %v2527
        %v2529 = vshll.u32 %v2489, 8
        %v2530 = vand.u32 %v2529, 65535
        %v2531 = vshrl.u32 %v2529, 16
        %v2532 = vand.u32 %v2528, 65535
        %v2533 = vshrl.u32 %v2528, 16
        %v2534 = vmul.u32 %v2530, %v2532
        %v2535 = vmul.u32 %v2530, %v2533
        %v2536 = vmul.u32 %v2531, %v2532
        %v2537 = vmul.u32 %v2531, %v2533
        %v2538 = vshll.u32 %v2535, 16
        %v2539 = vshrl.u32 %v2535, 16
        %v2540 = vshll.u32 %v2536, 16
        %v2541 = vshrl.u32 %v2536, 16
        %vm2542 = vc.u32 %v2534, %v2538
        %v2543 = vsel %vm2542, 1, 0
        %v2544 = vadd.s32 %v2534, %v2538
        %v2545 = vadd.s32 %v2537, %v2543
        %vm2546 = vc.u32 %v2544, %v2540
        %v2547 = vsel %vm2546, 1, 0
        %v2548 = vadd.s32 %v2544, %v2540
        %v2549 = vadd.s32 %v2545, %v2547
        %v2550 = vadd.s32 %v2549, %v2539
        %v2551 = vadd.s32 %v2550, %v2541
        %v2552 = vand.u32 %v2529, 65535
        %v2553 = vshrl.u32 %v2529, 16
        %v2554 = vand.u32 %v2524, 65535
        %v2555 = vshrl.u32 %v2524, 16
        %v2556 = vmul.u32 %v2552, %v2554
        %v2557 = vmul.u32 %v2552, %v2555
        %v2558 = vmul.u32 %v2553, %v2554
        %v2559 = vmul.u32 %v2553, %v2555
        %v2560 = vshll.u32 %v2557, 16
        %v2561 = vshrl.u32 %v2557, 16
        %v2562 = vshll.u32 %v2558, 16
        %v2563 = vshrl.u32 %v2558, 16
        %vm2564 = vc.u32 %v2556, %v2560
        %v2565 = vsel %vm2564, 1, 0
        %v2566 = vadd.s32 %v2556, %v2560
        %v2567 = vadd.s32 %v2559, %v2565
        %vm2568 = vc.u32 %v2566, %v2562
        %v2569 = vsel %vm2568, 1, 0
        %v2570 = vadd.s32 %v2566, %v2562
        %v2571 = vadd.s32 %v2567, %v2569
        %v2572 = vadd.s32 %v2571, %v2561
        %v2573 = vadd.s32 %v2572, %v2563
        %v2574 = vmul.u32 %v2529, %v2520
        %v2575 = vadd.s32 %v2551, %v2570
        %vm2576 = vc.u32 %v2551, %v2570
        %v2577 = vadd.s32 %v2573, 1
        %v2578 = vsel %vm2576, %v2577, %v2573
        %v2579 = vadd.s32 %v2574, %v2578
        %v2580 = vadd.s32 %v2579, 536870912
        %v2581 = vshrl.u32 %v2580, 30
        %v2582 = vshll.u32 %v2581, 30
        %v2583 = vsub.s32 %v2579, %v2582
        %vm2584 = vcmp.lt.s32.totalorder %v2583, 0
        %v2585 = vsub.s32 0, %v2583
        %v2586 = vsel %vm2584, %v2585, %v2583
        %v2587 = vclz %v2586
        %v2588 = vsub.s32 %v2587, 2
        %vm2589 = vcmp.gt.s32.totalorder 0, %v2588
        %v2590 = vsel %vm2589, 0, %v2588
        %v2591 = vsub.s32 32, %v2590
        %v2592 = vshll.u32 %v2583, %v2590
        %v2593 = vshrl.u32 %v2575, %v2591
        %v2594 = vor.u32 %v2592, %v2593
        %v2595 = vsub.s32 4294967266, %v2590
        %v2596 = vadd.s32 %v2595, 127
        %v2597 = vshll.u32 %v2596, 23
        %v2598 = vor.u32 4788187, %v2597
        %v2599 = vand.u32 2147483647, %v2598
        %v2601 = vcvt.s32.f32 %v2594
        %v2602 = vmul.f32 %v2601, %v2599
        %v2603 = vxor.u32 %v2602, 2147483648
        %v2604 = vsel %vm2483, %v2603, %v2602
        %v2605 = vsub.s32 4, %v2581
        %v2606 = vsel %vm2483, %v2605, %v2581
        %v2607 = vsel %vm2482, %v306, %v2604
        %v2608 = vsel %vm2482, 0, %v2606
        %v2609 = vmul.f32 %v2607, %v2607
        %v2610 = vmul.f32 %v2609, -0.001358992
        %v2611 = vadd.f32 %v2610, 0.041655596
        %v2612 = vmul.f32 %v2609, %v2611
        %v2613 = vadd.f32 %v2612, -0.4999988
        %v2614 = vmul.f32 %v2609, %v2613
        %v2615 = vadd.f32 1.0, %v2614
        %v2616 = vmul.f32 %v2607, %v2607
        %v2617 = vmul.f32 %v2616, -0.00019511016
        %v2618 = vadd.f32 %v2617, 0.008332121
        %v2619 = vmul.f32 %v2616, %v2618
        %v2620 = vadd.f32 %v2619, -0.16666654
        %v2621 = vmul.f32 %v2616, %v2620
        %v2622 = vadd.f32 %v2621, 1.0
        %v2623 = vmul.f32 %v2622, %v2607
        %vm2624 = vweird.f32 %v306
        %v2625 = vadd.s32 %v2608, 3
        %v2626 = vand.u32 %v2625, 3
        %vm2627 = vcmp.lt.s32.totalorder %v2626, 2
        %vm2628 = vcmp.eq.s32.totalorder %v2626, 0
        %v2629 = vxor.u32 %v2623, 2147483648
        %v2630 = vsel %vm2628, %v2615, %v2629
        %vm2631 = vcmp.eq.s32.totalorder %v2626, 2
        %v2632 = vxor.u32 %v2615, 2147483648
        %v2633 = vsel %vm2631, %v2632, %v2623
        %v2634 = vsel %vm2627, %v2630, %v2633
        %v2635 = vsel %vm2624, nan, %v2634
        %v2636 = vand.u32 2147483647, %v309
        %vm2637 = vcmp.le.f32.partialorder %v2636, 0.7853982
        %vm2638 = vcmp.lt.s32.totalorder %v309, 0
        %v2639 = vand.u32 %v309, 2139095040
        %v2640 = vshrl.u32 %v2639, 23
        %v2641 = vsub.s32 %v2640, 127
        %v2642 = vand.u32 2147483647, %v309
        %v2643 = vand.u32 %v2642, 8388607
        %v2644 = vor.u32 %v2643, 8388608
        %v2645 = vsub.s32 0, %v2644
        %v2646 = vadd.s32 %v2641, 1
        %vm2647 = vcmp.gt.s32.totalorder %v2646, 0
        %v2648 = vsel %vm2647, %v2646, 0
        %v2649 = vshrl.u32 %v2648, 5
        %v2650 = vand.u32 %v2648, 31
        %v2651 = vsub.s32 32, %v2650
        %v2652 = vshrl.u32 683565275, %v2651
        %v2653 = vshll.u32 683565275, %v2650
        %v2654 = vshrl.u32 2475754826, %v2651
        %v2655 = vor.u32 %v2653, %v2654
        %v2656 = vshll.u32 2475754826, %v2650
        %v2657 = vshrl.u32 2131351028, %v2651
        %v2658 = vor.u32 %v2656, %v2657
        %v2659 = vshll.u32 2131351028, %v2650
        %v2660 = vshrl.u32 2102212464, %v2651
        %v2661 = vor.u32 %v2659, %v2660
        %v2662 = vshll.u32 2102212464, %v2650
        %v2663 = vshrl.u32 920167782, %v2651
        %v2664 = vor.u32 %v2662, %v2663
        %v2665 = vshll.u32 920167782, %v2650
        %v2666 = vshrl.u32 1326507024, %v2651
        %v2667 = vor.u32 %v2665, %v2666
        %vm2668 = vcmp.lt.s32.totalorder %v2649, 1
        %vm2669 = vcmp.lt.s32.totalorder %v2649, 2
        %vm2670 = vcmp.lt.s32.totalorder %v2649, 3
        %vm2671 = vcmp.lt.s32.totalorder %v2649, 4
        %v2672 = vsel %vm2668, %v2652, %v2655
        %v2673 = vsel %vm2671, %v2661, 2102212464
        %v2674 = vsel %vm2670, %v2658, %v2673
        %v2675 = vsel %vm2669, %v2672, %v2674
        %v2676 = vsel %vm2668, %v2655, %v2658
        %v2677 = vsel %vm2671, %v2664, 920167782
        %v2678 = vsel %vm2670, %v2661, %v2677
        %v2679 = vsel %vm2669, %v2676, %v2678
        %v2680 = vsel %vm2668, %v2658, %v2661
        %v2681 = vsel %vm2671, %v2667, 1326507024
        %v2682 = vsel %vm2670, %v2664, %v2681
        %v2683 = vsel %vm2669, %v2680, %v2682
        %v2684 = vshll.u32 %v2644, 8
        %v2685 = vand.u32 %v2684, 65535
        %v2686 = vshrl.u32 %v2684, 16
        %v2687 = vand.u32 %v2683, 65535
        %v2688 = vshrl.u32 %v2683, 16
        %v2689 = vmul.u32 %v2685, %v2687
        %v2690 = vmul.u32 %v2685, %v2688
        %v2691 = vmul.u32 %v2686, %v2687
        %v2692 = vmul.u32 %v2686, %v2688
        %v2693 = vshll.u32 %v2690, 16
        %v2694 = vshrl.u32 %v2690, 16
        %v2695 = vshll.u32 %v2691, 16
        %v2696 = vshrl.u32 %v2691, 16
        %vm2697 = vc.u32 %v2689, %v2693
        %v2698 = vsel %vm2697, 1, 0
        %v2699 = vadd.s32 %v2689, %v2693
        %v2700 = vadd.s32 %v2692, %v2698
        %vm2701 = vc.u32 %v2699, %v2695
        %v2702 = vsel %vm2701, 1, 0
        %v2703 = vadd.s32 %v2699, %v2695
        %v2704 = vadd.s32 %v2700, %v2702
        %v2705 = vadd.s32 %v2704, %v2694
        %v2706 = vadd.s32 %v2705, %v2696
        %v2707 = vand.u32 %v2684, 65535
        %v2708 = vshrl.u32 %v2684, 16
        %v2709 = vand.u32 %v2679, 65535
        %v2710 = vshrl.u32 %v2679, 16
        %v2711 = vmul.u32 %v2707, %v2709
        %v2712 = vmul.u32 %v2707, %v2710
        %v2713 = vmul.u32 %v2708, %v2709
        %v2714 = vmul.u32 %v2708, %v2710
        %v2715 = vshll.u32 %v2712, 16
        %v2716 = vshrl.u32 %v2712, 16
        %v2717 = vshll.u32 %v2713, 16
        %v2718 = vshrl.u32 %v2713, 16
        %vm2719 = vc.u32 %v2711, %v2715
        %v2720 = vsel %vm2719, 1, 0
        %v2721 = vadd.s32 %v2711, %v2715
        %v2722 = vadd.s32 %v2714, %v2720
        %vm2723 = vc.u32 %v2721, %v2717
        %v2724 = vsel %vm2723, 1, 0
        %v2725 = vadd.s32 %v2721, %v2717
        %v2726 = vadd.s32 %v2722, %v2724
        %v2727 = vadd.s32 %v2726, %v2716
        %v2728 = vadd.s32 %v2727, %v2718
        %v2729 = vmul.u32 %v2684, %v2675
        %v2730 = vadd.s32 %v2706, %v2725
        %vm2731 = vc.u32 %v2706, %v2725
        %v2732 = vadd.s32 %v2728, 1
        %v2733 = vsel %vm2731, %v2732, %v2728
        %v2734 = vadd.s32 %v2729, %v2733
        %v2735 = vadd.s32 %v2734, 536870912
        %v2736 = vshrl.u32 %v2735, 30
        %v2737 = vshll.u32 %v2736, 30
        %v2738 = vsub.s32 %v2734, %v2737
        %vm2739 = vcmp.lt.s32.totalorder %v2738, 0
        %v2740 = vsub.s32 0, %v2738
        %v2741 = vsel %vm2739, %v2740, %v2738
        %v2742 = vclz %v2741
        %v2743 = vsub.s32 %v2742, 2
        %vm2744 = vcmp.gt.s32.totalorder 0, %v2743
        %v2745 = vsel %vm2744, 0, %v2743
        %v2746 = vsub.s32 32, %v2745
        %v2747 = vshll.u32 %v2738, %v2745
        %v2748 = vshrl.u32 %v2730, %v2746
        %v2749 = vor.u32 %v2747, %v2748
        %v2750 = vsub.s32 4294967266, %v2745
        %v2751 = vadd.s32 %v2750, 127
        %v2752 = vshll.u32 %v2751, 23
        %v2753 = vor.u32 4788187, %v2752
        %v2754 = vand.u32 2147483647, %v2753
        %v2756 = vcvt.s32.f32 %v2749
        %v2757 = vmul.f32 %v2756, %v2754
        %v2758 = vxor.u32 %v2757, 2147483648
        %v2759 = vsel %vm2638, %v2758, %v2757
        %v2760 = vsub.s32 4, %v2736
        %v2761 = vsel %vm2638, %v2760, %v2736
        %v2762 = vsel %vm2637, %v309, %v2759
        %v2763 = vsel %vm2637, 0, %v2761
        %v2764 = vmul.f32 %v2762, %v2762
        %v2765 = vmul.f32 %v2764, -0.001358992
        %v2766 = vadd.f32 %v2765, 0.041655596
        %v2767 = vmul.f32 %v2764, %v2766
        %v2768 = vadd.f32 %v2767, -0.4999988
        %v2769 = vmul.f32 %v2764, %v2768
        %v2770 = vadd.f32 1.0, %v2769
        %v2771 = vmul.f32 %v2762, %v2762
        %v2772 = vmul.f32 %v2771, -0.00019511016
        %v2773 = vadd.f32 %v2772, 0.008332121
        %v2774 = vmul.f32 %v2771, %v2773
        %v2775 = vadd.f32 %v2774, -0.16666654
        %v2776 = vmul.f32 %v2771, %v2775
        %v2777 = vadd.f32 %v2776, 1.0
        %v2778 = vmul.f32 %v2777, %v2762
        %vm2779 = vweird.f32 %v309
        %v2780 = vadd.s32 %v2763, 3
        %v2781 = vand.u32 %v2780, 3
        %vm2782 = vcmp.lt.s32.totalorder %v2781, 2
        %vm2783 = vcmp.eq.s32.totalorder %v2781, 0
        %v2784 = vxor.u32 %v2778, 2147483648
        %v2785 = vsel %vm2783, %v2770, %v2784
        %vm2786 = vcmp.eq.s32.totalorder %v2781, 2
        %v2787 = vxor.u32 %v2770, 2147483648
        %v2788 = vsel %vm2786, %v2787, %v2778
        %v2789 = vsel %vm2782, %v2785, %v2788
        %v2790 = vsel %vm2779, nan, %v2789
        %2791 = vst [vmem:[%s207] sm:$0xff] %v465
        %2792 = vst [vmem:[%s207 + $0x8] sm:$0xff] %v620
        %2793 = vst [vmem:[%s207 + $0x10] sm:$0xff] %v775
        %2794 = vst [vmem:[%s207 + $0x18] sm:$0xff] %v930
        %2795 = vst [vmem:[%s207 + $0x20] sm:$0xff] %v1085
        %2796 = vst [vmem:[%s207 + $0x28] sm:$0xff] %v1240
        %2797 = vst [vmem:[%s207 + $0x30] sm:$0xff] %v1395
        %2798 = vst [vmem:[%s207 + $0x38] sm:$0xff] %v1550
        %2799 = vst [vmem:[%s207 + $0x40] sm:$0xff] %v1705
        %2800 = vst [vmem:[%s207 + $0x48] sm:$0xff] %v1860
        %2801 = vst [vmem:[%s207 + $0x50] sm:$0xff] %v2015
        %2802 = vst [vmem:[%s207 + $0x58] sm:$0xff] %v2170
        %2803 = vst [vmem:[%s207 + $0x60] sm:$0xff] %v2325
        %2804 = vst [vmem:[%s207 + $0x68] sm:$0xff] %v2480
        %2805 = vst [vmem:[%s207 + $0x70] sm:$0xff] %v2635
        %2806 = vst [vmem:[%s207 + $0x78] sm:$0xff] %v2790
        %v2807 = vld [vmem:[%s179 + $0x80] sm:$0xff]
        %v2808 = vld [vmem:[%s179 + $0x88] sm:$0xff]
        %v2809 = vld [vmem:[%s179 + $0x90] sm:$0xff]
        %v2810 = vld [vmem:[%s179 + $0x98] sm:$0xff]
        %v2811 = vld [vmem:[%s179 + $0xa0] sm:$0xff]
        %v2812 = vld [vmem:[%s179 + $0xa8] sm:$0xff]
        %v2813 = vld [vmem:[%s179 + $0xb0] sm:$0xff]
        %v2814 = vld [vmem:[%s179 + $0xb8] sm:$0xff]
        %v2815 = vld [vmem:[%s179 + $0xc0] sm:$0xff]
        %v2816 = vld [vmem:[%s179 + $0xc8] sm:$0xff]
        %v2817 = vld [vmem:[%s179 + $0xd0] sm:$0xff]
        %v2818 = vld [vmem:[%s179 + $0xd8] sm:$0xff]
        %v2819 = vld [vmem:[%s179 + $0xe0] sm:$0xff]
        %v2820 = vld [vmem:[%s179 + $0xe8] sm:$0xff]
        %v2821 = vld [vmem:[%s179 + $0xf0] sm:$0xff]
        %v2822 = vld [vmem:[%s179 + $0xf8] sm:$0xff]
        %v2823 = vld [vmem:[#allocation5] sm:$0xff]
        %v2824 = vld [vmem:[#allocation5 + $0x8] sm:$0xff]
        %v2825 = vld [vmem:[#allocation5 + $0x10] sm:$0xff]
        %v2826 = vld [vmem:[#allocation5 + $0x18] sm:$0xff]
        %v2827 = vld [vmem:[#allocation5 + $0x20] sm:$0xff]
        %v2828 = vld [vmem:[#allocation5 + $0x28] sm:$0xff]
        %v2829 = vld [vmem:[#allocation5 + $0x30] sm:$0xff]
        %v2830 = vld [vmem:[#allocation5 + $0x38] sm:$0xff]
        %v2831 = vld [vmem:[#allocation5 + $0x40] sm:$0xff]
        %v2832 = vld [vmem:[#allocation5 + $0x48] sm:$0xff]
        %v2833 = vld [vmem:[#allocation5 + $0x50] sm:$0xff]
        %v2834 = vld [vmem:[#allocation5 + $0x58] sm:$0xff]
        %v2835 = vld [vmem:[#allocation5 + $0x60] sm:$0xff]
        %v2836 = vld [vmem:[#allocation5 + $0x68] sm:$0xff]
        %v2837 = vld [vmem:[#allocation5 + $0x70] sm:$0xff]
        %v2838 = vld [vmem:[#allocation5 + $0x78] sm:$0xff]
        %2839 = vmatpush.msra.mxu0 %v2838
        %2840 = vmatpush.msra.mxu0 %v2837
        %2841 = vmatpush.msra.mxu0 %v2836
        %2842 = vmatpush.msra.mxu0 %v2835
        %2843 = vmatpush.msra.mxu0 %v2834
        %2844 = vmatpush.msra.mxu0 %v2833
        %2845 = vmatpush.msra.mxu0 %v2832
        %2846 = vmatpush.msra.mxu0 %v2831
        %2847 = vmatpush.msra.mxu0 %v2830
        %2848 = vmatpush.msra.mxu0 %v2829
        %2849 = vmatpush.msra.mxu0 %v2828
        %2850 = vmatpush.msra.mxu0 %v2827
        %2851 = vmatpush.msra.mxu0 %v2826
        %2852 = vmatpush.msra.mxu0 %v2825
        %2853 = vmatpush.msra.mxu0 %v2824
        %2854 = vmatpush.msra.mxu0 %v2823
        %2855 = vmatmul.f32.gmra.mxu0 %v2807
        %v2856 = vpop.f32.mrf.mxu0
        %v2857 = vadd.f32 %v244, %v2856
        %2858 = vmatmul.f32.gmra.mxu0 %v2808
        %v2859 = vpop.f32.mrf.mxu0
        %v2860 = vadd.f32 %v244, %v2859
        %2861 = vmatmul.f32.gmra.mxu0 %v2809
        %v2862 = vpop.f32.mrf.mxu0
        %v2863 = vadd.f32 %v244, %v2862
        %2864 = vmatmul.f32.gmra.mxu0 %v2810
        %v2865 = vpop.f32.mrf.mxu0
        %v2866 = vadd.f32 %v244, %v2865
        %2867 = vmatmul.f32.gmra.mxu0 %v2811
        %v2868 = vpop.f32.mrf.mxu0
        %v2869 = vadd.f32 %v244, %v2868
        %2870 = vmatmul.f32.gmra.mxu0 %v2812
        %v2871 = vpop.f32.mrf.mxu0
        %v2872 = vadd.f32 %v244, %v2871
        %2873 = vmatmul.f32.gmra.mxu0 %v2813
        %v2874 = vpop.f32.mrf.mxu0
        %v2875 = vadd.f32 %v244, %v2874
        %2876 = vmatmul.f32.gmra.mxu0 %v2814
        %v2877 = vpop.f32.mrf.mxu0
        %v2878 = vadd.f32 %v244, %v2877
        %2879 = vmatmul.f32.gmra.mxu0 %v2815
        %v2880 = vpop.f32.mrf.mxu0
        %v2881 = vadd.f32 %v244, %v2880
        %2882 = vmatmul.f32.gmra.mxu0 %v2816
        %v2883 = vpop.f32.mrf.mxu0
        %v2884 = vadd.f32 %v244, %v2883
        %2885 = vmatmul.f32.gmra.mxu0 %v2817
        %v2886 = vpop.f32.mrf.mxu0
        %v2887 = vadd.f32 %v244, %v2886
        %2888 = vmatmul.f32.gmra.mxu0 %v2818
        %v2889 = vpop.f32.mrf.mxu0
        %v2890 = vadd.f32 %v244, %v2889
        %2891 = vmatmul.f32.gmra.mxu0 %v2819
        %v2892 = vpop.f32.mrf.mxu0
        %v2893 = vadd.f32 %v244, %v2892
        %2894 = vmatmul.f32.gmra.mxu0 %v2820
        %v2895 = vpop.f32.mrf.mxu0
        %v2896 = vadd.f32 %v244, %v2895
        %2897 = vmatmul.f32.gmra.mxu0 %v2821
        %v2898 = vpop.f32.mrf.mxu0
        %v2899 = vadd.f32 %v244, %v2898
        %2900 = vmatmul.f32.gmra.mxu0 %v2822
        %v2901 = vpop.f32.mrf.mxu0
        %v2902 = vadd.f32 %v244, %v2901
        %2903 = vdwg.mxu0
        %v2904 = vand.u32 2147483647, %v2857
        %vm2905 = vcmp.le.f32.partialorder %v2904, 0.7853982
        %vm2906 = vcmp.lt.s32.totalorder %v2857, 0
        %v2907 = vand.u32 %v2857, 2139095040
        %v2908 = vshrl.u32 %v2907, 23
        %v2909 = vsub.s32 %v2908, 127
        %v2910 = vand.u32 2147483647, %v2857
        %v2911 = vand.u32 %v2910, 8388607
        %v2912 = vor.u32 %v2911, 8388608
        %v2913 = vsub.s32 0, %v2912
        %v2914 = vadd.s32 %v2909, 1
        %vm2915 = vcmp.gt.s32.totalorder %v2914, 0
        %v2916 = vsel %vm2915, %v2914, 0
        %v2917 = vshrl.u32 %v2916, 5
        %v2918 = vand.u32 %v2916, 31
        %v2919 = vsub.s32 32, %v2918
        %v2920 = vshrl.u32 683565275, %v2919
        %v2921 = vshll.u32 683565275, %v2918
        %v2922 = vshrl.u32 2475754826, %v2919
        %v2923 = vor.u32 %v2921, %v2922
        %v2924 = vshll.u32 2475754826, %v2918
        %v2925 = vshrl.u32 2131351028, %v2919
        %v2926 = vor.u32 %v2924, %v2925
        %v2927 = vshll.u32 2131351028, %v2918
        %v2928 = vshrl.u32 2102212464, %v2919
        %v2929 = vor.u32 %v2927, %v2928
        %v2930 = vshll.u32 2102212464, %v2918
        %v2931 = vshrl.u32 920167782, %v2919
        %v2932 = vor.u32 %v2930, %v2931
        %v2933 = vshll.u32 920167782, %v2918
        %v2934 = vshrl.u32 1326507024, %v2919
        %v2935 = vor.u32 %v2933, %v2934
        %vm2936 = vcmp.lt.s32.totalorder %v2917, 1
        %vm2937 = vcmp.lt.s32.totalorder %v2917, 2
        %vm2938 = vcmp.lt.s32.totalorder %v2917, 3
        %vm2939 = vcmp.lt.s32.totalorder %v2917, 4
        %v2940 = vsel %vm2936, %v2920, %v2923
        %v2941 = vsel %vm2939, %v2929, 2102212464
        %v2942 = vsel %vm2938, %v2926, %v2941
        %v2943 = vsel %vm2937, %v2940, %v2942
        %v2944 = vsel %vm2936, %v2923, %v2926
        %v2945 = vsel %vm2939, %v2932, 920167782
        %v2946 = vsel %vm2938, %v2929, %v2945
        %v2947 = vsel %vm2937, %v2944, %v2946
        %v2948 = vsel %vm2936, %v2926, %v2929
        %v2949 = vsel %vm2939, %v2935, 1326507024
        %v2950 = vsel %vm2938, %v2932, %v2949
        %v2951 = vsel %vm2937, %v2948, %v2950
        %v2952 = vshll.u32 %v2912, 8
        %v2953 = vand.u32 %v2952, 65535
        %v2954 = vshrl.u32 %v2952, 16
        %v2955 = vand.u32 %v2951, 65535
        %v2956 = vshrl.u32 %v2951, 16
        %v2957 = vmul.u32 %v2953, %v2955
        %v2958 = vmul.u32 %v2953, %v2956
        %v2959 = vmul.u32 %v2954, %v2955
        %v2960 = vmul.u32 %v2954, %v2956
        %v2961 = vshll.u32 %v2958, 16
        %v2962 = vshrl.u32 %v2958, 16
        %v2963 = vshll.u32 %v2959, 16
        %v2964 = vshrl.u32 %v2959, 16
        %vm2965 = vc.u32 %v2957, %v2961
        %v2966 = vsel %vm2965, 1, 0
        %v2967 = vadd.s32 %v2957, %v2961
        %v2968 = vadd.s32 %v2960, %v2966
        %vm2969 = vc.u32 %v2967, %v2963
        %v2970 = vsel %vm2969, 1, 0
        %v2971 = vadd.s32 %v2967, %v2963
        %v2972 = vadd.s32 %v2968, %v2970
        %v2973 = vadd.s32 %v2972, %v2962
        %v2974 = vadd.s32 %v2973, %v2964
        %v2975 = vand.u32 %v2952, 65535
        %v2976 = vshrl.u32 %v2952, 16
        %v2977 = vand.u32 %v2947, 65535
        %v2978 = vshrl.u32 %v2947, 16
        %v2979 = vmul.u32 %v2975, %v2977
        %v2980 = vmul.u32 %v2975, %v2978
        %v2981 = vmul.u32 %v2976, %v2977
        %v2982 = vmul.u32 %v2976, %v2978
        %v2983 = vshll.u32 %v2980, 16
        %v2984 = vshrl.u32 %v2980, 16
        %v2985 = vshll.u32 %v2981, 16
        %v2986 = vshrl.u32 %v2981, 16
        %vm2987 = vc.u32 %v2979, %v2983
        %v2988 = vsel %vm2987, 1, 0
        %v2989 = vadd.s32 %v2979, %v2983
        %v2990 = vadd.s32 %v2982, %v2988
        %vm2991 = vc.u32 %v2989, %v2985
        %v2992 = vsel %vm2991, 1, 0
        %v2993 = vadd.s32 %v2989, %v2985
        %v2994 = vadd.s32 %v2990, %v2992
        %v2995 = vadd.s32 %v2994, %v2984
        %v2996 = vadd.s32 %v2995, %v2986
        %v2997 = vmul.u32 %v2952, %v2943
        %v2998 = vadd.s32 %v2974, %v2993
        %vm2999 = vc.u32 %v2974, %v2993
        %v3000 = vadd.s32 %v2996, 1
        %v3001 = vsel %vm2999, %v3000, %v2996
        %v3002 = vadd.s32 %v2997, %v3001
        %v3003 = vadd.s32 %v3002, 536870912
        %v3004 = vshrl.u32 %v3003, 30
        %v3005 = vshll.u32 %v3004, 30
        %v3006 = vsub.s32 %v3002, %v3005
        %vm3007 = vcmp.lt.s32.totalorder %v3006, 0
        %v3008 = vsub.s32 0, %v3006
        %v3009 = vsel %vm3007, %v3008, %v3006
        %v3010 = vclz %v3009
        %v3011 = vsub.s32 %v3010, 2
        %vm3012 = vcmp.gt.s32.totalorder 0, %v3011
        %v3013 = vsel %vm3012, 0, %v3011
        %v3014 = vsub.s32 32, %v3013
        %v3015 = vshll.u32 %v3006, %v3013
        %v3016 = vshrl.u32 %v2998, %v3014
        %v3017 = vor.u32 %v3015, %v3016
        %v3018 = vsub.s32 4294967266, %v3013
        %v3019 = vadd.s32 %v3018, 127
        %v3020 = vshll.u32 %v3019, 23
        %v3021 = vor.u32 4788187, %v3020
        %v3022 = vand.u32 2147483647, %v3021
        %v3024 = vcvt.s32.f32 %v3017
        %v3025 = vmul.f32 %v3024, %v3022
        %v3026 = vxor.u32 %v3025, 2147483648
        %v3027 = vsel %vm2906, %v3026, %v3025
        %v3028 = vsub.s32 4, %v3004
        %v3029 = vsel %vm2906, %v3028, %v3004
        %v3030 = vsel %vm2905, %v2857, %v3027
        %v3031 = vsel %vm2905, 0, %v3029
        %v3032 = vmul.f32 %v3030, %v3030
        %v3033 = vmul.f32 %v3032, -0.001358992
        %v3034 = vadd.f32 %v3033, 0.041655596
        %v3035 = vmul.f32 %v3032, %v3034
        %v3036 = vadd.f32 %v3035, -0.4999988
        %v3037 = vmul.f32 %v3032, %v3036
        %v3038 = vadd.f32 1.0, %v3037
        %v3039 = vmul.f32 %v3030, %v3030
        %v3040 = vmul.f32 %v3039, -0.00019511016
        %v3041 = vadd.f32 %v3040, 0.008332121
        %v3042 = vmul.f32 %v3039, %v3041
        %v3043 = vadd.f32 %v3042, -0.16666654
        %v3044 = vmul.f32 %v3039, %v3043
        %v3045 = vadd.f32 %v3044, 1.0
        %v3046 = vmul.f32 %v3045, %v3030
        %vm3047 = vweird.f32 %v2857
        %v3048 = vadd.s32 %v3031, 3
        %v3049 = vand.u32 %v3048, 3
        %vm3050 = vcmp.lt.s32.totalorder %v3049, 2
        %vm3051 = vcmp.eq.s32.totalorder %v3049, 0
        %v3052 = vxor.u32 %v3046, 2147483648
        %v3053 = vsel %vm3051, %v3038, %v3052
        %vm3054 = vcmp.eq.s32.totalorder %v3049, 2
        %v3055 = vxor.u32 %v3038, 2147483648
        %v3056 = vsel %vm3054, %v3055, %v3046
        %v3057 = vsel %vm3050, %v3053, %v3056
        %v3058 = vsel %vm3047, nan, %v3057
        %v3059 = vand.u32 2147483647, %v2860
        %vm3060 = vcmp.le.f32.partialorder %v3059, 0.7853982
        %vm3061 = vcmp.lt.s32.totalorder %v2860, 0
        %v3062 = vand.u32 %v2860, 2139095040
        %v3063 = vshrl.u32 %v3062, 23
        %v3064 = vsub.s32 %v3063, 127
        %v3065 = vand.u32 2147483647, %v2860
        %v3066 = vand.u32 %v3065, 8388607
        %v3067 = vor.u32 %v3066, 8388608
        %v3068 = vsub.s32 0, %v3067
        %v3069 = vadd.s32 %v3064, 1
        %vm3070 = vcmp.gt.s32.totalorder %v3069, 0
        %v3071 = vsel %vm3070, %v3069, 0
        %v3072 = vshrl.u32 %v3071, 5
        %v3073 = vand.u32 %v3071, 31
        %v3074 = vsub.s32 32, %v3073
        %v3075 = vshrl.u32 683565275, %v3074
        %v3076 = vshll.u32 683565275, %v3073
        %v3077 = vshrl.u32 2475754826, %v3074
        %v3078 = vor.u32 %v3076, %v3077
        %v3079 = vshll.u32 2475754826, %v3073
        %v3080 = vshrl.u32 2131351028, %v3074
        %v3081 = vor.u32 %v3079, %v3080
        %v3082 = vshll.u32 2131351028, %v3073
        %v3083 = vshrl.u32 2102212464, %v3074
        %v3084 = vor.u32 %v3082, %v3083
        %v3085 = vshll.u32 2102212464, %v3073
        %v3086 = vshrl.u32 920167782, %v3074
        %v3087 = vor.u32 %v3085, %v3086
        %v3088 = vshll.u32 920167782, %v3073
        %v3089 = vshrl.u32 1326507024, %v3074
        %v3090 = vor.u32 %v3088, %v3089
        %vm3091 = vcmp.lt.s32.totalorder %v3072, 1
        %vm3092 = vcmp.lt.s32.totalorder %v3072, 2
        %vm3093 = vcmp.lt.s32.totalorder %v3072, 3
        %vm3094 = vcmp.lt.s32.totalorder %v3072, 4
        %v3095 = vsel %vm3091, %v3075, %v3078
        %v3096 = vsel %vm3094, %v3084, 2102212464
        %v3097 = vsel %vm3093, %v3081, %v3096
        %v3098 = vsel %vm3092, %v3095, %v3097
        %v3099 = vsel %vm3091, %v3078, %v3081
        %v3100 = vsel %vm3094, %v3087, 920167782
        %v3101 = vsel %vm3093, %v3084, %v3100
        %v3102 = vsel %vm3092, %v3099, %v3101
        %v3103 = vsel %vm3091, %v3081, %v3084
        %v3104 = vsel %vm3094, %v3090, 1326507024
        %v3105 = vsel %vm3093, %v3087, %v3104
        %v3106 = vsel %vm3092, %v3103, %v3105
        %v3107 = vshll.u32 %v3067, 8
        %v3108 = vand.u32 %v3107, 65535
        %v3109 = vshrl.u32 %v3107, 16
        %v3110 = vand.u32 %v3106, 65535
        %v3111 = vshrl.u32 %v3106, 16
        %v3112 = vmul.u32 %v3108, %v3110
        %v3113 = vmul.u32 %v3108, %v3111
        %v3114 = vmul.u32 %v3109, %v3110
        %v3115 = vmul.u32 %v3109, %v3111
        %v3116 = vshll.u32 %v3113, 16
        %v3117 = vshrl.u32 %v3113, 16
        %v3118 = vshll.u32 %v3114, 16
        %v3119 = vshrl.u32 %v3114, 16
        %vm3120 = vc.u32 %v3112, %v3116
        %v3121 = vsel %vm3120, 1, 0
        %v3122 = vadd.s32 %v3112, %v3116
        %v3123 = vadd.s32 %v3115, %v3121
        %vm3124 = vc.u32 %v3122, %v3118
        %v3125 = vsel %vm3124, 1, 0
        %v3126 = vadd.s32 %v3122, %v3118
        %v3127 = vadd.s32 %v3123, %v3125
        %v3128 = vadd.s32 %v3127, %v3117
        %v3129 = vadd.s32 %v3128, %v3119
        %v3130 = vand.u32 %v3107, 65535
        %v3131 = vshrl.u32 %v3107, 16
        %v3132 = vand.u32 %v3102, 65535
        %v3133 = vshrl.u32 %v3102, 16
        %v3134 = vmul.u32 %v3130, %v3132
        %v3135 = vmul.u32 %v3130, %v3133
        %v3136 = vmul.u32 %v3131, %v3132
        %v3137 = vmul.u32 %v3131, %v3133
        %v3138 = vshll.u32 %v3135, 16
        %v3139 = vshrl.u32 %v3135, 16
        %v3140 = vshll.u32 %v3136, 16
        %v3141 = vshrl.u32 %v3136, 16
        %vm3142 = vc.u32 %v3134, %v3138
        %v3143 = vsel %vm3142, 1, 0
        %v3144 = vadd.s32 %v3134, %v3138
        %v3145 = vadd.s32 %v3137, %v3143
        %vm3146 = vc.u32 %v3144, %v3140
        %v3147 = vsel %vm3146, 1, 0
        %v3148 = vadd.s32 %v3144, %v3140
        %v3149 = vadd.s32 %v3145, %v3147
        %v3150 = vadd.s32 %v3149, %v3139
        %v3151 = vadd.s32 %v3150, %v3141
        %v3152 = vmul.u32 %v3107, %v3098
        %v3153 = vadd.s32 %v3129, %v3148
        %vm3154 = vc.u32 %v3129, %v3148
        %v3155 = vadd.s32 %v3151, 1
        %v3156 = vsel %vm3154, %v3155, %v3151
        %v3157 = vadd.s32 %v3152, %v3156
        %v3158 = vadd.s32 %v3157, 536870912
        %v3159 = vshrl.u32 %v3158, 30
        %v3160 = vshll.u32 %v3159, 30
        %v3161 = vsub.s32 %v3157, %v3160
        %vm3162 = vcmp.lt.s32.totalorder %v3161, 0
        %v3163 = vsub.s32 0, %v3161
        %v3164 = vsel %vm3162, %v3163, %v3161
        %v3165 = vclz %v3164
        %v3166 = vsub.s32 %v3165, 2
        %vm3167 = vcmp.gt.s32.totalorder 0, %v3166
        %v3168 = vsel %vm3167, 0, %v3166
        %v3169 = vsub.s32 32, %v3168
        %v3170 = vshll.u32 %v3161, %v3168
        %v3171 = vshrl.u32 %v3153, %v3169
        %v3172 = vor.u32 %v3170, %v3171
        %v3173 = vsub.s32 4294967266, %v3168
        %v3174 = vadd.s32 %v3173, 127
        %v3175 = vshll.u32 %v3174, 23
        %v3176 = vor.u32 4788187, %v3175
        %v3177 = vand.u32 2147483647, %v3176
        %v3179 = vcvt.s32.f32 %v3172
        %v3180 = vmul.f32 %v3179, %v3177
        %v3181 = vxor.u32 %v3180, 2147483648
        %v3182 = vsel %vm3061, %v3181, %v3180
        %v3183 = vsub.s32 4, %v3159
        %v3184 = vsel %vm3061, %v3183, %v3159
        %v3185 = vsel %vm3060, %v2860, %v3182
        %v3186 = vsel %vm3060, 0, %v3184
        %v3187 = vmul.f32 %v3185, %v3185
        %v3188 = vmul.f32 %v3187, -0.001358992
        %v3189 = vadd.f32 %v3188, 0.041655596
        %v3190 = vmul.f32 %v3187, %v3189
        %v3191 = vadd.f32 %v3190, -0.4999988
        %v3192 = vmul.f32 %v3187, %v3191
        %v3193 = vadd.f32 1.0, %v3192
        %v3194 = vmul.f32 %v3185, %v3185
        %v3195 = vmul.f32 %v3194, -0.00019511016
        %v3196 = vadd.f32 %v3195, 0.008332121
        %v3197 = vmul.f32 %v3194, %v3196
        %v3198 = vadd.f32 %v3197, -0.16666654
        %v3199 = vmul.f32 %v3194, %v3198
        %v3200 = vadd.f32 %v3199, 1.0
        %v3201 = vmul.f32 %v3200, %v3185
        %vm3202 = vweird.f32 %v2860
        %v3203 = vadd.s32 %v3186, 3
        %v3204 = vand.u32 %v3203, 3
        %vm3205 = vcmp.lt.s32.totalorder %v3204, 2
        %vm3206 = vcmp.eq.s32.totalorder %v3204, 0
        %v3207 = vxor.u32 %v3201, 2147483648
        %v3208 = vsel %vm3206, %v3193, %v3207
        %vm3209 = vcmp.eq.s32.totalorder %v3204, 2
        %v3210 = vxor.u32 %v3193, 2147483648
        %v3211 = vsel %vm3209, %v3210, %v3201
        %v3212 = vsel %vm3205, %v3208, %v3211
        %v3213 = vsel %vm3202, nan, %v3212
        %v3214 = vand.u32 2147483647, %v2863
        %vm3215 = vcmp.le.f32.partialorder %v3214, 0.7853982
        %vm3216 = vcmp.lt.s32.totalorder %v2863, 0
        %v3217 = vand.u32 %v2863, 2139095040
        %v3218 = vshrl.u32 %v3217, 23
        %v3219 = vsub.s32 %v3218, 127
        %v3220 = vand.u32 2147483647, %v2863
        %v3221 = vand.u32 %v3220, 8388607
        %v3222 = vor.u32 %v3221, 8388608
        %v3223 = vsub.s32 0, %v3222
        %v3224 = vadd.s32 %v3219, 1
        %vm3225 = vcmp.gt.s32.totalorder %v3224, 0
        %v3226 = vsel %vm3225, %v3224, 0
        %v3227 = vshrl.u32 %v3226, 5
        %v3228 = vand.u32 %v3226, 31
        %v3229 = vsub.s32 32, %v3228
        %v3230 = vshrl.u32 683565275, %v3229
        %v3231 = vshll.u32 683565275, %v3228
        %v3232 = vshrl.u32 2475754826, %v3229
        %v3233 = vor.u32 %v3231, %v3232
        %v3234 = vshll.u32 2475754826, %v3228
        %v3235 = vshrl.u32 2131351028, %v3229
        %v3236 = vor.u32 %v3234, %v3235
        %v3237 = vshll.u32 2131351028, %v3228
        %v3238 = vshrl.u32 2102212464, %v3229
        %v3239 = vor.u32 %v3237, %v3238
        %v3240 = vshll.u32 2102212464, %v3228
        %v3241 = vshrl.u32 920167782, %v3229
        %v3242 = vor.u32 %v3240, %v3241
        %v3243 = vshll.u32 920167782, %v3228
        %v3244 = vshrl.u32 1326507024, %v3229
        %v3245 = vor.u32 %v3243, %v3244
        %vm3246 = vcmp.lt.s32.totalorder %v3227, 1
        %vm3247 = vcmp.lt.s32.totalorder %v3227, 2
        %vm3248 = vcmp.lt.s32.totalorder %v3227, 3
        %vm3249 = vcmp.lt.s32.totalorder %v3227, 4
        %v3250 = vsel %vm3246, %v3230, %v3233
        %v3251 = vsel %vm3249, %v3239, 2102212464
        %v3252 = vsel %vm3248, %v3236, %v3251
        %v3253 = vsel %vm3247, %v3250, %v3252
        %v3254 = vsel %vm3246, %v3233, %v3236
        %v3255 = vsel %vm3249, %v3242, 920167782
        %v3256 = vsel %vm3248, %v3239, %v3255
        %v3257 = vsel %vm3247, %v3254, %v3256
        %v3258 = vsel %vm3246, %v3236, %v3239
        %v3259 = vsel %vm3249, %v3245, 1326507024
        %v3260 = vsel %vm3248, %v3242, %v3259
        %v3261 = vsel %vm3247, %v3258, %v3260
        %v3262 = vshll.u32 %v3222, 8
        %v3263 = vand.u32 %v3262, 65535
        %v3264 = vshrl.u32 %v3262, 16
        %v3265 = vand.u32 %v3261, 65535
        %v3266 = vshrl.u32 %v3261, 16
        %v3267 = vmul.u32 %v3263, %v3265
        %v3268 = vmul.u32 %v3263, %v3266
        %v3269 = vmul.u32 %v3264, %v3265
        %v3270 = vmul.u32 %v3264, %v3266
        %v3271 = vshll.u32 %v3268, 16
        %v3272 = vshrl.u32 %v3268, 16
        %v3273 = vshll.u32 %v3269, 16
        %v3274 = vshrl.u32 %v3269, 16
        %vm3275 = vc.u32 %v3267, %v3271
        %v3276 = vsel %vm3275, 1, 0
        %v3277 = vadd.s32 %v3267, %v3271
        %v3278 = vadd.s32 %v3270, %v3276
        %vm3279 = vc.u32 %v3277, %v3273
        %v3280 = vsel %vm3279, 1, 0
        %v3281 = vadd.s32 %v3277, %v3273
        %v3282 = vadd.s32 %v3278, %v3280
        %v3283 = vadd.s32 %v3282, %v3272
        %v3284 = vadd.s32 %v3283, %v3274
        %v3285 = vand.u32 %v3262, 65535
        %v3286 = vshrl.u32 %v3262, 16
        %v3287 = vand.u32 %v3257, 65535
        %v3288 = vshrl.u32 %v3257, 16
        %v3289 = vmul.u32 %v3285, %v3287
        %v3290 = vmul.u32 %v3285, %v3288
        %v3291 = vmul.u32 %v3286, %v3287
        %v3292 = vmul.u32 %v3286, %v3288
        %v3293 = vshll.u32 %v3290, 16
        %v3294 = vshrl.u32 %v3290, 16
        %v3295 = vshll.u32 %v3291, 16
        %v3296 = vshrl.u32 %v3291, 16
        %vm3297 = vc.u32 %v3289, %v3293
        %v3298 = vsel %vm3297, 1, 0
        %v3299 = vadd.s32 %v3289, %v3293
        %v3300 = vadd.s32 %v3292, %v3298
        %vm3301 = vc.u32 %v3299, %v3295
        %v3302 = vsel %vm3301, 1, 0
        %v3303 = vadd.s32 %v3299, %v3295
        %v3304 = vadd.s32 %v3300, %v3302
        %v3305 = vadd.s32 %v3304, %v3294
        %v3306 = vadd.s32 %v3305, %v3296
        %v3307 = vmul.u32 %v3262, %v3253
        %v3308 = vadd.s32 %v3284, %v3303
        %vm3309 = vc.u32 %v3284, %v3303
        %v3310 = vadd.s32 %v3306, 1
        %v3311 = vsel %vm3309, %v3310, %v3306
        %v3312 = vadd.s32 %v3307, %v3311
        %v3313 = vadd.s32 %v3312, 536870912
        %v3314 = vshrl.u32 %v3313, 30
        %v3315 = vshll.u32 %v3314, 30
        %v3316 = vsub.s32 %v3312, %v3315
        %vm3317 = vcmp.lt.s32.totalorder %v3316, 0
        %v3318 = vsub.s32 0, %v3316
        %v3319 = vsel %vm3317, %v3318, %v3316
        %v3320 = vclz %v3319
        %v3321 = vsub.s32 %v3320, 2
        %vm3322 = vcmp.gt.s32.totalorder 0, %v3321
        %v3323 = vsel %vm3322, 0, %v3321
        %v3324 = vsub.s32 32, %v3323
        %v3325 = vshll.u32 %v3316, %v3323
        %v3326 = vshrl.u32 %v3308, %v3324
        %v3327 = vor.u32 %v3325, %v3326
        %v3328 = vsub.s32 4294967266, %v3323
        %v3329 = vadd.s32 %v3328, 127
        %v3330 = vshll.u32 %v3329, 23
        %v3331 = vor.u32 4788187, %v3330
        %v3332 = vand.u32 2147483647, %v3331
        %v3334 = vcvt.s32.f32 %v3327
        %v3335 = vmul.f32 %v3334, %v3332
        %v3336 = vxor.u32 %v3335, 2147483648
        %v3337 = vsel %vm3216, %v3336, %v3335
        %v3338 = vsub.s32 4, %v3314
        %v3339 = vsel %vm3216, %v3338, %v3314
        %v3340 = vsel %vm3215, %v2863, %v3337
        %v3341 = vsel %vm3215, 0, %v3339
        %v3342 = vmul.f32 %v3340, %v3340
        %v3343 = vmul.f32 %v3342, -0.001358992
        %v3344 = vadd.f32 %v3343, 0.041655596
        %v3345 = vmul.f32 %v3342, %v3344
        %v3346 = vadd.f32 %v3345, -0.4999988
        %v3347 = vmul.f32 %v3342, %v3346
        %v3348 = vadd.f32 1.0, %v3347
        %v3349 = vmul.f32 %v3340, %v3340
        %v3350 = vmul.f32 %v3349, -0.00019511016
        %v3351 = vadd.f32 %v3350, 0.008332121
        %v3352 = vmul.f32 %v3349, %v3351
        %v3353 = vadd.f32 %v3352, -0.16666654
        %v3354 = vmul.f32 %v3349, %v3353
        %v3355 = vadd.f32 %v3354, 1.0
        %v3356 = vmul.f32 %v3355, %v3340
        %vm3357 = vweird.f32 %v2863
        %v3358 = vadd.s32 %v3341, 3
        %v3359 = vand.u32 %v3358, 3
        %vm3360 = vcmp.lt.s32.totalorder %v3359, 2
        %vm3361 = vcmp.eq.s32.totalorder %v3359, 0
        %v3362 = vxor.u32 %v3356, 2147483648
        %v3363 = vsel %vm3361, %v3348, %v3362
        %vm3364 = vcmp.eq.s32.totalorder %v3359, 2
        %v3365 = vxor.u32 %v3348, 2147483648
        %v3366 = vsel %vm3364, %v3365, %v3356
        %v3367 = vsel %vm3360, %v3363, %v3366
        %v3368 = vsel %vm3357, nan, %v3367
        %v3369 = vand.u32 2147483647, %v2866
        %vm3370 = vcmp.le.f32.partialorder %v3369, 0.7853982
        %vm3371 = vcmp.lt.s32.totalorder %v2866, 0
        %v3372 = vand.u32 %v2866, 2139095040
        %v3373 = vshrl.u32 %v3372, 23
        %v3374 = vsub.s32 %v3373, 127
        %v3375 = vand.u32 2147483647, %v2866
        %v3376 = vand.u32 %v3375, 8388607
        %v3377 = vor.u32 %v3376, 8388608
        %v3378 = vsub.s32 0, %v3377
        %v3379 = vadd.s32 %v3374, 1
        %vm3380 = vcmp.gt.s32.totalorder %v3379, 0
        %v3381 = vsel %vm3380, %v3379, 0
        %v3382 = vshrl.u32 %v3381, 5
        %v3383 = vand.u32 %v3381, 31
        %v3384 = vsub.s32 32, %v3383
        %v3385 = vshrl.u32 683565275, %v3384
        %v3386 = vshll.u32 683565275, %v3383
        %v3387 = vshrl.u32 2475754826, %v3384
        %v3388 = vor.u32 %v3386, %v3387
        %v3389 = vshll.u32 2475754826, %v3383
        %v3390 = vshrl.u32 2131351028, %v3384
        %v3391 = vor.u32 %v3389, %v3390
        %v3392 = vshll.u32 2131351028, %v3383
        %v3393 = vshrl.u32 2102212464, %v3384
        %v3394 = vor.u32 %v3392, %v3393
        %v3395 = vshll.u32 2102212464, %v3383
        %v3396 = vshrl.u32 920167782, %v3384
        %v3397 = vor.u32 %v3395, %v3396
        %v3398 = vshll.u32 920167782, %v3383
        %v3399 = vshrl.u32 1326507024, %v3384
        %v3400 = vor.u32 %v3398, %v3399
        %vm3401 = vcmp.lt.s32.totalorder %v3382, 1
        %vm3402 = vcmp.lt.s32.totalorder %v3382, 2
        %vm3403 = vcmp.lt.s32.totalorder %v3382, 3
        %vm3404 = vcmp.lt.s32.totalorder %v3382, 4
        %v3405 = vsel %vm3401, %v3385, %v3388
        %v3406 = vsel %vm3404, %v3394, 2102212464
        %v3407 = vsel %vm3403, %v3391, %v3406
        %v3408 = vsel %vm3402, %v3405, %v3407
        %v3409 = vsel %vm3401, %v3388, %v3391
        %v3410 = vsel %vm3404, %v3397, 920167782
        %v3411 = vsel %vm3403, %v3394, %v3410
        %v3412 = vsel %vm3402, %v3409, %v3411
        %v3413 = vsel %vm3401, %v3391, %v3394
        %v3414 = vsel %vm3404, %v3400, 1326507024
        %v3415 = vsel %vm3403, %v3397, %v3414
        %v3416 = vsel %vm3402, %v3413, %v3415
        %v3417 = vshll.u32 %v3377, 8
        %v3418 = vand.u32 %v3417, 65535
        %v3419 = vshrl.u32 %v3417, 16
        %v3420 = vand.u32 %v3416, 65535
        %v3421 = vshrl.u32 %v3416, 16
        %v3422 = vmul.u32 %v3418, %v3420
        %v3423 = vmul.u32 %v3418, %v3421
        %v3424 = vmul.u32 %v3419, %v3420
        %v3425 = vmul.u32 %v3419, %v3421
        %v3426 = vshll.u32 %v3423, 16
        %v3427 = vshrl.u32 %v3423, 16
        %v3428 = vshll.u32 %v3424, 16
        %v3429 = vshrl.u32 %v3424, 16
        %vm3430 = vc.u32 %v3422, %v3426
        %v3431 = vsel %vm3430, 1, 0
        %v3432 = vadd.s32 %v3422, %v3426
        %v3433 = vadd.s32 %v3425, %v3431
        %vm3434 = vc.u32 %v3432, %v3428
        %v3435 = vsel %vm3434, 1, 0
        %v3436 = vadd.s32 %v3432, %v3428
        %v3437 = vadd.s32 %v3433, %v3435
        %v3438 = vadd.s32 %v3437, %v3427
        %v3439 = vadd.s32 %v3438, %v3429
        %v3440 = vand.u32 %v3417, 65535
        %v3441 = vshrl.u32 %v3417, 16
        %v3442 = vand.u32 %v3412, 65535
        %v3443 = vshrl.u32 %v3412, 16
        %v3444 = vmul.u32 %v3440, %v3442
        %v3445 = vmul.u32 %v3440, %v3443
        %v3446 = vmul.u32 %v3441, %v3442
        %v3447 = vmul.u32 %v3441, %v3443
        %v3448 = vshll.u32 %v3445, 16
        %v3449 = vshrl.u32 %v3445, 16
        %v3450 = vshll.u32 %v3446, 16
        %v3451 = vshrl.u32 %v3446, 16
        %vm3452 = vc.u32 %v3444, %v3448
        %v3453 = vsel %vm3452, 1, 0
        %v3454 = vadd.s32 %v3444, %v3448
        %v3455 = vadd.s32 %v3447, %v3453
        %vm3456 = vc.u32 %v3454, %v3450
        %v3457 = vsel %vm3456, 1, 0
        %v3458 = vadd.s32 %v3454, %v3450
        %v3459 = vadd.s32 %v3455, %v3457
        %v3460 = vadd.s32 %v3459, %v3449
        %v3461 = vadd.s32 %v3460, %v3451
        %v3462 = vmul.u32 %v3417, %v3408
        %v3463 = vadd.s32 %v3439, %v3458
        %vm3464 = vc.u32 %v3439, %v3458
        %v3465 = vadd.s32 %v3461, 1
        %v3466 = vsel %vm3464, %v3465, %v3461
        %v3467 = vadd.s32 %v3462, %v3466
        %v3468 = vadd.s32 %v3467, 536870912
        %v3469 = vshrl.u32 %v3468, 30
        %v3470 = vshll.u32 %v3469, 30
        %v3471 = vsub.s32 %v3467, %v3470
        %vm3472 = vcmp.lt.s32.totalorder %v3471, 0
        %v3473 = vsub.s32 0, %v3471
        %v3474 = vsel %vm3472, %v3473, %v3471
        %v3475 = vclz %v3474
        %v3476 = vsub.s32 %v3475, 2
        %vm3477 = vcmp.gt.s32.totalorder 0, %v3476
        %v3478 = vsel %vm3477, 0, %v3476
        %v3479 = vsub.s32 32, %v3478
        %v3480 = vshll.u32 %v3471, %v3478
        %v3481 = vshrl.u32 %v3463, %v3479
        %v3482 = vor.u32 %v3480, %v3481
        %v3483 = vsub.s32 4294967266, %v3478
        %v3484 = vadd.s32 %v3483, 127
        %v3485 = vshll.u32 %v3484, 23
        %v3486 = vor.u32 4788187, %v3485
        %v3487 = vand.u32 2147483647, %v3486
        %v3489 = vcvt.s32.f32 %v3482
        %v3490 = vmul.f32 %v3489, %v3487
        %v3491 = vxor.u32 %v3490, 2147483648
        %v3492 = vsel %vm3371, %v3491, %v3490
        %v3493 = vsub.s32 4, %v3469
        %v3494 = vsel %vm3371, %v3493, %v3469
        %v3495 = vsel %vm3370, %v2866, %v3492
        %v3496 = vsel %vm3370, 0, %v3494
        %v3497 = vmul.f32 %v3495, %v3495
        %v3498 = vmul.f32 %v3497, -0.001358992
        %v3499 = vadd.f32 %v3498, 0.041655596
        %v3500 = vmul.f32 %v3497, %v3499
        %v3501 = vadd.f32 %v3500, -0.4999988
        %v3502 = vmul.f32 %v3497, %v3501
        %v3503 = vadd.f32 1.0, %v3502
        %v3504 = vmul.f32 %v3495, %v3495
        %v3505 = vmul.f32 %v3504, -0.00019511016
        %v3506 = vadd.f32 %v3505, 0.008332121
        %v3507 = vmul.f32 %v3504, %v3506
        %v3508 = vadd.f32 %v3507, -0.16666654
        %v3509 = vmul.f32 %v3504, %v3508
        %v3510 = vadd.f32 %v3509, 1.0
        %v3511 = vmul.f32 %v3510, %v3495
        %vm3512 = vweird.f32 %v2866
        %v3513 = vadd.s32 %v3496, 3
        %v3514 = vand.u32 %v3513, 3
        %vm3515 = vcmp.lt.s32.totalorder %v3514, 2
        %vm3516 = vcmp.eq.s32.totalorder %v3514, 0
        %v3517 = vxor.u32 %v3511, 2147483648
        %v3518 = vsel %vm3516, %v3503, %v3517
        %vm3519 = vcmp.eq.s32.totalorder %v3514, 2
        %v3520 = vxor.u32 %v3503, 2147483648
        %v3521 = vsel %vm3519, %v3520, %v3511
        %v3522 = vsel %vm3515, %v3518, %v3521
        %v3523 = vsel %vm3512, nan, %v3522
        %v3524 = vand.u32 2147483647, %v2869
        %vm3525 = vcmp.le.f32.partialorder %v3524, 0.7853982
        %vm3526 = vcmp.lt.s32.totalorder %v2869, 0
        %v3527 = vand.u32 %v2869, 2139095040
        %v3528 = vshrl.u32 %v3527, 23
        %v3529 = vsub.s32 %v3528, 127
        %v3530 = vand.u32 2147483647, %v2869
        %v3531 = vand.u32 %v3530, 8388607
        %v3532 = vor.u32 %v3531, 8388608
        %v3533 = vsub.s32 0, %v3532
        %v3534 = vadd.s32 %v3529, 1
        %vm3535 = vcmp.gt.s32.totalorder %v3534, 0
        %v3536 = vsel %vm3535, %v3534, 0
        %v3537 = vshrl.u32 %v3536, 5
        %v3538 = vand.u32 %v3536, 31
        %v3539 = vsub.s32 32, %v3538
        %v3540 = vshrl.u32 683565275, %v3539
        %v3541 = vshll.u32 683565275, %v3538
        %v3542 = vshrl.u32 2475754826, %v3539
        %v3543 = vor.u32 %v3541, %v3542
        %v3544 = vshll.u32 2475754826, %v3538
        %v3545 = vshrl.u32 2131351028, %v3539
        %v3546 = vor.u32 %v3544, %v3545
        %v3547 = vshll.u32 2131351028, %v3538
        %v3548 = vshrl.u32 2102212464, %v3539
        %v3549 = vor.u32 %v3547, %v3548
        %v3550 = vshll.u32 2102212464, %v3538
        %v3551 = vshrl.u32 920167782, %v3539
        %v3552 = vor.u32 %v3550, %v3551
        %v3553 = vshll.u32 920167782, %v3538
        %v3554 = vshrl.u32 1326507024, %v3539
        %v3555 = vor.u32 %v3553, %v3554
        %vm3556 = vcmp.lt.s32.totalorder %v3537, 1
        %vm3557 = vcmp.lt.s32.totalorder %v3537, 2
        %vm3558 = vcmp.lt.s32.totalorder %v3537, 3
        %vm3559 = vcmp.lt.s32.totalorder %v3537, 4
        %v3560 = vsel %vm3556, %v3540, %v3543
        %v3561 = vsel %vm3559, %v3549, 2102212464
        %v3562 = vsel %vm3558, %v3546, %v3561
        %v3563 = vsel %vm3557, %v3560, %v3562
        %v3564 = vsel %vm3556, %v3543, %v3546
        %v3565 = vsel %vm3559, %v3552, 920167782
        %v3566 = vsel %vm3558, %v3549, %v3565
        %v3567 = vsel %vm3557, %v3564, %v3566
        %v3568 = vsel %vm3556, %v3546, %v3549
        %v3569 = vsel %vm3559, %v3555, 1326507024
        %v3570 = vsel %vm3558, %v3552, %v3569
        %v3571 = vsel %vm3557, %v3568, %v3570
        %v3572 = vshll.u32 %v3532, 8
        %v3573 = vand.u32 %v3572, 65535
        %v3574 = vshrl.u32 %v3572, 16
        %v3575 = vand.u32 %v3571, 65535
        %v3576 = vshrl.u32 %v3571, 16
        %v3577 = vmul.u32 %v3573, %v3575
        %v3578 = vmul.u32 %v3573, %v3576
        %v3579 = vmul.u32 %v3574, %v3575
        %v3580 = vmul.u32 %v3574, %v3576
        %v3581 = vshll.u32 %v3578, 16
        %v3582 = vshrl.u32 %v3578, 16
        %v3583 = vshll.u32 %v3579, 16
        %v3584 = vshrl.u32 %v3579, 16
        %vm3585 = vc.u32 %v3577, %v3581
        %v3586 = vsel %vm3585, 1, 0
        %v3587 = vadd.s32 %v3577, %v3581
        %v3588 = vadd.s32 %v3580, %v3586
        %vm3589 = vc.u32 %v3587, %v3583
        %v3590 = vsel %vm3589, 1, 0
        %v3591 = vadd.s32 %v3587, %v3583
        %v3592 = vadd.s32 %v3588, %v3590
        %v3593 = vadd.s32 %v3592, %v3582
        %v3594 = vadd.s32 %v3593, %v3584
        %v3595 = vand.u32 %v3572, 65535
        %v3596 = vshrl.u32 %v3572, 16
        %v3597 = vand.u32 %v3567, 65535
        %v3598 = vshrl.u32 %v3567, 16
        %v3599 = vmul.u32 %v3595, %v3597
        %v3600 = vmul.u32 %v3595, %v3598
        %v3601 = vmul.u32 %v3596, %v3597
        %v3602 = vmul.u32 %v3596, %v3598
        %v3603 = vshll.u32 %v3600, 16
        %v3604 = vshrl.u32 %v3600, 16
        %v3605 = vshll.u32 %v3601, 16
        %v3606 = vshrl.u32 %v3601, 16
        %vm3607 = vc.u32 %v3599, %v3603
        %v3608 = vsel %vm3607, 1, 0
        %v3609 = vadd.s32 %v3599, %v3603
        %v3610 = vadd.s32 %v3602, %v3608
        %vm3611 = vc.u32 %v3609, %v3605
        %v3612 = vsel %vm3611, 1, 0
        %v3613 = vadd.s32 %v3609, %v3605
        %v3614 = vadd.s32 %v3610, %v3612
        %v3615 = vadd.s32 %v3614, %v3604
        %v3616 = vadd.s32 %v3615, %v3606
        %v3617 = vmul.u32 %v3572, %v3563
        %v3618 = vadd.s32 %v3594, %v3613
        %vm3619 = vc.u32 %v3594, %v3613
        %v3620 = vadd.s32 %v3616, 1
        %v3621 = vsel %vm3619, %v3620, %v3616
        %v3622 = vadd.s32 %v3617, %v3621
        %v3623 = vadd.s32 %v3622, 536870912
        %v3624 = vshrl.u32 %v3623, 30
        %v3625 = vshll.u32 %v3624, 30
        %v3626 = vsub.s32 %v3622, %v3625
        %vm3627 = vcmp.lt.s32.totalorder %v3626, 0
        %v3628 = vsub.s32 0, %v3626
        %v3629 = vsel %vm3627, %v3628, %v3626
        %v3630 = vclz %v3629
        %v3631 = vsub.s32 %v3630, 2
        %vm3632 = vcmp.gt.s32.totalorder 0, %v3631
        %v3633 = vsel %vm3632, 0, %v3631
        %v3634 = vsub.s32 32, %v3633
        %v3635 = vshll.u32 %v3626, %v3633
        %v3636 = vshrl.u32 %v3618, %v3634
        %v3637 = vor.u32 %v3635, %v3636
        %v3638 = vsub.s32 4294967266, %v3633
        %v3639 = vadd.s32 %v3638, 127
        %v3640 = vshll.u32 %v3639, 23
        %v3641 = vor.u32 4788187, %v3640
        %v3642 = vand.u32 2147483647, %v3641
        %v3644 = vcvt.s32.f32 %v3637
        %v3645 = vmul.f32 %v3644, %v3642
        %v3646 = vxor.u32 %v3645, 2147483648
        %v3647 = vsel %vm3526, %v3646, %v3645
        %v3648 = vsub.s32 4, %v3624
        %v3649 = vsel %vm3526, %v3648, %v3624
        %v3650 = vsel %vm3525, %v2869, %v3647
        %v3651 = vsel %vm3525, 0, %v3649
        %v3652 = vmul.f32 %v3650, %v3650
        %v3653 = vmul.f32 %v3652, -0.001358992
        %v3654 = vadd.f32 %v3653, 0.041655596
        %v3655 = vmul.f32 %v3652, %v3654
        %v3656 = vadd.f32 %v3655, -0.4999988
        %v3657 = vmul.f32 %v3652, %v3656
        %v3658 = vadd.f32 1.0, %v3657
        %v3659 = vmul.f32 %v3650, %v3650
        %v3660 = vmul.f32 %v3659, -0.00019511016
        %v3661 = vadd.f32 %v3660, 0.008332121
        %v3662 = vmul.f32 %v3659, %v3661
        %v3663 = vadd.f32 %v3662, -0.16666654
        %v3664 = vmul.f32 %v3659, %v3663
        %v3665 = vadd.f32 %v3664, 1.0
        %v3666 = vmul.f32 %v3665, %v3650
        %vm3667 = vweird.f32 %v2869
        %v3668 = vadd.s32 %v3651, 3
        %v3669 = vand.u32 %v3668, 3
        %vm3670 = vcmp.lt.s32.totalorder %v3669, 2
        %vm3671 = vcmp.eq.s32.totalorder %v3669, 0
        %v3672 = vxor.u32 %v3666, 2147483648
        %v3673 = vsel %vm3671, %v3658, %v3672
        %vm3674 = vcmp.eq.s32.totalorder %v3669, 2
        %v3675 = vxor.u32 %v3658, 2147483648
        %v3676 = vsel %vm3674, %v3675, %v3666
        %v3677 = vsel %vm3670, %v3673, %v3676
        %v3678 = vsel %vm3667, nan, %v3677
        %v3679 = vand.u32 2147483647, %v2872
        %vm3680 = vcmp.le.f32.partialorder %v3679, 0.7853982
        %vm3681 = vcmp.lt.s32.totalorder %v2872, 0
        %v3682 = vand.u32 %v2872, 2139095040
        %v3683 = vshrl.u32 %v3682, 23
        %v3684 = vsub.s32 %v3683, 127
        %v3685 = vand.u32 2147483647, %v2872
        %v3686 = vand.u32 %v3685, 8388607
        %v3687 = vor.u32 %v3686, 8388608
        %v3688 = vsub.s32 0, %v3687
        %v3689 = vadd.s32 %v3684, 1
        %vm3690 = vcmp.gt.s32.totalorder %v3689, 0
        %v3691 = vsel %vm3690, %v3689, 0
        %v3692 = vshrl.u32 %v3691, 5
        %v3693 = vand.u32 %v3691, 31
        %v3694 = vsub.s32 32, %v3693
        %v3695 = vshrl.u32 683565275, %v3694
        %v3696 = vshll.u32 683565275, %v3693
        %v3697 = vshrl.u32 2475754826, %v3694
        %v3698 = vor.u32 %v3696, %v3697
        %v3699 = vshll.u32 2475754826, %v3693
        %v3700 = vshrl.u32 2131351028, %v3694
        %v3701 = vor.u32 %v3699, %v3700
        %v3702 = vshll.u32 2131351028, %v3693
        %v3703 = vshrl.u32 2102212464, %v3694
        %v3704 = vor.u32 %v3702, %v3703
        %v3705 = vshll.u32 2102212464, %v3693
        %v3706 = vshrl.u32 920167782, %v3694
        %v3707 = vor.u32 %v3705, %v3706
        %v3708 = vshll.u32 920167782, %v3693
        %v3709 = vshrl.u32 1326507024, %v3694
        %v3710 = vor.u32 %v3708, %v3709
        %vm3711 = vcmp.lt.s32.totalorder %v3692, 1
        %vm3712 = vcmp.lt.s32.totalorder %v3692, 2
        %vm3713 = vcmp.lt.s32.totalorder %v3692, 3
        %vm3714 = vcmp.lt.s32.totalorder %v3692, 4
        %v3715 = vsel %vm3711, %v3695, %v3698
        %v3716 = vsel %vm3714, %v3704, 2102212464
        %v3717 = vsel %vm3713, %v3701, %v3716
        %v3718 = vsel %vm3712, %v3715, %v3717
        %v3719 = vsel %vm3711, %v3698, %v3701
        %v3720 = vsel %vm3714, %v3707, 920167782
        %v3721 = vsel %vm3713, %v3704, %v3720
        %v3722 = vsel %vm3712, %v3719, %v3721
        %v3723 = vsel %vm3711, %v3701, %v3704
        %v3724 = vsel %vm3714, %v3710, 1326507024
        %v3725 = vsel %vm3713, %v3707, %v3724
        %v3726 = vsel %vm3712, %v3723, %v3725
        %v3727 = vshll.u32 %v3687, 8
        %v3728 = vand.u32 %v3727, 65535
        %v3729 = vshrl.u32 %v3727, 16
        %v3730 = vand.u32 %v3726, 65535
        %v3731 = vshrl.u32 %v3726, 16
        %v3732 = vmul.u32 %v3728, %v3730
        %v3733 = vmul.u32 %v3728, %v3731
        %v3734 = vmul.u32 %v3729, %v3730
        %v3735 = vmul.u32 %v3729, %v3731
        %v3736 = vshll.u32 %v3733, 16
        %v3737 = vshrl.u32 %v3733, 16
        %v3738 = vshll.u32 %v3734, 16
        %v3739 = vshrl.u32 %v3734, 16
        %vm3740 = vc.u32 %v3732, %v3736
        %v3741 = vsel %vm3740, 1, 0
        %v3742 = vadd.s32 %v3732, %v3736
        %v3743 = vadd.s32 %v3735, %v3741
        %vm3744 = vc.u32 %v3742, %v3738
        %v3745 = vsel %vm3744, 1, 0
        %v3746 = vadd.s32 %v3742, %v3738
        %v3747 = vadd.s32 %v3743, %v3745
        %v3748 = vadd.s32 %v3747, %v3737
        %v3749 = vadd.s32 %v3748, %v3739
        %v3750 = vand.u32 %v3727, 65535
        %v3751 = vshrl.u32 %v3727, 16
        %v3752 = vand.u32 %v3722, 65535
        %v3753 = vshrl.u32 %v3722, 16
        %v3754 = vmul.u32 %v3750, %v3752
        %v3755 = vmul.u32 %v3750, %v3753
        %v3756 = vmul.u32 %v3751, %v3752
        %v3757 = vmul.u32 %v3751, %v3753
        %v3758 = vshll.u32 %v3755, 16
        %v3759 = vshrl.u32 %v3755, 16
        %v3760 = vshll.u32 %v3756, 16
        %v3761 = vshrl.u32 %v3756, 16
        %vm3762 = vc.u32 %v3754, %v3758
        %v3763 = vsel %vm3762, 1, 0
        %v3764 = vadd.s32 %v3754, %v3758
        %v3765 = vadd.s32 %v3757, %v3763
        %vm3766 = vc.u32 %v3764, %v3760
        %v3767 = vsel %vm3766, 1, 0
        %v3768 = vadd.s32 %v3764, %v3760
        %v3769 = vadd.s32 %v3765, %v3767
        %v3770 = vadd.s32 %v3769, %v3759
        %v3771 = vadd.s32 %v3770, %v3761
        %v3772 = vmul.u32 %v3727, %v3718
        %v3773 = vadd.s32 %v3749, %v3768
        %vm3774 = vc.u32 %v3749, %v3768
        %v3775 = vadd.s32 %v3771, 1
        %v3776 = vsel %vm3774, %v3775, %v3771
        %v3777 = vadd.s32 %v3772, %v3776
        %v3778 = vadd.s32 %v3777, 536870912
        %v3779 = vshrl.u32 %v3778, 30
        %v3780 = vshll.u32 %v3779, 30
        %v3781 = vsub.s32 %v3777, %v3780
        %vm3782 = vcmp.lt.s32.totalorder %v3781, 0
        %v3783 = vsub.s32 0, %v3781
        %v3784 = vsel %vm3782, %v3783, %v3781
        %v3785 = vclz %v3784
        %v3786 = vsub.s32 %v3785, 2
        %vm3787 = vcmp.gt.s32.totalorder 0, %v3786
        %v3788 = vsel %vm3787, 0, %v3786
        %v3789 = vsub.s32 32, %v3788
        %v3790 = vshll.u32 %v3781, %v3788
        %v3791 = vshrl.u32 %v3773, %v3789
        %v3792 = vor.u32 %v3790, %v3791
        %v3793 = vsub.s32 4294967266, %v3788
        %v3794 = vadd.s32 %v3793, 127
        %v3795 = vshll.u32 %v3794, 23
        %v3796 = vor.u32 4788187, %v3795
        %v3797 = vand.u32 2147483647, %v3796
        %v3799 = vcvt.s32.f32 %v3792
        %v3800 = vmul.f32 %v3799, %v3797
        %v3801 = vxor.u32 %v3800, 2147483648
        %v3802 = vsel %vm3681, %v3801, %v3800
        %v3803 = vsub.s32 4, %v3779
        %v3804 = vsel %vm3681, %v3803, %v3779
        %v3805 = vsel %vm3680, %v2872, %v3802
        %v3806 = vsel %vm3680, 0, %v3804
        %v3807 = vmul.f32 %v3805, %v3805
        %v3808 = vmul.f32 %v3807, -0.001358992
        %v3809 = vadd.f32 %v3808, 0.041655596
        %v3810 = vmul.f32 %v3807, %v3809
        %v3811 = vadd.f32 %v3810, -0.4999988
        %v3812 = vmul.f32 %v3807, %v3811
        %v3813 = vadd.f32 1.0, %v3812
        %v3814 = vmul.f32 %v3805, %v3805
        %v3815 = vmul.f32 %v3814, -0.00019511016
        %v3816 = vadd.f32 %v3815, 0.008332121
        %v3817 = vmul.f32 %v3814, %v3816
        %v3818 = vadd.f32 %v3817, -0.16666654
        %v3819 = vmul.f32 %v3814, %v3818
        %v3820 = vadd.f32 %v3819, 1.0
        %v3821 = vmul.f32 %v3820, %v3805
        %vm3822 = vweird.f32 %v2872
        %v3823 = vadd.s32 %v3806, 3
        %v3824 = vand.u32 %v3823, 3
        %vm3825 = vcmp.lt.s32.totalorder %v3824, 2
        %vm3826 = vcmp.eq.s32.totalorder %v3824, 0
        %v3827 = vxor.u32 %v3821, 2147483648
        %v3828 = vsel %vm3826, %v3813, %v3827
        %vm3829 = vcmp.eq.s32.totalorder %v3824, 2
        %v3830 = vxor.u32 %v3813, 2147483648
        %v3831 = vsel %vm3829, %v3830, %v3821
        %v3832 = vsel %vm3825, %v3828, %v3831
        %v3833 = vsel %vm3822, nan, %v3832
        %v3834 = vand.u32 2147483647, %v2875
        %vm3835 = vcmp.le.f32.partialorder %v3834, 0.7853982
        %vm3836 = vcmp.lt.s32.totalorder %v2875, 0
        %v3837 = vand.u32 %v2875, 2139095040
        %v3838 = vshrl.u32 %v3837, 23
        %v3839 = vsub.s32 %v3838, 127
        %v3840 = vand.u32 2147483647, %v2875
        %v3841 = vand.u32 %v3840, 8388607
        %v3842 = vor.u32 %v3841, 8388608
        %v3843 = vsub.s32 0, %v3842
        %v3844 = vadd.s32 %v3839, 1
        %vm3845 = vcmp.gt.s32.totalorder %v3844, 0
        %v3846 = vsel %vm3845, %v3844, 0
        %v3847 = vshrl.u32 %v3846, 5
        %v3848 = vand.u32 %v3846, 31
        %v3849 = vsub.s32 32, %v3848
        %v3850 = vshrl.u32 683565275, %v3849
        %v3851 = vshll.u32 683565275, %v3848
        %v3852 = vshrl.u32 2475754826, %v3849
        %v3853 = vor.u32 %v3851, %v3852
        %v3854 = vshll.u32 2475754826, %v3848
        %v3855 = vshrl.u32 2131351028, %v3849
        %v3856 = vor.u32 %v3854, %v3855
        %v3857 = vshll.u32 2131351028, %v3848
        %v3858 = vshrl.u32 2102212464, %v3849
        %v3859 = vor.u32 %v3857, %v3858
        %v3860 = vshll.u32 2102212464, %v3848
        %v3861 = vshrl.u32 920167782, %v3849
        %v3862 = vor.u32 %v3860, %v3861
        %v3863 = vshll.u32 920167782, %v3848
        %v3864 = vshrl.u32 1326507024, %v3849
        %v3865 = vor.u32 %v3863, %v3864
        %vm3866 = vcmp.lt.s32.totalorder %v3847, 1
        %vm3867 = vcmp.lt.s32.totalorder %v3847, 2
        %vm3868 = vcmp.lt.s32.totalorder %v3847, 3
        %vm3869 = vcmp.lt.s32.totalorder %v3847, 4
        %v3870 = vsel %vm3866, %v3850, %v3853
        %v3871 = vsel %vm3869, %v3859, 2102212464
        %v3872 = vsel %vm3868, %v3856, %v3871
        %v3873 = vsel %vm3867, %v3870, %v3872
        %v3874 = vsel %vm3866, %v3853, %v3856
        %v3875 = vsel %vm3869, %v3862, 920167782
        %v3876 = vsel %vm3868, %v3859, %v3875
        %v3877 = vsel %vm3867, %v3874, %v3876
        %v3878 = vsel %vm3866, %v3856, %v3859
        %v3879 = vsel %vm3869, %v3865, 1326507024
        %v3880 = vsel %vm3868, %v3862, %v3879
        %v3881 = vsel %vm3867, %v3878, %v3880
        %v3882 = vshll.u32 %v3842, 8
        %v3883 = vand.u32 %v3882, 65535
        %v3884 = vshrl.u32 %v3882, 16
        %v3885 = vand.u32 %v3881, 65535
        %v3886 = vshrl.u32 %v3881, 16
        %v3887 = vmul.u32 %v3883, %v3885
        %v3888 = vmul.u32 %v3883, %v3886
        %v3889 = vmul.u32 %v3884, %v3885
        %v3890 = vmul.u32 %v3884, %v3886
        %v3891 = vshll.u32 %v3888, 16
        %v3892 = vshrl.u32 %v3888, 16
        %v3893 = vshll.u32 %v3889, 16
        %v3894 = vshrl.u32 %v3889, 16
        %vm3895 = vc.u32 %v3887, %v3891
        %v3896 = vsel %vm3895, 1, 0
        %v3897 = vadd.s32 %v3887, %v3891
        %v3898 = vadd.s32 %v3890, %v3896
        %vm3899 = vc.u32 %v3897, %v3893
        %v3900 = vsel %vm3899, 1, 0
        %v3901 = vadd.s32 %v3897, %v3893
        %v3902 = vadd.s32 %v3898, %v3900
        %v3903 = vadd.s32 %v3902, %v3892
        %v3904 = vadd.s32 %v3903, %v3894
        %v3905 = vand.u32 %v3882, 65535
        %v3906 = vshrl.u32 %v3882, 16
        %v3907 = vand.u32 %v3877, 65535
        %v3908 = vshrl.u32 %v3877, 16
        %v3909 = vmul.u32 %v3905, %v3907
        %v3910 = vmul.u32 %v3905, %v3908
        %v3911 = vmul.u32 %v3906, %v3907
        %v3912 = vmul.u32 %v3906, %v3908
        %v3913 = vshll.u32 %v3910, 16
        %v3914 = vshrl.u32 %v3910, 16
        %v3915 = vshll.u32 %v3911, 16
        %v3916 = vshrl.u32 %v3911, 16
        %vm3917 = vc.u32 %v3909, %v3913
        %v3918 = vsel %vm3917, 1, 0
        %v3919 = vadd.s32 %v3909, %v3913
        %v3920 = vadd.s32 %v3912, %v3918
        %vm3921 = vc.u32 %v3919, %v3915
        %v3922 = vsel %vm3921, 1, 0
        %v3923 = vadd.s32 %v3919, %v3915
        %v3924 = vadd.s32 %v3920, %v3922
        %v3925 = vadd.s32 %v3924, %v3914
        %v3926 = vadd.s32 %v3925, %v3916
        %v3927 = vmul.u32 %v3882, %v3873
        %v3928 = vadd.s32 %v3904, %v3923
        %vm3929 = vc.u32 %v3904, %v3923
        %v3930 = vadd.s32 %v3926, 1
        %v3931 = vsel %vm3929, %v3930, %v3926
        %v3932 = vadd.s32 %v3927, %v3931
        %v3933 = vadd.s32 %v3932, 536870912
        %v3934 = vshrl.u32 %v3933, 30
        %v3935 = vshll.u32 %v3934, 30
        %v3936 = vsub.s32 %v3932, %v3935
        %vm3937 = vcmp.lt.s32.totalorder %v3936, 0
        %v3938 = vsub.s32 0, %v3936
        %v3939 = vsel %vm3937, %v3938, %v3936
        %v3940 = vclz %v3939
        %v3941 = vsub.s32 %v3940, 2
        %vm3942 = vcmp.gt.s32.totalorder 0, %v3941
        %v3943 = vsel %vm3942, 0, %v3941
        %v3944 = vsub.s32 32, %v3943
        %v3945 = vshll.u32 %v3936, %v3943
        %v3946 = vshrl.u32 %v3928, %v3944
        %v3947 = vor.u32 %v3945, %v3946
        %v3948 = vsub.s32 4294967266, %v3943
        %v3949 = vadd.s32 %v3948, 127
        %v3950 = vshll.u32 %v3949, 23
        %v3951 = vor.u32 4788187, %v3950
        %v3952 = vand.u32 2147483647, %v3951
        %v3954 = vcvt.s32.f32 %v3947
        %v3955 = vmul.f32 %v3954, %v3952
        %v3956 = vxor.u32 %v3955, 2147483648
        %v3957 = vsel %vm3836, %v3956, %v3955
        %v3958 = vsub.s32 4, %v3934
        %v3959 = vsel %vm3836, %v3958, %v3934
        %v3960 = vsel %vm3835, %v2875, %v3957
        %v3961 = vsel %vm3835, 0, %v3959
        %v3962 = vmul.f32 %v3960, %v3960
        %v3963 = vmul.f32 %v3962, -0.001358992
        %v3964 = vadd.f32 %v3963, 0.041655596
        %v3965 = vmul.f32 %v3962, %v3964
        %v3966 = vadd.f32 %v3965, -0.4999988
        %v3967 = vmul.f32 %v3962, %v3966
        %v3968 = vadd.f32 1.0, %v3967
        %v3969 = vmul.f32 %v3960, %v3960
        %v3970 = vmul.f32 %v3969, -0.00019511016
        %v3971 = vadd.f32 %v3970, 0.008332121
        %v3972 = vmul.f32 %v3969, %v3971
        %v3973 = vadd.f32 %v3972, -0.16666654
        %v3974 = vmul.f32 %v3969, %v3973
        %v3975 = vadd.f32 %v3974, 1.0
        %v3976 = vmul.f32 %v3975, %v3960
        %vm3977 = vweird.f32 %v2875
        %v3978 = vadd.s32 %v3961, 3
        %v3979 = vand.u32 %v3978, 3
        %vm3980 = vcmp.lt.s32.totalorder %v3979, 2
        %vm3981 = vcmp.eq.s32.totalorder %v3979, 0
        %v3982 = vxor.u32 %v3976, 2147483648
        %v3983 = vsel %vm3981, %v3968, %v3982
        %vm3984 = vcmp.eq.s32.totalorder %v3979, 2
        %v3985 = vxor.u32 %v3968, 2147483648
        %v3986 = vsel %vm3984, %v3985, %v3976
        %v3987 = vsel %vm3980, %v3983, %v3986
        %v3988 = vsel %vm3977, nan, %v3987
        %v3989 = vand.u32 2147483647, %v2878
        %vm3990 = vcmp.le.f32.partialorder %v3989, 0.7853982
        %vm3991 = vcmp.lt.s32.totalorder %v2878, 0
        %v3992 = vand.u32 %v2878, 2139095040
        %v3993 = vshrl.u32 %v3992, 23
        %v3994 = vsub.s32 %v3993, 127
        %v3995 = vand.u32 2147483647, %v2878
        %v3996 = vand.u32 %v3995, 8388607
        %v3997 = vor.u32 %v3996, 8388608
        %v3998 = vsub.s32 0, %v3997
        %v3999 = vadd.s32 %v3994, 1
        %vm4000 = vcmp.gt.s32.totalorder %v3999, 0
        %v4001 = vsel %vm4000, %v3999, 0
        %v4002 = vshrl.u32 %v4001, 5
        %v4003 = vand.u32 %v4001, 31
        %v4004 = vsub.s32 32, %v4003
        %v4005 = vshrl.u32 683565275, %v4004
        %v4006 = vshll.u32 683565275, %v4003
        %v4007 = vshrl.u32 2475754826, %v4004
        %v4008 = vor.u32 %v4006, %v4007
        %v4009 = vshll.u32 2475754826, %v4003
        %v4010 = vshrl.u32 2131351028, %v4004
        %v4011 = vor.u32 %v4009, %v4010
        %v4012 = vshll.u32 2131351028, %v4003
        %v4013 = vshrl.u32 2102212464, %v4004
        %v4014 = vor.u32 %v4012, %v4013
        %v4015 = vshll.u32 2102212464, %v4003
        %v4016 = vshrl.u32 920167782, %v4004
        %v4017 = vor.u32 %v4015, %v4016
        %v4018 = vshll.u32 920167782, %v4003
        %v4019 = vshrl.u32 1326507024, %v4004
        %v4020 = vor.u32 %v4018, %v4019
        %vm4021 = vcmp.lt.s32.totalorder %v4002, 1
        %vm4022 = vcmp.lt.s32.totalorder %v4002, 2
        %vm4023 = vcmp.lt.s32.totalorder %v4002, 3
        %vm4024 = vcmp.lt.s32.totalorder %v4002, 4
        %v4025 = vsel %vm4021, %v4005, %v4008
        %v4026 = vsel %vm4024, %v4014, 2102212464
        %v4027 = vsel %vm4023, %v4011, %v4026
        %v4028 = vsel %vm4022, %v4025, %v4027
        %v4029 = vsel %vm4021, %v4008, %v4011
        %v4030 = vsel %vm4024, %v4017, 920167782
        %v4031 = vsel %vm4023, %v4014, %v4030
        %v4032 = vsel %vm4022, %v4029, %v4031
        %v4033 = vsel %vm4021, %v4011, %v4014
        %v4034 = vsel %vm4024, %v4020, 1326507024
        %v4035 = vsel %vm4023, %v4017, %v4034
        %v4036 = vsel %vm4022, %v4033, %v4035
        %v4037 = vshll.u32 %v3997, 8
        %v4038 = vand.u32 %v4037, 65535
        %v4039 = vshrl.u32 %v4037, 16
        %v4040 = vand.u32 %v4036, 65535
        %v4041 = vshrl.u32 %v4036, 16
        %v4042 = vmul.u32 %v4038, %v4040
        %v4043 = vmul.u32 %v4038, %v4041
        %v4044 = vmul.u32 %v4039, %v4040
        %v4045 = vmul.u32 %v4039, %v4041
        %v4046 = vshll.u32 %v4043, 16
        %v4047 = vshrl.u32 %v4043, 16
        %v4048 = vshll.u32 %v4044, 16
        %v4049 = vshrl.u32 %v4044, 16
        %vm4050 = vc.u32 %v4042, %v4046
        %v4051 = vsel %vm4050, 1, 0
        %v4052 = vadd.s32 %v4042, %v4046
        %v4053 = vadd.s32 %v4045, %v4051
        %vm4054 = vc.u32 %v4052, %v4048
        %v4055 = vsel %vm4054, 1, 0
        %v4056 = vadd.s32 %v4052, %v4048
        %v4057 = vadd.s32 %v4053, %v4055
        %v4058 = vadd.s32 %v4057, %v4047
        %v4059 = vadd.s32 %v4058, %v4049
        %v4060 = vand.u32 %v4037, 65535
        %v4061 = vshrl.u32 %v4037, 16
        %v4062 = vand.u32 %v4032, 65535
        %v4063 = vshrl.u32 %v4032, 16
        %v4064 = vmul.u32 %v4060, %v4062
        %v4065 = vmul.u32 %v4060, %v4063
        %v4066 = vmul.u32 %v4061, %v4062
        %v4067 = vmul.u32 %v4061, %v4063
        %v4068 = vshll.u32 %v4065, 16
        %v4069 = vshrl.u32 %v4065, 16
        %v4070 = vshll.u32 %v4066, 16
        %v4071 = vshrl.u32 %v4066, 16
        %vm4072 = vc.u32 %v4064, %v4068
        %v4073 = vsel %vm4072, 1, 0
        %v4074 = vadd.s32 %v4064, %v4068
        %v4075 = vadd.s32 %v4067, %v4073
        %vm4076 = vc.u32 %v4074, %v4070
        %v4077 = vsel %vm4076, 1, 0
        %v4078 = vadd.s32 %v4074, %v4070
        %v4079 = vadd.s32 %v4075, %v4077
        %v4080 = vadd.s32 %v4079, %v4069
        %v4081 = vadd.s32 %v4080, %v4071
        %v4082 = vmul.u32 %v4037, %v4028
        %v4083 = vadd.s32 %v4059, %v4078
        %vm4084 = vc.u32 %v4059, %v4078
        %v4085 = vadd.s32 %v4081, 1
        %v4086 = vsel %vm4084, %v4085, %v4081
        %v4087 = vadd.s32 %v4082, %v4086
        %v4088 = vadd.s32 %v4087, 536870912
        %v4089 = vshrl.u32 %v4088, 30
        %v4090 = vshll.u32 %v4089, 30
        %v4091 = vsub.s32 %v4087, %v4090
        %vm4092 = vcmp.lt.s32.totalorder %v4091, 0
        %v4093 = vsub.s32 0, %v4091
        %v4094 = vsel %vm4092, %v4093, %v4091
        %v4095 = vclz %v4094
        %v4096 = vsub.s32 %v4095, 2
        %vm4097 = vcmp.gt.s32.totalorder 0, %v4096
        %v4098 = vsel %vm4097, 0, %v4096
        %v4099 = vsub.s32 32, %v4098
        %v4100 = vshll.u32 %v4091, %v4098
        %v4101 = vshrl.u32 %v4083, %v4099
        %v4102 = vor.u32 %v4100, %v4101
        %v4103 = vsub.s32 4294967266, %v4098
        %v4104 = vadd.s32 %v4103, 127
        %v4105 = vshll.u32 %v4104, 23
        %v4106 = vor.u32 4788187, %v4105
        %v4107 = vand.u32 2147483647, %v4106
        %v4109 = vcvt.s32.f32 %v4102
        %v4110 = vmul.f32 %v4109, %v4107
        %v4111 = vxor.u32 %v4110, 2147483648
        %v4112 = vsel %vm3991, %v4111, %v4110
        %v4113 = vsub.s32 4, %v4089
        %v4114 = vsel %vm3991, %v4113, %v4089
        %v4115 = vsel %vm3990, %v2878, %v4112
        %v4116 = vsel %vm3990, 0, %v4114
        %v4117 = vmul.f32 %v4115, %v4115
        %v4118 = vmul.f32 %v4117, -0.001358992
        %v4119 = vadd.f32 %v4118, 0.041655596
        %v4120 = vmul.f32 %v4117, %v4119
        %v4121 = vadd.f32 %v4120, -0.4999988
        %v4122 = vmul.f32 %v4117, %v4121
        %v4123 = vadd.f32 1.0, %v4122
        %v4124 = vmul.f32 %v4115, %v4115
        %v4125 = vmul.f32 %v4124, -0.00019511016
        %v4126 = vadd.f32 %v4125, 0.008332121
        %v4127 = vmul.f32 %v4124, %v4126
        %v4128 = vadd.f32 %v4127, -0.16666654
        %v4129 = vmul.f32 %v4124, %v4128
        %v4130 = vadd.f32 %v4129, 1.0
        %v4131 = vmul.f32 %v4130, %v4115
        %vm4132 = vweird.f32 %v2878
        %v4133 = vadd.s32 %v4116, 3
        %v4134 = vand.u32 %v4133, 3
        %vm4135 = vcmp.lt.s32.totalorder %v4134, 2
        %vm4136 = vcmp.eq.s32.totalorder %v4134, 0
        %v4137 = vxor.u32 %v4131, 2147483648
        %v4138 = vsel %vm4136, %v4123, %v4137
        %vm4139 = vcmp.eq.s32.totalorder %v4134, 2
        %v4140 = vxor.u32 %v4123, 2147483648
        %v4141 = vsel %vm4139, %v4140, %v4131
        %v4142 = vsel %vm4135, %v4138, %v4141
        %v4143 = vsel %vm4132, nan, %v4142
        %v4144 = vand.u32 2147483647, %v2881
        %vm4145 = vcmp.le.f32.partialorder %v4144, 0.7853982
        %vm4146 = vcmp.lt.s32.totalorder %v2881, 0
        %v4147 = vand.u32 %v2881, 2139095040
        %v4148 = vshrl.u32 %v4147, 23
        %v4149 = vsub.s32 %v4148, 127
        %v4150 = vand.u32 2147483647, %v2881
        %v4151 = vand.u32 %v4150, 8388607
        %v4152 = vor.u32 %v4151, 8388608
        %v4153 = vsub.s32 0, %v4152
        %v4154 = vadd.s32 %v4149, 1
        %vm4155 = vcmp.gt.s32.totalorder %v4154, 0
        %v4156 = vsel %vm4155, %v4154, 0
        %v4157 = vshrl.u32 %v4156, 5
        %v4158 = vand.u32 %v4156, 31
        %v4159 = vsub.s32 32, %v4158
        %v4160 = vshrl.u32 683565275, %v4159
        %v4161 = vshll.u32 683565275, %v4158
        %v4162 = vshrl.u32 2475754826, %v4159
        %v4163 = vor.u32 %v4161, %v4162
        %v4164 = vshll.u32 2475754826, %v4158
        %v4165 = vshrl.u32 2131351028, %v4159
        %v4166 = vor.u32 %v4164, %v4165
        %v4167 = vshll.u32 2131351028, %v4158
        %v4168 = vshrl.u32 2102212464, %v4159
        %v4169 = vor.u32 %v4167, %v4168
        %v4170 = vshll.u32 2102212464, %v4158
        %v4171 = vshrl.u32 920167782, %v4159
        %v4172 = vor.u32 %v4170, %v4171
        %v4173 = vshll.u32 920167782, %v4158
        %v4174 = vshrl.u32 1326507024, %v4159
        %v4175 = vor.u32 %v4173, %v4174
        %vm4176 = vcmp.lt.s32.totalorder %v4157, 1
        %vm4177 = vcmp.lt.s32.totalorder %v4157, 2
        %vm4178 = vcmp.lt.s32.totalorder %v4157, 3
        %vm4179 = vcmp.lt.s32.totalorder %v4157, 4
        %v4180 = vsel %vm4176, %v4160, %v4163
        %v4181 = vsel %vm4179, %v4169, 2102212464
        %v4182 = vsel %vm4178, %v4166, %v4181
        %v4183 = vsel %vm4177, %v4180, %v4182
        %v4184 = vsel %vm4176, %v4163, %v4166
        %v4185 = vsel %vm4179, %v4172, 920167782
        %v4186 = vsel %vm4178, %v4169, %v4185
        %v4187 = vsel %vm4177, %v4184, %v4186
        %v4188 = vsel %vm4176, %v4166, %v4169
        %v4189 = vsel %vm4179, %v4175, 1326507024
        %v4190 = vsel %vm4178, %v4172, %v4189
        %v4191 = vsel %vm4177, %v4188, %v4190
        %v4192 = vshll.u32 %v4152, 8
        %v4193 = vand.u32 %v4192, 65535
        %v4194 = vshrl.u32 %v4192, 16
        %v4195 = vand.u32 %v4191, 65535
        %v4196 = vshrl.u32 %v4191, 16
        %v4197 = vmul.u32 %v4193, %v4195
        %v4198 = vmul.u32 %v4193, %v4196
        %v4199 = vmul.u32 %v4194, %v4195
        %v4200 = vmul.u32 %v4194, %v4196
        %v4201 = vshll.u32 %v4198, 16
        %v4202 = vshrl.u32 %v4198, 16
        %v4203 = vshll.u32 %v4199, 16
        %v4204 = vshrl.u32 %v4199, 16
        %vm4205 = vc.u32 %v4197, %v4201
        %v4206 = vsel %vm4205, 1, 0
        %v4207 = vadd.s32 %v4197, %v4201
        %v4208 = vadd.s32 %v4200, %v4206
        %vm4209 = vc.u32 %v4207, %v4203
        %v4210 = vsel %vm4209, 1, 0
        %v4211 = vadd.s32 %v4207, %v4203
        %v4212 = vadd.s32 %v4208, %v4210
        %v4213 = vadd.s32 %v4212, %v4202
        %v4214 = vadd.s32 %v4213, %v4204
        %v4215 = vand.u32 %v4192, 65535
        %v4216 = vshrl.u32 %v4192, 16
        %v4217 = vand.u32 %v4187, 65535
        %v4218 = vshrl.u32 %v4187, 16
        %v4219 = vmul.u32 %v4215, %v4217
        %v4220 = vmul.u32 %v4215, %v4218
        %v4221 = vmul.u32 %v4216, %v4217
        %v4222 = vmul.u32 %v4216, %v4218
        %v4223 = vshll.u32 %v4220, 16
        %v4224 = vshrl.u32 %v4220, 16
        %v4225 = vshll.u32 %v4221, 16
        %v4226 = vshrl.u32 %v4221, 16
        %vm4227 = vc.u32 %v4219, %v4223
        %v4228 = vsel %vm4227, 1, 0
        %v4229 = vadd.s32 %v4219, %v4223
        %v4230 = vadd.s32 %v4222, %v4228
        %vm4231 = vc.u32 %v4229, %v4225
        %v4232 = vsel %vm4231, 1, 0
        %v4233 = vadd.s32 %v4229, %v4225
        %v4234 = vadd.s32 %v4230, %v4232
        %v4235 = vadd.s32 %v4234, %v4224
        %v4236 = vadd.s32 %v4235, %v4226
        %v4237 = vmul.u32 %v4192, %v4183
        %v4238 = vadd.s32 %v4214, %v4233
        %vm4239 = vc.u32 %v4214, %v4233
        %v4240 = vadd.s32 %v4236, 1
        %v4241 = vsel %vm4239, %v4240, %v4236
        %v4242 = vadd.s32 %v4237, %v4241
        %v4243 = vadd.s32 %v4242, 536870912
        %v4244 = vshrl.u32 %v4243, 30
        %v4245 = vshll.u32 %v4244, 30
        %v4246 = vsub.s32 %v4242, %v4245
        %vm4247 = vcmp.lt.s32.totalorder %v4246, 0
        %v4248 = vsub.s32 0, %v4246
        %v4249 = vsel %vm4247, %v4248, %v4246
        %v4250 = vclz %v4249
        %v4251 = vsub.s32 %v4250, 2
        %vm4252 = vcmp.gt.s32.totalorder 0, %v4251
        %v4253 = vsel %vm4252, 0, %v4251
        %v4254 = vsub.s32 32, %v4253
        %v4255 = vshll.u32 %v4246, %v4253
        %v4256 = vshrl.u32 %v4238, %v4254
        %v4257 = vor.u32 %v4255, %v4256
        %v4258 = vsub.s32 4294967266, %v4253
        %v4259 = vadd.s32 %v4258, 127
        %v4260 = vshll.u32 %v4259, 23
        %v4261 = vor.u32 4788187, %v4260
        %v4262 = vand.u32 2147483647, %v4261
        %v4264 = vcvt.s32.f32 %v4257
        %v4265 = vmul.f32 %v4264, %v4262
        %v4266 = vxor.u32 %v4265, 2147483648
        %v4267 = vsel %vm4146, %v4266, %v4265
        %v4268 = vsub.s32 4, %v4244
        %v4269 = vsel %vm4146, %v4268, %v4244
        %v4270 = vsel %vm4145, %v2881, %v4267
        %v4271 = vsel %vm4145, 0, %v4269
        %v4272 = vmul.f32 %v4270, %v4270
        %v4273 = vmul.f32 %v4272, -0.001358992
        %v4274 = vadd.f32 %v4273, 0.041655596
        %v4275 = vmul.f32 %v4272, %v4274
        %v4276 = vadd.f32 %v4275, -0.4999988
        %v4277 = vmul.f32 %v4272, %v4276
        %v4278 = vadd.f32 1.0, %v4277
        %v4279 = vmul.f32 %v4270, %v4270
        %v4280 = vmul.f32 %v4279, -0.00019511016
        %v4281 = vadd.f32 %v4280, 0.008332121
        %v4282 = vmul.f32 %v4279, %v4281
        %v4283 = vadd.f32 %v4282, -0.16666654
        %v4284 = vmul.f32 %v4279, %v4283
        %v4285 = vadd.f32 %v4284, 1.0
        %v4286 = vmul.f32 %v4285, %v4270
        %vm4287 = vweird.f32 %v2881
        %v4288 = vadd.s32 %v4271, 3
        %v4289 = vand.u32 %v4288, 3
        %vm4290 = vcmp.lt.s32.totalorder %v4289, 2
        %vm4291 = vcmp.eq.s32.totalorder %v4289, 0
        %v4292 = vxor.u32 %v4286, 2147483648
        %v4293 = vsel %vm4291, %v4278, %v4292
        %vm4294 = vcmp.eq.s32.totalorder %v4289, 2
        %v4295 = vxor.u32 %v4278, 2147483648
        %v4296 = vsel %vm4294, %v4295, %v4286
        %v4297 = vsel %vm4290, %v4293, %v4296
        %v4298 = vsel %vm4287, nan, %v4297
        %v4299 = vand.u32 2147483647, %v2884
        %vm4300 = vcmp.le.f32.partialorder %v4299, 0.7853982
        %vm4301 = vcmp.lt.s32.totalorder %v2884, 0
        %v4302 = vand.u32 %v2884, 2139095040
        %v4303 = vshrl.u32 %v4302, 23
        %v4304 = vsub.s32 %v4303, 127
        %v4305 = vand.u32 2147483647, %v2884
        %v4306 = vand.u32 %v4305, 8388607
        %v4307 = vor.u32 %v4306, 8388608
        %v4308 = vsub.s32 0, %v4307
        %v4309 = vadd.s32 %v4304, 1
        %vm4310 = vcmp.gt.s32.totalorder %v4309, 0
        %v4311 = vsel %vm4310, %v4309, 0
        %v4312 = vshrl.u32 %v4311, 5
        %v4313 = vand.u32 %v4311, 31
        %v4314 = vsub.s32 32, %v4313
        %v4315 = vshrl.u32 683565275, %v4314
        %v4316 = vshll.u32 683565275, %v4313
        %v4317 = vshrl.u32 2475754826, %v4314
        %v4318 = vor.u32 %v4316, %v4317
        %v4319 = vshll.u32 2475754826, %v4313
        %v4320 = vshrl.u32 2131351028, %v4314
        %v4321 = vor.u32 %v4319, %v4320
        %v4322 = vshll.u32 2131351028, %v4313
        %v4323 = vshrl.u32 2102212464, %v4314
        %v4324 = vor.u32 %v4322, %v4323
        %v4325 = vshll.u32 2102212464, %v4313
        %v4326 = vshrl.u32 920167782, %v4314
        %v4327 = vor.u32 %v4325, %v4326
        %v4328 = vshll.u32 920167782, %v4313
        %v4329 = vshrl.u32 1326507024, %v4314
        %v4330 = vor.u32 %v4328, %v4329
        %vm4331 = vcmp.lt.s32.totalorder %v4312, 1
        %vm4332 = vcmp.lt.s32.totalorder %v4312, 2
        %vm4333 = vcmp.lt.s32.totalorder %v4312, 3
        %vm4334 = vcmp.lt.s32.totalorder %v4312, 4
        %v4335 = vsel %vm4331, %v4315, %v4318
        %v4336 = vsel %vm4334, %v4324, 2102212464
        %v4337 = vsel %vm4333, %v4321, %v4336
        %v4338 = vsel %vm4332, %v4335, %v4337
        %v4339 = vsel %vm4331, %v4318, %v4321
        %v4340 = vsel %vm4334, %v4327, 920167782
        %v4341 = vsel %vm4333, %v4324, %v4340
        %v4342 = vsel %vm4332, %v4339, %v4341
        %v4343 = vsel %vm4331, %v4321, %v4324
        %v4344 = vsel %vm4334, %v4330, 1326507024
        %v4345 = vsel %vm4333, %v4327, %v4344
        %v4346 = vsel %vm4332, %v4343, %v4345
        %v4347 = vshll.u32 %v4307, 8
        %v4348 = vand.u32 %v4347, 65535
        %v4349 = vshrl.u32 %v4347, 16
        %v4350 = vand.u32 %v4346, 65535
        %v4351 = vshrl.u32 %v4346, 16
        %v4352 = vmul.u32 %v4348, %v4350
        %v4353 = vmul.u32 %v4348, %v4351
        %v4354 = vmul.u32 %v4349, %v4350
        %v4355 = vmul.u32 %v4349, %v4351
        %v4356 = vshll.u32 %v4353, 16
        %v4357 = vshrl.u32 %v4353, 16
        %v4358 = vshll.u32 %v4354, 16
        %v4359 = vshrl.u32 %v4354, 16
        %vm4360 = vc.u32 %v4352, %v4356
        %v4361 = vsel %vm4360, 1, 0
        %v4362 = vadd.s32 %v4352, %v4356
        %v4363 = vadd.s32 %v4355, %v4361
        %vm4364 = vc.u32 %v4362, %v4358
        %v4365 = vsel %vm4364, 1, 0
        %v4366 = vadd.s32 %v4362, %v4358
        %v4367 = vadd.s32 %v4363, %v4365
        %v4368 = vadd.s32 %v4367, %v4357
        %v4369 = vadd.s32 %v4368, %v4359
        %v4370 = vand.u32 %v4347, 65535
        %v4371 = vshrl.u32 %v4347, 16
        %v4372 = vand.u32 %v4342, 65535
        %v4373 = vshrl.u32 %v4342, 16
        %v4374 = vmul.u32 %v4370, %v4372
        %v4375 = vmul.u32 %v4370, %v4373
        %v4376 = vmul.u32 %v4371, %v4372
        %v4377 = vmul.u32 %v4371, %v4373
        %v4378 = vshll.u32 %v4375, 16
        %v4379 = vshrl.u32 %v4375, 16
        %v4380 = vshll.u32 %v4376, 16
        %v4381 = vshrl.u32 %v4376, 16
        %vm4382 = vc.u32 %v4374, %v4378
        %v4383 = vsel %vm4382, 1, 0
        %v4384 = vadd.s32 %v4374, %v4378
        %v4385 = vadd.s32 %v4377, %v4383
        %vm4386 = vc.u32 %v4384, %v4380
        %v4387 = vsel %vm4386, 1, 0
        %v4388 = vadd.s32 %v4384, %v4380
        %v4389 = vadd.s32 %v4385, %v4387
        %v4390 = vadd.s32 %v4389, %v4379
        %v4391 = vadd.s32 %v4390, %v4381
        %v4392 = vmul.u32 %v4347, %v4338
        %v4393 = vadd.s32 %v4369, %v4388
        %vm4394 = vc.u32 %v4369, %v4388
        %v4395 = vadd.s32 %v4391, 1
        %v4396 = vsel %vm4394, %v4395, %v4391
        %v4397 = vadd.s32 %v4392, %v4396
        %v4398 = vadd.s32 %v4397, 536870912
        %v4399 = vshrl.u32 %v4398, 30
        %v4400 = vshll.u32 %v4399, 30
        %v4401 = vsub.s32 %v4397, %v4400
        %vm4402 = vcmp.lt.s32.totalorder %v4401, 0
        %v4403 = vsub.s32 0, %v4401
        %v4404 = vsel %vm4402, %v4403, %v4401
        %v4405 = vclz %v4404
        %v4406 = vsub.s32 %v4405, 2
        %vm4407 = vcmp.gt.s32.totalorder 0, %v4406
        %v4408 = vsel %vm4407, 0, %v4406
        %v4409 = vsub.s32 32, %v4408
        %v4410 = vshll.u32 %v4401, %v4408
        %v4411 = vshrl.u32 %v4393, %v4409
        %v4412 = vor.u32 %v4410, %v4411
        %v4413 = vsub.s32 4294967266, %v4408
        %v4414 = vadd.s32 %v4413, 127
        %v4415 = vshll.u32 %v4414, 23
        %v4416 = vor.u32 4788187, %v4415
        %v4417 = vand.u32 2147483647, %v4416
        %v4419 = vcvt.s32.f32 %v4412
        %v4420 = vmul.f32 %v4419, %v4417
        %v4421 = vxor.u32 %v4420, 2147483648
        %v4422 = vsel %vm4301, %v4421, %v4420
        %v4423 = vsub.s32 4, %v4399
        %v4424 = vsel %vm4301, %v4423, %v4399
        %v4425 = vsel %vm4300, %v2884, %v4422
        %v4426 = vsel %vm4300, 0, %v4424
        %v4427 = vmul.f32 %v4425, %v4425
        %v4428 = vmul.f32 %v4427, -0.001358992
        %v4429 = vadd.f32 %v4428, 0.041655596
        %v4430 = vmul.f32 %v4427, %v4429
        %v4431 = vadd.f32 %v4430, -0.4999988
        %v4432 = vmul.f32 %v4427, %v4431
        %v4433 = vadd.f32 1.0, %v4432
        %v4434 = vmul.f32 %v4425, %v4425
        %v4435 = vmul.f32 %v4434, -0.00019511016
        %v4436 = vadd.f32 %v4435, 0.008332121
        %v4437 = vmul.f32 %v4434, %v4436
        %v4438 = vadd.f32 %v4437, -0.16666654
        %v4439 = vmul.f32 %v4434, %v4438
        %v4440 = vadd.f32 %v4439, 1.0
        %v4441 = vmul.f32 %v4440, %v4425
        %vm4442 = vweird.f32 %v2884
        %v4443 = vadd.s32 %v4426, 3
        %v4444 = vand.u32 %v4443, 3
        %vm4445 = vcmp.lt.s32.totalorder %v4444, 2
        %vm4446 = vcmp.eq.s32.totalorder %v4444, 0
        %v4447 = vxor.u32 %v4441, 2147483648
        %v4448 = vsel %vm4446, %v4433, %v4447
        %vm4449 = vcmp.eq.s32.totalorder %v4444, 2
        %v4450 = vxor.u32 %v4433, 2147483648
        %v4451 = vsel %vm4449, %v4450, %v4441
        %v4452 = vsel %vm4445, %v4448, %v4451
        %v4453 = vsel %vm4442, nan, %v4452
        %v4454 = vand.u32 2147483647, %v2887
        %vm4455 = vcmp.le.f32.partialorder %v4454, 0.7853982
        %vm4456 = vcmp.lt.s32.totalorder %v2887, 0
        %v4457 = vand.u32 %v2887, 2139095040
        %v4458 = vshrl.u32 %v4457, 23
        %v4459 = vsub.s32 %v4458, 127
        %v4460 = vand.u32 2147483647, %v2887
        %v4461 = vand.u32 %v4460, 8388607
        %v4462 = vor.u32 %v4461, 8388608
        %v4463 = vsub.s32 0, %v4462
        %v4464 = vadd.s32 %v4459, 1
        %vm4465 = vcmp.gt.s32.totalorder %v4464, 0
        %v4466 = vsel %vm4465, %v4464, 0
        %v4467 = vshrl.u32 %v4466, 5
        %v4468 = vand.u32 %v4466, 31
        %v4469 = vsub.s32 32, %v4468
        %v4470 = vshrl.u32 683565275, %v4469
        %v4471 = vshll.u32 683565275, %v4468
        %v4472 = vshrl.u32 2475754826, %v4469
        %v4473 = vor.u32 %v4471, %v4472
        %v4474 = vshll.u32 2475754826, %v4468
        %v4475 = vshrl.u32 2131351028, %v4469
        %v4476 = vor.u32 %v4474, %v4475
        %v4477 = vshll.u32 2131351028, %v4468
        %v4478 = vshrl.u32 2102212464, %v4469
        %v4479 = vor.u32 %v4477, %v4478
        %v4480 = vshll.u32 2102212464, %v4468
        %v4481 = vshrl.u32 920167782, %v4469
        %v4482 = vor.u32 %v4480, %v4481
        %v4483 = vshll.u32 920167782, %v4468
        %v4484 = vshrl.u32 1326507024, %v4469
        %v4485 = vor.u32 %v4483, %v4484
        %vm4486 = vcmp.lt.s32.totalorder %v4467, 1
        %vm4487 = vcmp.lt.s32.totalorder %v4467, 2
        %vm4488 = vcmp.lt.s32.totalorder %v4467, 3
        %vm4489 = vcmp.lt.s32.totalorder %v4467, 4
        %v4490 = vsel %vm4486, %v4470, %v4473
        %v4491 = vsel %vm4489, %v4479, 2102212464
        %v4492 = vsel %vm4488, %v4476, %v4491
        %v4493 = vsel %vm4487, %v4490, %v4492
        %v4494 = vsel %vm4486, %v4473, %v4476
        %v4495 = vsel %vm4489, %v4482, 920167782
        %v4496 = vsel %vm4488, %v4479, %v4495
        %v4497 = vsel %vm4487, %v4494, %v4496
        %v4498 = vsel %vm4486, %v4476, %v4479
        %v4499 = vsel %vm4489, %v4485, 1326507024
        %v4500 = vsel %vm4488, %v4482, %v4499
        %v4501 = vsel %vm4487, %v4498, %v4500
        %v4502 = vshll.u32 %v4462, 8
        %v4503 = vand.u32 %v4502, 65535
        %v4504 = vshrl.u32 %v4502, 16
        %v4505 = vand.u32 %v4501, 65535
        %v4506 = vshrl.u32 %v4501, 16
        %v4507 = vmul.u32 %v4503, %v4505
        %v4508 = vmul.u32 %v4503, %v4506
        %v4509 = vmul.u32 %v4504, %v4505
        %v4510 = vmul.u32 %v4504, %v4506
        %v4511 = vshll.u32 %v4508, 16
        %v4512 = vshrl.u32 %v4508, 16
        %v4513 = vshll.u32 %v4509, 16
        %v4514 = vshrl.u32 %v4509, 16
        %vm4515 = vc.u32 %v4507, %v4511
        %v4516 = vsel %vm4515, 1, 0
        %v4517 = vadd.s32 %v4507, %v4511
        %v4518 = vadd.s32 %v4510, %v4516
        %vm4519 = vc.u32 %v4517, %v4513
        %v4520 = vsel %vm4519, 1, 0
        %v4521 = vadd.s32 %v4517, %v4513
        %v4522 = vadd.s32 %v4518, %v4520
        %v4523 = vadd.s32 %v4522, %v4512
        %v4524 = vadd.s32 %v4523, %v4514
        %v4525 = vand.u32 %v4502, 65535
        %v4526 = vshrl.u32 %v4502, 16
        %v4527 = vand.u32 %v4497, 65535
        %v4528 = vshrl.u32 %v4497, 16
        %v4529 = vmul.u32 %v4525, %v4527
        %v4530 = vmul.u32 %v4525, %v4528
        %v4531 = vmul.u32 %v4526, %v4527
        %v4532 = vmul.u32 %v4526, %v4528
        %v4533 = vshll.u32 %v4530, 16
        %v4534 = vshrl.u32 %v4530, 16
        %v4535 = vshll.u32 %v4531, 16
        %v4536 = vshrl.u32 %v4531, 16
        %vm4537 = vc.u32 %v4529, %v4533
        %v4538 = vsel %vm4537, 1, 0
        %v4539 = vadd.s32 %v4529, %v4533
        %v4540 = vadd.s32 %v4532, %v4538
        %vm4541 = vc.u32 %v4539, %v4535
        %v4542 = vsel %vm4541, 1, 0
        %v4543 = vadd.s32 %v4539, %v4535
        %v4544 = vadd.s32 %v4540, %v4542
        %v4545 = vadd.s32 %v4544, %v4534
        %v4546 = vadd.s32 %v4545, %v4536
        %v4547 = vmul.u32 %v4502, %v4493
        %v4548 = vadd.s32 %v4524, %v4543
        %vm4549 = vc.u32 %v4524, %v4543
        %v4550 = vadd.s32 %v4546, 1
        %v4551 = vsel %vm4549, %v4550, %v4546
        %v4552 = vadd.s32 %v4547, %v4551
        %v4553 = vadd.s32 %v4552, 536870912
        %v4554 = vshrl.u32 %v4553, 30
        %v4555 = vshll.u32 %v4554, 30
        %v4556 = vsub.s32 %v4552, %v4555
        %vm4557 = vcmp.lt.s32.totalorder %v4556, 0
        %v4558 = vsub.s32 0, %v4556
        %v4559 = vsel %vm4557, %v4558, %v4556
        %v4560 = vclz %v4559
        %v4561 = vsub.s32 %v4560, 2
        %vm4562 = vcmp.gt.s32.totalorder 0, %v4561
        %v4563 = vsel %vm4562, 0, %v4561
        %v4564 = vsub.s32 32, %v4563
        %v4565 = vshll.u32 %v4556, %v4563
        %v4566 = vshrl.u32 %v4548, %v4564
        %v4567 = vor.u32 %v4565, %v4566
        %v4568 = vsub.s32 4294967266, %v4563
        %v4569 = vadd.s32 %v4568, 127
        %v4570 = vshll.u32 %v4569, 23
        %v4571 = vor.u32 4788187, %v4570
        %v4572 = vand.u32 2147483647, %v4571
        %v4574 = vcvt.s32.f32 %v4567
        %v4575 = vmul.f32 %v4574, %v4572
        %v4576 = vxor.u32 %v4575, 2147483648
        %v4577 = vsel %vm4456, %v4576, %v4575
        %v4578 = vsub.s32 4, %v4554
        %v4579 = vsel %vm4456, %v4578, %v4554
        %v4580 = vsel %vm4455, %v2887, %v4577
        %v4581 = vsel %vm4455, 0, %v4579
        %v4582 = vmul.f32 %v4580, %v4580
        %v4583 = vmul.f32 %v4582, -0.001358992
        %v4584 = vadd.f32 %v4583, 0.041655596
        %v4585 = vmul.f32 %v4582, %v4584
        %v4586 = vadd.f32 %v4585, -0.4999988
        %v4587 = vmul.f32 %v4582, %v4586
        %v4588 = vadd.f32 1.0, %v4587
        %v4589 = vmul.f32 %v4580, %v4580
        %v4590 = vmul.f32 %v4589, -0.00019511016
        %v4591 = vadd.f32 %v4590, 0.008332121
        %v4592 = vmul.f32 %v4589, %v4591
        %v4593 = vadd.f32 %v4592, -0.16666654
        %v4594 = vmul.f32 %v4589, %v4593
        %v4595 = vadd.f32 %v4594, 1.0
        %v4596 = vmul.f32 %v4595, %v4580
        %vm4597 = vweird.f32 %v2887
        %v4598 = vadd.s32 %v4581, 3
        %v4599 = vand.u32 %v4598, 3
        %vm4600 = vcmp.lt.s32.totalorder %v4599, 2
        %vm4601 = vcmp.eq.s32.totalorder %v4599, 0
        %v4602 = vxor.u32 %v4596, 2147483648
        %v4603 = vsel %vm4601, %v4588, %v4602
        %vm4604 = vcmp.eq.s32.totalorder %v4599, 2
        %v4605 = vxor.u32 %v4588, 2147483648
        %v4606 = vsel %vm4604, %v4605, %v4596
        %v4607 = vsel %vm4600, %v4603, %v4606
        %v4608 = vsel %vm4597, nan, %v4607
        %v4609 = vand.u32 2147483647, %v2890
        %vm4610 = vcmp.le.f32.partialorder %v4609, 0.7853982
        %vm4611 = vcmp.lt.s32.totalorder %v2890, 0
        %v4612 = vand.u32 %v2890, 2139095040
        %v4613 = vshrl.u32 %v4612, 23
        %v4614 = vsub.s32 %v4613, 127
        %v4615 = vand.u32 2147483647, %v2890
        %v4616 = vand.u32 %v4615, 8388607
        %v4617 = vor.u32 %v4616, 8388608
        %v4618 = vsub.s32 0, %v4617
        %v4619 = vadd.s32 %v4614, 1
        %vm4620 = vcmp.gt.s32.totalorder %v4619, 0
        %v4621 = vsel %vm4620, %v4619, 0
        %v4622 = vshrl.u32 %v4621, 5
        %v4623 = vand.u32 %v4621, 31
        %v4624 = vsub.s32 32, %v4623
        %v4625 = vshrl.u32 683565275, %v4624
        %v4626 = vshll.u32 683565275, %v4623
        %v4627 = vshrl.u32 2475754826, %v4624
        %v4628 = vor.u32 %v4626, %v4627
        %v4629 = vshll.u32 2475754826, %v4623
        %v4630 = vshrl.u32 2131351028, %v4624
        %v4631 = vor.u32 %v4629, %v4630
        %v4632 = vshll.u32 2131351028, %v4623
        %v4633 = vshrl.u32 2102212464, %v4624
        %v4634 = vor.u32 %v4632, %v4633
        %v4635 = vshll.u32 2102212464, %v4623
        %v4636 = vshrl.u32 920167782, %v4624
        %v4637 = vor.u32 %v4635, %v4636
        %v4638 = vshll.u32 920167782, %v4623
        %v4639 = vshrl.u32 1326507024, %v4624
        %v4640 = vor.u32 %v4638, %v4639
        %vm4641 = vcmp.lt.s32.totalorder %v4622, 1
        %vm4642 = vcmp.lt.s32.totalorder %v4622, 2
        %vm4643 = vcmp.lt.s32.totalorder %v4622, 3
        %vm4644 = vcmp.lt.s32.totalorder %v4622, 4
        %v4645 = vsel %vm4641, %v4625, %v4628
        %v4646 = vsel %vm4644, %v4634, 2102212464
        %v4647 = vsel %vm4643, %v4631, %v4646
        %v4648 = vsel %vm4642, %v4645, %v4647
        %v4649 = vsel %vm4641, %v4628, %v4631
        %v4650 = vsel %vm4644, %v4637, 920167782
        %v4651 = vsel %vm4643, %v4634, %v4650
        %v4652 = vsel %vm4642, %v4649, %v4651
        %v4653 = vsel %vm4641, %v4631, %v4634
        %v4654 = vsel %vm4644, %v4640, 1326507024
        %v4655 = vsel %vm4643, %v4637, %v4654
        %v4656 = vsel %vm4642, %v4653, %v4655
        %v4657 = vshll.u32 %v4617, 8
        %v4658 = vand.u32 %v4657, 65535
        %v4659 = vshrl.u32 %v4657, 16
        %v4660 = vand.u32 %v4656, 65535
        %v4661 = vshrl.u32 %v4656, 16
        %v4662 = vmul.u32 %v4658, %v4660
        %v4663 = vmul.u32 %v4658, %v4661
        %v4664 = vmul.u32 %v4659, %v4660
        %v4665 = vmul.u32 %v4659, %v4661
        %v4666 = vshll.u32 %v4663, 16
        %v4667 = vshrl.u32 %v4663, 16
        %v4668 = vshll.u32 %v4664, 16
        %v4669 = vshrl.u32 %v4664, 16
        %vm4670 = vc.u32 %v4662, %v4666
        %v4671 = vsel %vm4670, 1, 0
        %v4672 = vadd.s32 %v4662, %v4666
        %v4673 = vadd.s32 %v4665, %v4671
        %vm4674 = vc.u32 %v4672, %v4668
        %v4675 = vsel %vm4674, 1, 0
        %v4676 = vadd.s32 %v4672, %v4668
        %v4677 = vadd.s32 %v4673, %v4675
        %v4678 = vadd.s32 %v4677, %v4667
        %v4679 = vadd.s32 %v4678, %v4669
        %v4680 = vand.u32 %v4657, 65535
        %v4681 = vshrl.u32 %v4657, 16
        %v4682 = vand.u32 %v4652, 65535
        %v4683 = vshrl.u32 %v4652, 16
        %v4684 = vmul.u32 %v4680, %v4682
        %v4685 = vmul.u32 %v4680, %v4683
        %v4686 = vmul.u32 %v4681, %v4682
        %v4687 = vmul.u32 %v4681, %v4683
        %v4688 = vshll.u32 %v4685, 16
        %v4689 = vshrl.u32 %v4685, 16
        %v4690 = vshll.u32 %v4686, 16
        %v4691 = vshrl.u32 %v4686, 16
        %vm4692 = vc.u32 %v4684, %v4688
        %v4693 = vsel %vm4692, 1, 0
        %v4694 = vadd.s32 %v4684, %v4688
        %v4695 = vadd.s32 %v4687, %v4693
        %vm4696 = vc.u32 %v4694, %v4690
        %v4697 = vsel %vm4696, 1, 0
        %v4698 = vadd.s32 %v4694, %v4690
        %v4699 = vadd.s32 %v4695, %v4697
        %v4700 = vadd.s32 %v4699, %v4689
        %v4701 = vadd.s32 %v4700, %v4691
        %v4702 = vmul.u32 %v4657, %v4648
        %v4703 = vadd.s32 %v4679, %v4698
        %vm4704 = vc.u32 %v4679, %v4698
        %v4705 = vadd.s32 %v4701, 1
        %v4706 = vsel %vm4704, %v4705, %v4701
        %v4707 = vadd.s32 %v4702, %v4706
        %v4708 = vadd.s32 %v4707, 536870912
        %v4709 = vshrl.u32 %v4708, 30
        %v4710 = vshll.u32 %v4709, 30
        %v4711 = vsub.s32 %v4707, %v4710
        %vm4712 = vcmp.lt.s32.totalorder %v4711, 0
        %v4713 = vsub.s32 0, %v4711
        %v4714 = vsel %vm4712, %v4713, %v4711
        %v4715 = vclz %v4714
        %v4716 = vsub.s32 %v4715, 2
        %vm4717 = vcmp.gt.s32.totalorder 0, %v4716
        %v4718 = vsel %vm4717, 0, %v4716
        %v4719 = vsub.s32 32, %v4718
        %v4720 = vshll.u32 %v4711, %v4718
        %v4721 = vshrl.u32 %v4703, %v4719
        %v4722 = vor.u32 %v4720, %v4721
        %v4723 = vsub.s32 4294967266, %v4718
        %v4724 = vadd.s32 %v4723, 127
        %v4725 = vshll.u32 %v4724, 23
        %v4726 = vor.u32 4788187, %v4725
        %v4727 = vand.u32 2147483647, %v4726
        %v4729 = vcvt.s32.f32 %v4722
        %v4730 = vmul.f32 %v4729, %v4727
        %v4731 = vxor.u32 %v4730, 2147483648
        %v4732 = vsel %vm4611, %v4731, %v4730
        %v4733 = vsub.s32 4, %v4709
        %v4734 = vsel %vm4611, %v4733, %v4709
        %v4735 = vsel %vm4610, %v2890, %v4732
        %v4736 = vsel %vm4610, 0, %v4734
        %v4737 = vmul.f32 %v4735, %v4735
        %v4738 = vmul.f32 %v4737, -0.001358992
        %v4739 = vadd.f32 %v4738, 0.041655596
        %v4740 = vmul.f32 %v4737, %v4739
        %v4741 = vadd.f32 %v4740, -0.4999988
        %v4742 = vmul.f32 %v4737, %v4741
        %v4743 = vadd.f32 1.0, %v4742
        %v4744 = vmul.f32 %v4735, %v4735
        %v4745 = vmul.f32 %v4744, -0.00019511016
        %v4746 = vadd.f32 %v4745, 0.008332121
        %v4747 = vmul.f32 %v4744, %v4746
        %v4748 = vadd.f32 %v4747, -0.16666654
        %v4749 = vmul.f32 %v4744, %v4748
        %v4750 = vadd.f32 %v4749, 1.0
        %v4751 = vmul.f32 %v4750, %v4735
        %vm4752 = vweird.f32 %v2890
        %v4753 = vadd.s32 %v4736, 3
        %v4754 = vand.u32 %v4753, 3
        %vm4755 = vcmp.lt.s32.totalorder %v4754, 2
        %vm4756 = vcmp.eq.s32.totalorder %v4754, 0
        %v4757 = vxor.u32 %v4751, 2147483648
        %v4758 = vsel %vm4756, %v4743, %v4757
        %vm4759 = vcmp.eq.s32.totalorder %v4754, 2
        %v4760 = vxor.u32 %v4743, 2147483648
        %v4761 = vsel %vm4759, %v4760, %v4751
        %v4762 = vsel %vm4755, %v4758, %v4761
        %v4763 = vsel %vm4752, nan, %v4762
        %v4764 = vand.u32 2147483647, %v2893
        %vm4765 = vcmp.le.f32.partialorder %v4764, 0.7853982
        %vm4766 = vcmp.lt.s32.totalorder %v2893, 0
        %v4767 = vand.u32 %v2893, 2139095040
        %v4768 = vshrl.u32 %v4767, 23
        %v4769 = vsub.s32 %v4768, 127
        %v4770 = vand.u32 2147483647, %v2893
        %v4771 = vand.u32 %v4770, 8388607
        %v4772 = vor.u32 %v4771, 8388608
        %v4773 = vsub.s32 0, %v4772
        %v4774 = vadd.s32 %v4769, 1
        %vm4775 = vcmp.gt.s32.totalorder %v4774, 0
        %v4776 = vsel %vm4775, %v4774, 0
        %v4777 = vshrl.u32 %v4776, 5
        %v4778 = vand.u32 %v4776, 31
        %v4779 = vsub.s32 32, %v4778
        %v4780 = vshrl.u32 683565275, %v4779
        %v4781 = vshll.u32 683565275, %v4778
        %v4782 = vshrl.u32 2475754826, %v4779
        %v4783 = vor.u32 %v4781, %v4782
        %v4784 = vshll.u32 2475754826, %v4778
        %v4785 = vshrl.u32 2131351028, %v4779
        %v4786 = vor.u32 %v4784, %v4785
        %v4787 = vshll.u32 2131351028, %v4778
        %v4788 = vshrl.u32 2102212464, %v4779
        %v4789 = vor.u32 %v4787, %v4788
        %v4790 = vshll.u32 2102212464, %v4778
        %v4791 = vshrl.u32 920167782, %v4779
        %v4792 = vor.u32 %v4790, %v4791
        %v4793 = vshll.u32 920167782, %v4778
        %v4794 = vshrl.u32 1326507024, %v4779
        %v4795 = vor.u32 %v4793, %v4794
        %vm4796 = vcmp.lt.s32.totalorder %v4777, 1
        %vm4797 = vcmp.lt.s32.totalorder %v4777, 2
        %vm4798 = vcmp.lt.s32.totalorder %v4777, 3
        %vm4799 = vcmp.lt.s32.totalorder %v4777, 4
        %v4800 = vsel %vm4796, %v4780, %v4783
        %v4801 = vsel %vm4799, %v4789, 2102212464
        %v4802 = vsel %vm4798, %v4786, %v4801
        %v4803 = vsel %vm4797, %v4800, %v4802
        %v4804 = vsel %vm4796, %v4783, %v4786
        %v4805 = vsel %vm4799, %v4792, 920167782
        %v4806 = vsel %vm4798, %v4789, %v4805
        %v4807 = vsel %vm4797, %v4804, %v4806
        %v4808 = vsel %vm4796, %v4786, %v4789
        %v4809 = vsel %vm4799, %v4795, 1326507024
        %v4810 = vsel %vm4798, %v4792, %v4809
        %v4811 = vsel %vm4797, %v4808, %v4810
        %v4812 = vshll.u32 %v4772, 8
        %v4813 = vand.u32 %v4812, 65535
        %v4814 = vshrl.u32 %v4812, 16
        %v4815 = vand.u32 %v4811, 65535
        %v4816 = vshrl.u32 %v4811, 16
        %v4817 = vmul.u32 %v4813, %v4815
        %v4818 = vmul.u32 %v4813, %v4816
        %v4819 = vmul.u32 %v4814, %v4815
        %v4820 = vmul.u32 %v4814, %v4816
        %v4821 = vshll.u32 %v4818, 16
        %v4822 = vshrl.u32 %v4818, 16
        %v4823 = vshll.u32 %v4819, 16
        %v4824 = vshrl.u32 %v4819, 16
        %vm4825 = vc.u32 %v4817, %v4821
        %v4826 = vsel %vm4825, 1, 0
        %v4827 = vadd.s32 %v4817, %v4821
        %v4828 = vadd.s32 %v4820, %v4826
        %vm4829 = vc.u32 %v4827, %v4823
        %v4830 = vsel %vm4829, 1, 0
        %v4831 = vadd.s32 %v4827, %v4823
        %v4832 = vadd.s32 %v4828, %v4830
        %v4833 = vadd.s32 %v4832, %v4822
        %v4834 = vadd.s32 %v4833, %v4824
        %v4835 = vand.u32 %v4812, 65535
        %v4836 = vshrl.u32 %v4812, 16
        %v4837 = vand.u32 %v4807, 65535
        %v4838 = vshrl.u32 %v4807, 16
        %v4839 = vmul.u32 %v4835, %v4837
        %v4840 = vmul.u32 %v4835, %v4838
        %v4841 = vmul.u32 %v4836, %v4837
        %v4842 = vmul.u32 %v4836, %v4838
        %v4843 = vshll.u32 %v4840, 16
        %v4844 = vshrl.u32 %v4840, 16
        %v4845 = vshll.u32 %v4841, 16
        %v4846 = vshrl.u32 %v4841, 16
        %vm4847 = vc.u32 %v4839, %v4843
        %v4848 = vsel %vm4847, 1, 0
        %v4849 = vadd.s32 %v4839, %v4843
        %v4850 = vadd.s32 %v4842, %v4848
        %vm4851 = vc.u32 %v4849, %v4845
        %v4852 = vsel %vm4851, 1, 0
        %v4853 = vadd.s32 %v4849, %v4845
        %v4854 = vadd.s32 %v4850, %v4852
        %v4855 = vadd.s32 %v4854, %v4844
        %v4856 = vadd.s32 %v4855, %v4846
        %v4857 = vmul.u32 %v4812, %v4803
        %v4858 = vadd.s32 %v4834, %v4853
        %vm4859 = vc.u32 %v4834, %v4853
        %v4860 = vadd.s32 %v4856, 1
        %v4861 = vsel %vm4859, %v4860, %v4856
        %v4862 = vadd.s32 %v4857, %v4861
        %v4863 = vadd.s32 %v4862, 536870912
        %v4864 = vshrl.u32 %v4863, 30
        %v4865 = vshll.u32 %v4864, 30
        %v4866 = vsub.s32 %v4862, %v4865
        %vm4867 = vcmp.lt.s32.totalorder %v4866, 0
        %v4868 = vsub.s32 0, %v4866
        %v4869 = vsel %vm4867, %v4868, %v4866
        %v4870 = vclz %v4869
        %v4871 = vsub.s32 %v4870, 2
        %vm4872 = vcmp.gt.s32.totalorder 0, %v4871
        %v4873 = vsel %vm4872, 0, %v4871
        %v4874 = vsub.s32 32, %v4873
        %v4875 = vshll.u32 %v4866, %v4873
        %v4876 = vshrl.u32 %v4858, %v4874
        %v4877 = vor.u32 %v4875, %v4876
        %v4878 = vsub.s32 4294967266, %v4873
        %v4879 = vadd.s32 %v4878, 127
        %v4880 = vshll.u32 %v4879, 23
        %v4881 = vor.u32 4788187, %v4880
        %v4882 = vand.u32 2147483647, %v4881
        %v4884 = vcvt.s32.f32 %v4877
        %v4885 = vmul.f32 %v4884, %v4882
        %v4886 = vxor.u32 %v4885, 2147483648
        %v4887 = vsel %vm4766, %v4886, %v4885
        %v4888 = vsub.s32 4, %v4864
        %v4889 = vsel %vm4766, %v4888, %v4864
        %v4890 = vsel %vm4765, %v2893, %v4887
        %v4891 = vsel %vm4765, 0, %v4889
        %v4892 = vmul.f32 %v4890, %v4890
        %v4893 = vmul.f32 %v4892, -0.001358992
        %v4894 = vadd.f32 %v4893, 0.041655596
        %v4895 = vmul.f32 %v4892, %v4894
        %v4896 = vadd.f32 %v4895, -0.4999988
        %v4897 = vmul.f32 %v4892, %v4896
        %v4898 = vadd.f32 1.0, %v4897
        %v4899 = vmul.f32 %v4890, %v4890
        %v4900 = vmul.f32 %v4899, -0.00019511016
        %v4901 = vadd.f32 %v4900, 0.008332121
        %v4902 = vmul.f32 %v4899, %v4901
        %v4903 = vadd.f32 %v4902, -0.16666654
        %v4904 = vmul.f32 %v4899, %v4903
        %v4905 = vadd.f32 %v4904, 1.0
        %v4906 = vmul.f32 %v4905, %v4890
        %vm4907 = vweird.f32 %v2893
        %v4908 = vadd.s32 %v4891, 3
        %v4909 = vand.u32 %v4908, 3
        %vm4910 = vcmp.lt.s32.totalorder %v4909, 2
        %vm4911 = vcmp.eq.s32.totalorder %v4909, 0
        %v4912 = vxor.u32 %v4906, 2147483648
        %v4913 = vsel %vm4911, %v4898, %v4912
        %vm4914 = vcmp.eq.s32.totalorder %v4909, 2
        %v4915 = vxor.u32 %v4898, 2147483648
        %v4916 = vsel %vm4914, %v4915, %v4906
        %v4917 = vsel %vm4910, %v4913, %v4916
        %v4918 = vsel %vm4907, nan, %v4917
        %v4919 = vand.u32 2147483647, %v2896
        %vm4920 = vcmp.le.f32.partialorder %v4919, 0.7853982
        %vm4921 = vcmp.lt.s32.totalorder %v2896, 0
        %v4922 = vand.u32 %v2896, 2139095040
        %v4923 = vshrl.u32 %v4922, 23
        %v4924 = vsub.s32 %v4923, 127
        %v4925 = vand.u32 2147483647, %v2896
        %v4926 = vand.u32 %v4925, 8388607
        %v4927 = vor.u32 %v4926, 8388608
        %v4928 = vsub.s32 0, %v4927
        %v4929 = vadd.s32 %v4924, 1
        %vm4930 = vcmp.gt.s32.totalorder %v4929, 0
        %v4931 = vsel %vm4930, %v4929, 0
        %v4932 = vshrl.u32 %v4931, 5
        %v4933 = vand.u32 %v4931, 31
        %v4934 = vsub.s32 32, %v4933
        %v4935 = vshrl.u32 683565275, %v4934
        %v4936 = vshll.u32 683565275, %v4933
        %v4937 = vshrl.u32 2475754826, %v4934
        %v4938 = vor.u32 %v4936, %v4937
        %v4939 = vshll.u32 2475754826, %v4933
        %v4940 = vshrl.u32 2131351028, %v4934
        %v4941 = vor.u32 %v4939, %v4940
        %v4942 = vshll.u32 2131351028, %v4933
        %v4943 = vshrl.u32 2102212464, %v4934
        %v4944 = vor.u32 %v4942, %v4943
        %v4945 = vshll.u32 2102212464, %v4933
        %v4946 = vshrl.u32 920167782, %v4934
        %v4947 = vor.u32 %v4945, %v4946
        %v4948 = vshll.u32 920167782, %v4933
        %v4949 = vshrl.u32 1326507024, %v4934
        %v4950 = vor.u32 %v4948, %v4949
        %vm4951 = vcmp.lt.s32.totalorder %v4932, 1
        %vm4952 = vcmp.lt.s32.totalorder %v4932, 2
        %vm4953 = vcmp.lt.s32.totalorder %v4932, 3
        %vm4954 = vcmp.lt.s32.totalorder %v4932, 4
        %v4955 = vsel %vm4951, %v4935, %v4938
        %v4956 = vsel %vm4954, %v4944, 2102212464
        %v4957 = vsel %vm4953, %v4941, %v4956
        %v4958 = vsel %vm4952, %v4955, %v4957
        %v4959 = vsel %vm4951, %v4938, %v4941
        %v4960 = vsel %vm4954, %v4947, 920167782
        %v4961 = vsel %vm4953, %v4944, %v4960
        %v4962 = vsel %vm4952, %v4959, %v4961
        %v4963 = vsel %vm4951, %v4941, %v4944
        %v4964 = vsel %vm4954, %v4950, 1326507024
        %v4965 = vsel %vm4953, %v4947, %v4964
        %v4966 = vsel %vm4952, %v4963, %v4965
        %v4967 = vshll.u32 %v4927, 8
        %v4968 = vand.u32 %v4967, 65535
        %v4969 = vshrl.u32 %v4967, 16
        %v4970 = vand.u32 %v4966, 65535
        %v4971 = vshrl.u32 %v4966, 16
        %v4972 = vmul.u32 %v4968, %v4970
        %v4973 = vmul.u32 %v4968, %v4971
        %v4974 = vmul.u32 %v4969, %v4970
        %v4975 = vmul.u32 %v4969, %v4971
        %v4976 = vshll.u32 %v4973, 16
        %v4977 = vshrl.u32 %v4973, 16
        %v4978 = vshll.u32 %v4974, 16
        %v4979 = vshrl.u32 %v4974, 16
        %vm4980 = vc.u32 %v4972, %v4976
        %v4981 = vsel %vm4980, 1, 0
        %v4982 = vadd.s32 %v4972, %v4976
        %v4983 = vadd.s32 %v4975, %v4981
        %vm4984 = vc.u32 %v4982, %v4978
        %v4985 = vsel %vm4984, 1, 0
        %v4986 = vadd.s32 %v4982, %v4978
        %v4987 = vadd.s32 %v4983, %v4985
        %v4988 = vadd.s32 %v4987, %v4977
        %v4989 = vadd.s32 %v4988, %v4979
        %v4990 = vand.u32 %v4967, 65535
        %v4991 = vshrl.u32 %v4967, 16
        %v4992 = vand.u32 %v4962, 65535
        %v4993 = vshrl.u32 %v4962, 16
        %v4994 = vmul.u32 %v4990, %v4992
        %v4995 = vmul.u32 %v4990, %v4993
        %v4996 = vmul.u32 %v4991, %v4992
        %v4997 = vmul.u32 %v4991, %v4993
        %v4998 = vshll.u32 %v4995, 16
        %v4999 = vshrl.u32 %v4995, 16
        %v5000 = vshll.u32 %v4996, 16
        %v5001 = vshrl.u32 %v4996, 16
        %vm5002 = vc.u32 %v4994, %v4998
        %v5003 = vsel %vm5002, 1, 0
        %v5004 = vadd.s32 %v4994, %v4998
        %v5005 = vadd.s32 %v4997, %v5003
        %vm5006 = vc.u32 %v5004, %v5000
        %v5007 = vsel %vm5006, 1, 0
        %v5008 = vadd.s32 %v5004, %v5000
        %v5009 = vadd.s32 %v5005, %v5007
        %v5010 = vadd.s32 %v5009, %v4999
        %v5011 = vadd.s32 %v5010, %v5001
        %v5012 = vmul.u32 %v4967, %v4958
        %v5013 = vadd.s32 %v4989, %v5008
        %vm5014 = vc.u32 %v4989, %v5008
        %v5015 = vadd.s32 %v5011, 1
        %v5016 = vsel %vm5014, %v5015, %v5011
        %v5017 = vadd.s32 %v5012, %v5016
        %v5018 = vadd.s32 %v5017, 536870912
        %v5019 = vshrl.u32 %v5018, 30
        %v5020 = vshll.u32 %v5019, 30
        %v5021 = vsub.s32 %v5017, %v5020
        %vm5022 = vcmp.lt.s32.totalorder %v5021, 0
        %v5023 = vsub.s32 0, %v5021
        %v5024 = vsel %vm5022, %v5023, %v5021
        %v5025 = vclz %v5024
        %v5026 = vsub.s32 %v5025, 2
        %vm5027 = vcmp.gt.s32.totalorder 0, %v5026
        %v5028 = vsel %vm5027, 0, %v5026
        %v5029 = vsub.s32 32, %v5028
        %v5030 = vshll.u32 %v5021, %v5028
        %v5031 = vshrl.u32 %v5013, %v5029
        %v5032 = vor.u32 %v5030, %v5031
        %v5033 = vsub.s32 4294967266, %v5028
        %v5034 = vadd.s32 %v5033, 127
        %v5035 = vshll.u32 %v5034, 23
        %v5036 = vor.u32 4788187, %v5035
        %v5037 = vand.u32 2147483647, %v5036
        %v5039 = vcvt.s32.f32 %v5032
        %v5040 = vmul.f32 %v5039, %v5037
        %v5041 = vxor.u32 %v5040, 2147483648
        %v5042 = vsel %vm4921, %v5041, %v5040
        %v5043 = vsub.s32 4, %v5019
        %v5044 = vsel %vm4921, %v5043, %v5019
        %v5045 = vsel %vm4920, %v2896, %v5042
        %v5046 = vsel %vm4920, 0, %v5044
        %v5047 = vmul.f32 %v5045, %v5045
        %v5048 = vmul.f32 %v5047, -0.001358992
        %v5049 = vadd.f32 %v5048, 0.041655596
        %v5050 = vmul.f32 %v5047, %v5049
        %v5051 = vadd.f32 %v5050, -0.4999988
        %v5052 = vmul.f32 %v5047, %v5051
        %v5053 = vadd.f32 1.0, %v5052
        %v5054 = vmul.f32 %v5045, %v5045
        %v5055 = vmul.f32 %v5054, -0.00019511016
        %v5056 = vadd.f32 %v5055, 0.008332121
        %v5057 = vmul.f32 %v5054, %v5056
        %v5058 = vadd.f32 %v5057, -0.16666654
        %v5059 = vmul.f32 %v5054, %v5058
        %v5060 = vadd.f32 %v5059, 1.0
        %v5061 = vmul.f32 %v5060, %v5045
        %vm5062 = vweird.f32 %v2896
        %v5063 = vadd.s32 %v5046, 3
        %v5064 = vand.u32 %v5063, 3
        %vm5065 = vcmp.lt.s32.totalorder %v5064, 2
        %vm5066 = vcmp.eq.s32.totalorder %v5064, 0
        %v5067 = vxor.u32 %v5061, 2147483648
        %v5068 = vsel %vm5066, %v5053, %v5067
        %vm5069 = vcmp.eq.s32.totalorder %v5064, 2
        %v5070 = vxor.u32 %v5053, 2147483648
        %v5071 = vsel %vm5069, %v5070, %v5061
        %v5072 = vsel %vm5065, %v5068, %v5071
        %v5073 = vsel %vm5062, nan, %v5072
        %v5074 = vand.u32 2147483647, %v2899
        %vm5075 = vcmp.le.f32.partialorder %v5074, 0.7853982
        %vm5076 = vcmp.lt.s32.totalorder %v2899, 0
        %v5077 = vand.u32 %v2899, 2139095040
        %v5078 = vshrl.u32 %v5077, 23
        %v5079 = vsub.s32 %v5078, 127
        %v5080 = vand.u32 2147483647, %v2899
        %v5081 = vand.u32 %v5080, 8388607
        %v5082 = vor.u32 %v5081, 8388608
        %v5083 = vsub.s32 0, %v5082
        %v5084 = vadd.s32 %v5079, 1
        %vm5085 = vcmp.gt.s32.totalorder %v5084, 0
        %v5086 = vsel %vm5085, %v5084, 0
        %v5087 = vshrl.u32 %v5086, 5
        %v5088 = vand.u32 %v5086, 31
        %v5089 = vsub.s32 32, %v5088
        %v5090 = vshrl.u32 683565275, %v5089
        %v5091 = vshll.u32 683565275, %v5088
        %v5092 = vshrl.u32 2475754826, %v5089
        %v5093 = vor.u32 %v5091, %v5092
        %v5094 = vshll.u32 2475754826, %v5088
        %v5095 = vshrl.u32 2131351028, %v5089
        %v5096 = vor.u32 %v5094, %v5095
        %v5097 = vshll.u32 2131351028, %v5088
        %v5098 = vshrl.u32 2102212464, %v5089
        %v5099 = vor.u32 %v5097, %v5098
        %v5100 = vshll.u32 2102212464, %v5088
        %v5101 = vshrl.u32 920167782, %v5089
        %v5102 = vor.u32 %v5100, %v5101
        %v5103 = vshll.u32 920167782, %v5088
        %v5104 = vshrl.u32 1326507024, %v5089
        %v5105 = vor.u32 %v5103, %v5104
        %vm5106 = vcmp.lt.s32.totalorder %v5087, 1
        %vm5107 = vcmp.lt.s32.totalorder %v5087, 2
        %vm5108 = vcmp.lt.s32.totalorder %v5087, 3
        %vm5109 = vcmp.lt.s32.totalorder %v5087, 4
        %v5110 = vsel %vm5106, %v5090, %v5093
        %v5111 = vsel %vm5109, %v5099, 2102212464
        %v5112 = vsel %vm5108, %v5096, %v5111
        %v5113 = vsel %vm5107, %v5110, %v5112
        %v5114 = vsel %vm5106, %v5093, %v5096
        %v5115 = vsel %vm5109, %v5102, 920167782
        %v5116 = vsel %vm5108, %v5099, %v5115
        %v5117 = vsel %vm5107, %v5114, %v5116
        %v5118 = vsel %vm5106, %v5096, %v5099
        %v5119 = vsel %vm5109, %v5105, 1326507024
        %v5120 = vsel %vm5108, %v5102, %v5119
        %v5121 = vsel %vm5107, %v5118, %v5120
        %v5122 = vshll.u32 %v5082, 8
        %v5123 = vand.u32 %v5122, 65535
        %v5124 = vshrl.u32 %v5122, 16
        %v5125 = vand.u32 %v5121, 65535
        %v5126 = vshrl.u32 %v5121, 16
        %v5127 = vmul.u32 %v5123, %v5125
        %v5128 = vmul.u32 %v5123, %v5126
        %v5129 = vmul.u32 %v5124, %v5125
        %v5130 = vmul.u32 %v5124, %v5126
        %v5131 = vshll.u32 %v5128, 16
        %v5132 = vshrl.u32 %v5128, 16
        %v5133 = vshll.u32 %v5129, 16
        %v5134 = vshrl.u32 %v5129, 16
        %vm5135 = vc.u32 %v5127, %v5131
        %v5136 = vsel %vm5135, 1, 0
        %v5137 = vadd.s32 %v5127, %v5131
        %v5138 = vadd.s32 %v5130, %v5136
        %vm5139 = vc.u32 %v5137, %v5133
        %v5140 = vsel %vm5139, 1, 0
        %v5141 = vadd.s32 %v5137, %v5133
        %v5142 = vadd.s32 %v5138, %v5140
        %v5143 = vadd.s32 %v5142, %v5132
        %v5144 = vadd.s32 %v5143, %v5134
        %v5145 = vand.u32 %v5122, 65535
        %v5146 = vshrl.u32 %v5122, 16
        %v5147 = vand.u32 %v5117, 65535
        %v5148 = vshrl.u32 %v5117, 16
        %v5149 = vmul.u32 %v5145, %v5147
        %v5150 = vmul.u32 %v5145, %v5148
        %v5151 = vmul.u32 %v5146, %v5147
        %v5152 = vmul.u32 %v5146, %v5148
        %v5153 = vshll.u32 %v5150, 16
        %v5154 = vshrl.u32 %v5150, 16
        %v5155 = vshll.u32 %v5151, 16
        %v5156 = vshrl.u32 %v5151, 16
        %vm5157 = vc.u32 %v5149, %v5153
        %v5158 = vsel %vm5157, 1, 0
        %v5159 = vadd.s32 %v5149, %v5153
        %v5160 = vadd.s32 %v5152, %v5158
        %vm5161 = vc.u32 %v5159, %v5155
        %v5162 = vsel %vm5161, 1, 0
        %v5163 = vadd.s32 %v5159, %v5155
        %v5164 = vadd.s32 %v5160, %v5162
        %v5165 = vadd.s32 %v5164, %v5154
        %v5166 = vadd.s32 %v5165, %v5156
        %v5167 = vmul.u32 %v5122, %v5113
        %v5168 = vadd.s32 %v5144, %v5163
        %vm5169 = vc.u32 %v5144, %v5163
        %v5170 = vadd.s32 %v5166, 1
        %v5171 = vsel %vm5169, %v5170, %v5166
        %v5172 = vadd.s32 %v5167, %v5171
        %v5173 = vadd.s32 %v5172, 536870912
        %v5174 = vshrl.u32 %v5173, 30
        %v5175 = vshll.u32 %v5174, 30
        %v5176 = vsub.s32 %v5172, %v5175
        %vm5177 = vcmp.lt.s32.totalorder %v5176, 0
        %v5178 = vsub.s32 0, %v5176
        %v5179 = vsel %vm5177, %v5178, %v5176
        %v5180 = vclz %v5179
        %v5181 = vsub.s32 %v5180, 2
        %vm5182 = vcmp.gt.s32.totalorder 0, %v5181
        %v5183 = vsel %vm5182, 0, %v5181
        %v5184 = vsub.s32 32, %v5183
        %v5185 = vshll.u32 %v5176, %v5183
        %v5186 = vshrl.u32 %v5168, %v5184
        %v5187 = vor.u32 %v5185, %v5186
        %v5188 = vsub.s32 4294967266, %v5183
        %v5189 = vadd.s32 %v5188, 127
        %v5190 = vshll.u32 %v5189, 23
        %v5191 = vor.u32 4788187, %v5190
        %v5192 = vand.u32 2147483647, %v5191
        %v5194 = vcvt.s32.f32 %v5187
        %v5195 = vmul.f32 %v5194, %v5192
        %v5196 = vxor.u32 %v5195, 2147483648
        %v5197 = vsel %vm5076, %v5196, %v5195
        %v5198 = vsub.s32 4, %v5174
        %v5199 = vsel %vm5076, %v5198, %v5174
        %v5200 = vsel %vm5075, %v2899, %v5197
        %v5201 = vsel %vm5075, 0, %v5199
        %v5202 = vmul.f32 %v5200, %v5200
        %v5203 = vmul.f32 %v5202, -0.001358992
        %v5204 = vadd.f32 %v5203, 0.041655596
        %v5205 = vmul.f32 %v5202, %v5204
        %v5206 = vadd.f32 %v5205, -0.4999988
        %v5207 = vmul.f32 %v5202, %v5206
        %v5208 = vadd.f32 1.0, %v5207
        %v5209 = vmul.f32 %v5200, %v5200
        %v5210 = vmul.f32 %v5209, -0.00019511016
        %v5211 = vadd.f32 %v5210, 0.008332121
        %v5212 = vmul.f32 %v5209, %v5211
        %v5213 = vadd.f32 %v5212, -0.16666654
        %v5214 = vmul.f32 %v5209, %v5213
        %v5215 = vadd.f32 %v5214, 1.0
        %v5216 = vmul.f32 %v5215, %v5200
        %vm5217 = vweird.f32 %v2899
        %v5218 = vadd.s32 %v5201, 3
        %v5219 = vand.u32 %v5218, 3
        %vm5220 = vcmp.lt.s32.totalorder %v5219, 2
        %vm5221 = vcmp.eq.s32.totalorder %v5219, 0
        %v5222 = vxor.u32 %v5216, 2147483648
        %v5223 = vsel %vm5221, %v5208, %v5222
        %vm5224 = vcmp.eq.s32.totalorder %v5219, 2
        %v5225 = vxor.u32 %v5208, 2147483648
        %v5226 = vsel %vm5224, %v5225, %v5216
        %v5227 = vsel %vm5220, %v5223, %v5226
        %v5228 = vsel %vm5217, nan, %v5227
        %v5229 = vand.u32 2147483647, %v2902
        %vm5230 = vcmp.le.f32.partialorder %v5229, 0.7853982
        %vm5231 = vcmp.lt.s32.totalorder %v2902, 0
        %v5232 = vand.u32 %v2902, 2139095040
        %v5233 = vshrl.u32 %v5232, 23
        %v5234 = vsub.s32 %v5233, 127
        %v5235 = vand.u32 2147483647, %v2902
        %v5236 = vand.u32 %v5235, 8388607
        %v5237 = vor.u32 %v5236, 8388608
        %v5238 = vsub.s32 0, %v5237
        %v5239 = vadd.s32 %v5234, 1
        %vm5240 = vcmp.gt.s32.totalorder %v5239, 0
        %v5241 = vsel %vm5240, %v5239, 0
        %v5242 = vshrl.u32 %v5241, 5
        %v5243 = vand.u32 %v5241, 31
        %v5244 = vsub.s32 32, %v5243
        %v5245 = vshrl.u32 683565275, %v5244
        %v5246 = vshll.u32 683565275, %v5243
        %v5247 = vshrl.u32 2475754826, %v5244
        %v5248 = vor.u32 %v5246, %v5247
        %v5249 = vshll.u32 2475754826, %v5243
        %v5250 = vshrl.u32 2131351028, %v5244
        %v5251 = vor.u32 %v5249, %v5250
        %v5252 = vshll.u32 2131351028, %v5243
        %v5253 = vshrl.u32 2102212464, %v5244
        %v5254 = vor.u32 %v5252, %v5253
        %v5255 = vshll.u32 2102212464, %v5243
        %v5256 = vshrl.u32 920167782, %v5244
        %v5257 = vor.u32 %v5255, %v5256
        %v5258 = vshll.u32 920167782, %v5243
        %v5259 = vshrl.u32 1326507024, %v5244
        %v5260 = vor.u32 %v5258, %v5259
        %vm5261 = vcmp.lt.s32.totalorder %v5242, 1
        %vm5262 = vcmp.lt.s32.totalorder %v5242, 2
        %vm5263 = vcmp.lt.s32.totalorder %v5242, 3
        %vm5264 = vcmp.lt.s32.totalorder %v5242, 4
        %v5265 = vsel %vm5261, %v5245, %v5248
        %v5266 = vsel %vm5264, %v5254, 2102212464
        %v5267 = vsel %vm5263, %v5251, %v5266
        %v5268 = vsel %vm5262, %v5265, %v5267
        %v5269 = vsel %vm5261, %v5248, %v5251
        %v5270 = vsel %vm5264, %v5257, 920167782
        %v5271 = vsel %vm5263, %v5254, %v5270
        %v5272 = vsel %vm5262, %v5269, %v5271
        %v5273 = vsel %vm5261, %v5251, %v5254
        %v5274 = vsel %vm5264, %v5260, 1326507024
        %v5275 = vsel %vm5263, %v5257, %v5274
        %v5276 = vsel %vm5262, %v5273, %v5275
        %v5277 = vshll.u32 %v5237, 8
        %v5278 = vand.u32 %v5277, 65535
        %v5279 = vshrl.u32 %v5277, 16
        %v5280 = vand.u32 %v5276, 65535
        %v5281 = vshrl.u32 %v5276, 16
        %v5282 = vmul.u32 %v5278, %v5280
        %v5283 = vmul.u32 %v5278, %v5281
        %v5284 = vmul.u32 %v5279, %v5280
        %v5285 = vmul.u32 %v5279, %v5281
        %v5286 = vshll.u32 %v5283, 16
        %v5287 = vshrl.u32 %v5283, 16
        %v5288 = vshll.u32 %v5284, 16
        %v5289 = vshrl.u32 %v5284, 16
        %vm5290 = vc.u32 %v5282, %v5286
        %v5291 = vsel %vm5290, 1, 0
        %v5292 = vadd.s32 %v5282, %v5286
        %v5293 = vadd.s32 %v5285, %v5291
        %vm5294 = vc.u32 %v5292, %v5288
        %v5295 = vsel %vm5294, 1, 0
        %v5296 = vadd.s32 %v5292, %v5288
        %v5297 = vadd.s32 %v5293, %v5295
        %v5298 = vadd.s32 %v5297, %v5287
        %v5299 = vadd.s32 %v5298, %v5289
        %v5300 = vand.u32 %v5277, 65535
        %v5301 = vshrl.u32 %v5277, 16
        %v5302 = vand.u32 %v5272, 65535
        %v5303 = vshrl.u32 %v5272, 16
        %v5304 = vmul.u32 %v5300, %v5302
        %v5305 = vmul.u32 %v5300, %v5303
        %v5306 = vmul.u32 %v5301, %v5302
        %v5307 = vmul.u32 %v5301, %v5303
        %v5308 = vshll.u32 %v5305, 16
        %v5309 = vshrl.u32 %v5305, 16
        %v5310 = vshll.u32 %v5306, 16
        %v5311 = vshrl.u32 %v5306, 16
        %vm5312 = vc.u32 %v5304, %v5308
        %v5313 = vsel %vm5312, 1, 0
        %v5314 = vadd.s32 %v5304, %v5308
        %v5315 = vadd.s32 %v5307, %v5313
        %vm5316 = vc.u32 %v5314, %v5310
        %v5317 = vsel %vm5316, 1, 0
        %v5318 = vadd.s32 %v5314, %v5310
        %v5319 = vadd.s32 %v5315, %v5317
        %v5320 = vadd.s32 %v5319, %v5309
        %v5321 = vadd.s32 %v5320, %v5311
        %v5322 = vmul.u32 %v5277, %v5268
        %v5323 = vadd.s32 %v5299, %v5318
        %vm5324 = vc.u32 %v5299, %v5318
        %v5325 = vadd.s32 %v5321, 1
        %v5326 = vsel %vm5324, %v5325, %v5321
        %v5327 = vadd.s32 %v5322, %v5326
        %v5328 = vadd.s32 %v5327, 536870912
        %v5329 = vshrl.u32 %v5328, 30
        %v5330 = vshll.u32 %v5329, 30
        %v5331 = vsub.s32 %v5327, %v5330
        %vm5332 = vcmp.lt.s32.totalorder %v5331, 0
        %v5333 = vsub.s32 0, %v5331
        %v5334 = vsel %vm5332, %v5333, %v5331
        %v5335 = vclz %v5334
        %v5336 = vsub.s32 %v5335, 2
        %vm5337 = vcmp.gt.s32.totalorder 0, %v5336
        %v5338 = vsel %vm5337, 0, %v5336
        %v5339 = vsub.s32 32, %v5338
        %v5340 = vshll.u32 %v5331, %v5338
        %v5341 = vshrl.u32 %v5323, %v5339
        %v5342 = vor.u32 %v5340, %v5341
        %v5343 = vsub.s32 4294967266, %v5338
        %v5344 = vadd.s32 %v5343, 127
        %v5345 = vshll.u32 %v5344, 23
        %v5346 = vor.u32 4788187, %v5345
        %v5347 = vand.u32 2147483647, %v5346
        %v5349 = vcvt.s32.f32 %v5342
        %v5350 = vmul.f32 %v5349, %v5347
        %v5351 = vxor.u32 %v5350, 2147483648
        %v5352 = vsel %vm5231, %v5351, %v5350
        %v5353 = vsub.s32 4, %v5329
        %v5354 = vsel %vm5231, %v5353, %v5329
        %v5355 = vsel %vm5230, %v2902, %v5352
        %v5356 = vsel %vm5230, 0, %v5354
        %v5357 = vmul.f32 %v5355, %v5355
        %v5358 = vmul.f32 %v5357, -0.001358992
        %v5359 = vadd.f32 %v5358, 0.041655596
        %v5360 = vmul.f32 %v5357, %v5359
        %v5361 = vadd.f32 %v5360, -0.4999988
        %v5362 = vmul.f32 %v5357, %v5361
        %v5363 = vadd.f32 1.0, %v5362
        %v5364 = vmul.f32 %v5355, %v5355
        %v5365 = vmul.f32 %v5364, -0.00019511016
        %v5366 = vadd.f32 %v5365, 0.008332121
        %v5367 = vmul.f32 %v5364, %v5366
        %v5368 = vadd.f32 %v5367, -0.16666654
        %v5369 = vmul.f32 %v5364, %v5368
        %v5370 = vadd.f32 %v5369, 1.0
        %v5371 = vmul.f32 %v5370, %v5355
        %vm5372 = vweird.f32 %v2902
        %v5373 = vadd.s32 %v5356, 3
        %v5374 = vand.u32 %v5373, 3
        %vm5375 = vcmp.lt.s32.totalorder %v5374, 2
        %vm5376 = vcmp.eq.s32.totalorder %v5374, 0
        %v5377 = vxor.u32 %v5371, 2147483648
        %v5378 = vsel %vm5376, %v5363, %v5377
        %vm5379 = vcmp.eq.s32.totalorder %v5374, 2
        %v5380 = vxor.u32 %v5363, 2147483648
        %v5381 = vsel %vm5379, %v5380, %v5371
        %v5382 = vsel %vm5375, %v5378, %v5381
        %v5383 = vsel %vm5372, nan, %v5382
        %5384 = vst [vmem:[%s207 + $0x80] sm:$0xff] %v3058
        %5385 = vst [vmem:[%s207 + $0x88] sm:$0xff] %v3213
        %5386 = vst [vmem:[%s207 + $0x90] sm:$0xff] %v3368
        %5387 = vst [vmem:[%s207 + $0x98] sm:$0xff] %v3523
        %5388 = vst [vmem:[%s207 + $0xa0] sm:$0xff] %v3678
        %5389 = vst [vmem:[%s207 + $0xa8] sm:$0xff] %v3833
        %5390 = vst [vmem:[%s207 + $0xb0] sm:$0xff] %v3988
        %5391 = vst [vmem:[%s207 + $0xb8] sm:$0xff] %v4143
        %5392 = vst [vmem:[%s207 + $0xc0] sm:$0xff] %v4298
        %5393 = vst [vmem:[%s207 + $0xc8] sm:$0xff] %v4453
        %5394 = vst [vmem:[%s207 + $0xd0] sm:$0xff] %v4608
        %5395 = vst [vmem:[%s207 + $0xd8] sm:$0xff] %v4763
        %5396 = vst [vmem:[%s207 + $0xe0] sm:$0xff] %v4918
        %5397 = vst [vmem:[%s207 + $0xe8] sm:$0xff] %v5073
        %5398 = vst [vmem:[%s207 + $0xf0] sm:$0xff] %v5228
        %5399 = vst [vmem:[%s207 + $0xf8] sm:$0xff] %v5383
        %s5400 = sand.u32 %s97, 1
        %s5401 = scalar_lea.sflag [#allocation4], %s5400
        %s5402 = sand.u32 %s97, 1
        %s5403 = smul.addr %s5402, 256
        %s5404 = scalar_lea.vmem [#allocation7], %s5403
        // Predicated region
        $region41: #{tpu_custom_call.1} parent=31 // pred_check
          %p5405 = pneg %p107
        $region42: #{tpu_custom_call.1} parent=31 // pred_check_branch
          %5407 = sbr.rel (%p5405) target = $region44
        $region43: #{tpu_custom_call.1} parent=31 // pred_region
          %s5408 = smul.u32 32, %s21
          %5410 = vsyncadd %s5401, 0
          %s5411 = smul.addr %s5408, 8
          %s5412 = scalar_lea.hbm %s3, %s5411
          %s5413 = sshll.u32 %s5404, 4
          %s5414 = int_to_ptr.vmem [resolvable:$true] %s5413
          %s5415 = sshll.u32 %s5412, 4
          %s5416 = int_to_ptr.hbm [resolvable:$true] %s5415
          %5421 = dma.vmem_to_hbm [thread:$0]  %s5414, 4096, %s5416, %s5401, 128, 128, 8
        $region44: #{tpu_custom_call.1} parent=31 // pred_fallthru
          _
      $region32: #{tpu_custom_call.1} parent=5 // pred_fallthru
        _
      %p5422 = scmp.le.s32.totalorder 2, %s16
      // Predicated region
      $region45: #{tpu_custom_call.1} parent=5 // pred_check
        %p5423 = pneg %p5422
      $region46: #{tpu_custom_call.1} parent=5 // pred_check_branch
        %5425 = sbr.rel (%p5423) target = $region48
      $region47: #{tpu_custom_call.1} parent=5 // pred_region
        %s5426 = ssub.s32 %s16, 2
        // Predicated region
        $region49: #{tpu_custom_call.1} parent=47 // pred_check
          %p5427 = pneg %p113
        $region50: #{tpu_custom_call.1} parent=47 // pred_check_branch
          %5429 = sbr.rel (%p5427) target = $region52
        $region51: #{tpu_custom_call.1} parent=47 // pred_region
          %s5430 = sand.u32 %s98, 1
          %s5431 = scalar_lea.sflag [#allocation4], %s5430
          %s5432 = sand.u32 %s98, 1
          %s5433 = smul.addr %s5432, 256
          %s5434 = scalar_lea.vmem [#allocation7], %s5433
          %5436 = dma.done %s5431, 4096
        $region52: #{tpu_custom_call.1} parent=47 // pred_fallthru
          _
      $region48: #{tpu_custom_call.1} parent=5 // pred_fallthru
        _
    $region6: #{tpu_custom_call.1} parent=1 // loop_footer
      %s20 = sadd.s32 1, %s16
    $region7: #{tpu_custom_call.1} parent=1 // loop_footer_branch
      %15 = sbr.rel target = $region3
    $region8: #{tpu_custom_call.1} parent=1 // loop_exit
      _
    %5437 = vsyncpa [#allocation3], 1
    %s5438 = scalar_lea.sflag [#allocation3], 1
    %5439 = vsyncpa %s5438, 1
    %5440 = vsyncpa [#allocation6], 1
    %5441 = vsyncpa [#allocation4], 1
    %s5442 = scalar_lea.sflag [#allocation4], 1
    %5443 = vsyncpa %s5442, 1

</llo_original>
